<compile_context>
chip_gen: v7x
topology: tpu7x:2x2x1
jax: 0.10.0
libtpu: 0.0.40
codegen_flags: <defaults>
</compile_context>

<pallas_src>
import functools

import jax
import jax.numpy as jnp
from jax.experimental import pallas as pl
from jax.experimental.pallas import tpu as pltpu


def _round_up(x, m):
    return ((x + m - 1) // m) * m


# ----------------------------------------------------------------------------
# Kernel 1: fused stem + first Downsample stage.
#   input  (tm, 2*cin_raw) f32 pairs [x[2n] ; x[2n+1]]
#   output (tm, cout)      bf16 rows of Downsample0(stem(x))
# ----------------------------------------------------------------------------
def _stem_down_kernel(xm_ref, xh_ref, ws_ref, ss_ref, bs_ref,
                      w12_ref, w0_ref, s_ref, b_ref, o_ref,
                      *, cin_raw, c0, tm, n_in, n_valid):
    i = pl.program_id(1)

    # --- stem on both points of each pair (VPU broadcast FMAs, Cin=3) --------
    x = xm_ref[...]                                         # (tm, 2*cin_raw) f32
    acc = x[:, 0:1] * ws_ref[0:1, :]
    for c in range(1, 2 * cin_raw):                         # static unroll (6)
        acc = acc + x[:, c:c + 1] * ws_ref[c:c + 1, :]
    e = acc * ss_ref[...] + bs_ref[...]                     # folded stem BN
    e = jnp.where(e > 0, e, 0.2 * e)                        # LeakyReLU(0.2)
    # If N is odd, the odd slot of the last valid pair is a zero-pad *input*
    # point; the reference applies the stem only to real points, so zero it.
    if n_in % 2 == 1:
        g = i * tm + jax.lax.broadcasted_iota(jnp.int32, (tm, 1), 0)
        lane = jax.lax.broadcasted_iota(jnp.int32, (tm, 2 * c0), 1)
        is_pad = jnp.logical_and(g == (n_in // 2), lane >= c0)
        e = jnp.where(is_pad, 0.0, e)
    e16 = e.astype(jnp.bfloat16)                            # (tm, 2*c0)

    # --- Downsample taps 1 & 2 share the pair row: one K = 2*c0 MXU matmul ---
    out = jnp.dot(e16, w12_ref[...], preferred_element_type=jnp.float32)

    # --- tap 0 = stem(x[2n-1]): previous pair's odd half via sublane roll ----
    prev = pltpu.roll(e[:, c0:], shift=1, axis=0)           # (tm, c0) f32
    hx = xh_ref[7:8, cin_raw:]                              # halo point (1, cin_raw)
    hacc = hx[:, 0:1] * ws_ref[cin_raw:cin_raw + 1, c0:]
    for c in range(1, cin_raw):
        hacc = hacc + hx[:, c:c + 1] * ws_ref[cin_raw + c:cin_raw + c + 1, c0:]
    he = hacc * ss_ref[:, c0:] + bs_ref[:, c0:]
    he = jnp.where(he > 0, he, 0.2 * he)
    he = jnp.where(i > 0, he, jnp.zeros_like(he))           # conv's leading zero row
    rows = jax.lax.broadcasted_iota(jnp.int32, (tm, c0), 0)
    tap0 = jnp.where(rows == 0, he, prev).astype(jnp.bfloat16)
    out = out + jnp.dot(tap0, w0_ref[...], preferred_element_type=jnp.float32)

    # --- Downsample BN affine, zero pad rows, single full-tile store ---------
    y = out * s_ref[...] + b_ref[...]
    grow = i * tm + jax.lax.broadcasted_iota(jnp.int32, (tm, 1), 0)
    y = jnp.where(grow < n_valid, y, 0.0)
    o_ref[...] = y.astype(o_ref.dtype)


def fused_stem_downsample(xp, stem_p, down_p, *, tm, n_in, n_valid):
    """xp: (B, P, 2*cin_raw) paired raw points -> (B, P, cout) bf16."""
    B, P, C2 = xp.shape
    cin_raw = C2 // 2
    c0 = down_p["w0"].shape[0]
    cout = down_p["w12"].shape[-1]
    hb = tm // 8
    kernel = functools.partial(_stem_down_kernel, cin_raw=cin_raw, c0=c0,
                               tm=tm, n_in=n_in, n_valid=n_valid)
    return pl.pallas_call(
        kernel,
        out_shape=jax.ShapeDtypeStruct((B, P, cout), jnp.bfloat16),
        grid_spec=pltpu.PrefetchScalarGridSpec(
            num_scalar_prefetch=0,
            grid=(B, P // tm),
            in_specs=[
                pl.BlockSpec((None, tm, C2), lambda b, i: (b, i, 0)),
                pl.BlockSpec((None, 8, C2),
                             lambda b, i: (b, jnp.maximum(i * hb - 1, 0), 0)),
                pl.BlockSpec((C2, 2 * c0), lambda b, i: (0, 0)),
                pl.BlockSpec((1, 2 * c0), lambda b, i: (0, 0)),
                pl.BlockSpec((1, 2 * c0), lambda b, i: (0, 0)),
                pl.BlockSpec((2 * c0, cout), lambda b, i: (0, 0)),
                pl.BlockSpec((c0, cout), lambda b, i: (0, 0)),
                pl.BlockSpec((1, cout), lambda b, i: (0, 0)),
                pl.BlockSpec((1, cout), lambda b, i: (0, 0)),
            ],
            out_specs=pl.BlockSpec((None, tm, cout), lambda b, i: (b, i, 0)),
        ),
        compiler_params=pltpu.CompilerParams(
            dimension_semantics=("parallel", "parallel")),
    )(xp, xp, stem_p["w"], stem_p["scale"], stem_p["shift"],
      down_p["w12"], down_p["w0"], down_p["scale"], down_p["shift"])


# ----------------------------------------------------------------------------
# Kernel 2: Downsample = 1-D conv (k=3, stride=2, pad=1) + folded BN, on the
# lane-concatenated paired layout.  out[n] = x[2n-1]@W0 + x[2n]@W1 + x[2n+1]@W2.
# ----------------------------------------------------------------------------
def _down_kernel(xm_ref, xh_ref, w12_ref, w0_ref, s_ref, b_ref, o_ref,
                 *, cin, tm, n_valid):
    i = pl.program_id(1)
    xm = xm_ref[...]                                        # (tm, 2*cin) bf16
    # taps 1 & 2: one K = 2*cin matmul against the stacked weight
    out = jnp.dot(xm, w12_ref[...], preferred_element_type=jnp.float32)
    # tap 0: previous pair's odd half (sublane roll + 1-row halo, no strided load)
    sec = xm[:, cin:].astype(jnp.float32)                   # 128-aligned lane slice
    prev = pltpu.roll(sec, shift=1, axis=0)
    halo = xh_ref[7:8, cin:].astype(jnp.float32)            # row i*tm - 1, odd half
    halo = jnp.where(i > 0, halo, jnp.zeros_like(halo))     # conv's leading zero row
    rows = jax.lax.broadcasted_iota(jnp.int32, (tm, cin), 0)
    tap0 = jnp.where(rows == 0, halo, prev).astype(jnp.bfloat16)
    out = out + jnp.dot(tap0, w0_ref[...], preferred_element_type=jnp.float32)
    # folded BN, keep pad rows exactly zero, single aligned full-tile store
    y = out * s_ref[...] + b_ref[...]
    grow = i * tm + jax.lax.broadcasted_iota(jnp.int32, (tm, 1), 0)
    y = jnp.where(grow < n_valid, y, 0.0)
    o_ref[...] = y.astype(o_ref.dtype)


def downsample(hp, down_p, *, tm, n_valid):
    """hp: (B, P, 2*cin) bf16 paired rows -> (B, P, cout) bf16."""
    B, P, C2 = hp.shape
    cin = C2 // 2
    cout = down_p["w12"].shape[-1]
    hb = tm // 8
    kernel = functools.partial(_down_kernel, cin=cin, tm=tm, n_valid=n_valid)
    return pl.pallas_call(
        kernel,
        out_shape=jax.ShapeDtypeStruct((B, P, cout), jnp.bfloat16),
        grid_spec=pltpu.PrefetchScalarGridSpec(
            num_scalar_prefetch=0,
            grid=(B, P // tm),
            in_specs=[
                pl.BlockSpec((None, tm, C2), lambda b, i: (b, i, 0)),
                pl.BlockSpec((None, 8, C2),
                             lambda b, i: (b, jnp.maximum(i * hb - 1, 0), 0)),
                pl.BlockSpec((C2, cout), lambda b, i: (0, 0)),
                pl.BlockSpec((cin, cout), lambda b, i: (0, 0)),
                pl.BlockSpec((1, cout), lambda b, i: (0, 0)),
                pl.BlockSpec((1, cout), lambda b, i: (0, 0)),
            ],
            out_specs=pl.BlockSpec((None, tm, cout), lambda b, i: (b, i, 0)),
        ),
        compiler_params=pltpu.CompilerParams(
            dimension_semantics=("parallel", "parallel")),
    )(hp, hp, down_p["w12"], down_p["w0"], down_p["scale"], down_p["shift"])


# ----------------------------------------------------------------------------
# Kernel 3: tiled per-batch mean over points.  Column sums are computed on the
# MXU as ones @ x (bf16 in, f32 accumulate); partial sums accumulate in the
# resident output block across the (arbitrary) point-tile axis; batch parallel.
# ----------------------------------------------------------------------------
def _mean_kernel(x_ref, o_ref, *, tn, inv_n):
    t = pl.program_id(1)

    @pl.when(t == 0)
    def _():
        o_ref[...] = jnp.zeros_like(o_ref)

    ones = jnp.ones((8, tn), jnp.bfloat16)
    o_ref[...] += jnp.dot(ones, x_ref[...], preferred_element_type=jnp.float32)

    @pl.when(t == pl.num_programs(1) - 1)
    def _():
        o_ref[...] = o_ref[...] * inv_n


def mean_points(h, *, tn, n_valid):
    """h: (B, R, C) bf16 with rows >= n_valid zero -> (B, C) f32 means."""
    B, R, C = h.shape
    kernel = functools.partial(_mean_kernel, tn=tn, inv_n=1.0 / float(n_valid))
    means = pl.pallas_call(
        kernel,
        out_shape=jax.ShapeDtypeStruct((B, 8, C), jnp.float32),
        grid_spec=pltpu.PrefetchScalarGridSpec(
            num_scalar_prefetch=0,
            grid=(B, R // tn),
            in_specs=[pl.BlockSpec((None, tn, C), lambda b, t: (b, t, 0))],
            out_specs=pl.BlockSpec((None, 8, C), lambda b, t: (b, 0, 0)),
        ),
        compiler_params=pltpu.CompilerParams(
            dimension_semantics=("parallel", "arbitrary")),
    )(h)
    return means[:, 0, :]                                   # all 8 rows identical


# ----------------------------------------------------------------------------
# Kernel 4: tiny projection on the f32 means: (B, C) @ (C, E) + bias.
# ----------------------------------------------------------------------------
def _proj_kernel(m_ref, w_ref, b_ref, o_ref):
    o_ref[...] = (jnp.dot(m_ref[...], w_ref[...],
                          preferred_element_type=jnp.float32) + b_ref[...])


def proj(means, w, bias):
    B, C = means.shape
    E = w.shape[-1]
    return pl.pallas_call(
        _proj_kernel,
        out_shape=jax.ShapeDtypeStruct((B, E), jnp.float32),
        grid_spec=pltpu.PrefetchScalarGridSpec(
            num_scalar_prefetch=0,
            grid=(1,),
            in_specs=[pl.BlockSpec((B, C), lambda i: (0, 0)),
                      pl.BlockSpec((C, E), lambda i: (0, 0)),
                      pl.BlockSpec((1, E), lambda i: (0, 0))],
            out_specs=pl.BlockSpec((B, E), lambda i: (0, 0)),
        ),
        compiler_params=pltpu.CompilerParams(dimension_semantics=("arbitrary",)),
    )(means, w, bias.reshape(1, E))


# ----------------------------------------------------------------------------
# Deterministic parameter construction (matches the module's __init__ shapes).
# ----------------------------------------------------------------------------
def _bn_affine(key, c, conv_bias=None, eps=1e-5):
    """Fold eval-mode BatchNorm2d (+ optional conv bias) into scale/shift."""
    k1, k2, k3, k4 = jax.random.split(key, 4)
    gamma = 1.0 + 0.1 * jax.random.normal(k1, (c,), jnp.float32)
    beta = 0.1 * jax.random.normal(k2, (c,), jnp.float32)
    mean = 0.1 * jax.random.normal(k3, (c,), jnp.float32)
    var = jax.random.uniform(k4, (c,), jnp.float32, minval=0.5, maxval=1.5)
    scale = gamma * jax.lax.rsqrt(var + eps)
    shift = beta - mean * scale
    if conv_bias is not None:
        shift = shift + conv_bias * scale
    return scale, shift


def init_params(key, in_channels=3, channels=(64, 128, 256, 512), emb_dims=1024):
    keys = iter(jax.random.split(key, 16))
    c0 = channels[0]
    # stem: Conv2d(in_channels, c0, 1, bias=False) + BN + LeakyReLU(0.2)
    ws = 0.1 * jax.random.normal(next(keys), (c0, in_channels), jnp.float32)
    s1, b1 = _bn_affine(next(keys), c0)
    # duplicated stem weight so one pass produces [stem(even) ; stem(odd)]
    wbig = jnp.zeros((2 * in_channels, 2 * c0), jnp.float32)
    wbig = wbig.at[:in_channels, :c0].set(ws.T)
    wbig = wbig.at[in_channels:, c0:].set(ws.T)
    params = {"stem": dict(w=wbig,
                           scale=jnp.tile(s1, 2).reshape(1, 2 * c0),
                           shift=jnp.tile(b1, 2).reshape(1, 2 * c0))}
    ref = {"stem_w": ws.T, "stem_scale": s1, "stem_shift": b1, "down": []}
    # Downsample stages: Conv2d(ci-1, ci, 3, stride=2, padding=1, bias=True) + BN
    params["down"] = []
    for i in range(1, len(channels)):
        cin, cout = channels[i - 1], channels[i]
        w4 = 0.1 * jax.random.normal(next(keys), (cout, cin, 3, 3), jnp.float32)
        cb = 0.1 * jax.random.normal(next(keys), (cout,), jnp.float32)
        scale, shift = _bn_affine(next(keys), cout, conv_bias=cb)
        # W dim is 1 with padding=1 -> only the kw=1 column of the 3x3 kernel matters.
        taps = jnp.transpose(w4[:, :, :, 1], (2, 1, 0))            # (3, cin, cout)
        taps_q = taps.astype(jnp.bfloat16)
        params["down"].append(dict(
            w12=jnp.concatenate([taps_q[1], taps_q[2]], axis=0),    # (2*cin, cout)
            w0=taps_q[0],                                           # (cin, cout)
            scale=scale.reshape(1, cout),
            shift=shift.reshape(1, cout)))
        ref["down"].append((taps_q.astype(jnp.float32),
                            scale.reshape(1, cout), shift.reshape(1, cout)))
    # proj: Conv2d(channels[-1], emb_dims, 1, bias=True) -- kept f32 (precision)
    wp = 0.05 * jax.random.normal(next(keys), (emb_dims, channels[-1]), jnp.float32)
    bp = 0.05 * jax.random.normal(next(keys), (emb_dims,), jnp.float32)
    params["proj"] = dict(w=wp.T, b=bp)
    ref["proj_w"] = wp.T
    ref["proj_b"] = bp
    return params, ref


# ----------------------------------------------------------------------------
# Forward pass (mirrors GraphEncoder.forward).
# ----------------------------------------------------------------------------
def graph_encoder_forward(params, x, *, tile_m=512):
    # x: (B, C_in, N) -- PyTorch unsqueezes to NCHW (B, C, N, 1).
    B, cin_raw, N = x.shape
    tile_m = _round_up(max(tile_m, 8), 8)
    tm = min(tile_m, _round_up(-(-N // 8), 8))      # pair-rows per grid step
    npad = 8 * tm * (-(-N // (8 * tm)))             # keeps every stage block-exact

    # channels-last; pad only the tiny raw 3-channel input once (zeros); all
    # later stages keep their pad rows exactly 0, so no per-stage HBM pads.
    xr = jnp.transpose(x, (0, 2, 1)).astype(jnp.float32)            # (B, N, cin)
    xr = jnp.pad(xr, ((0, 0), (0, npad - N), (0, 0)))
    xp = xr.reshape(B, npad // 2, 2 * cin_raw)                      # paired (free)

    # stage 0: fused stem (1x1 conv + BN + LeakyReLU) + Downsample(64 -> 128)
    L = (N - 1) // 2 + 1
    h = fused_stem_downsample(xp, params["stem"], params["down"][0],
                              tm=tm, n_in=N, n_valid=L)             # (B, npad/2, 128)

    # TODO(synk): `Block` backbone modules are undefined in the reference source
    # (and Downsample defines no forward); only the Downsample stages are run.
    for p in params["down"][1:]:
        Bh, R, C = h.shape
        hp = h.reshape(Bh, R // 2, 2 * C)                           # pairing is free
        L = (L - 1) // 2 + 1
        h = downsample(hp, p, tm=tm, n_valid=L)

    # proj (1x1 conv, bias) + mean over points:  mean_n(xW+b) == mean_n(x)W + b
    means = mean_points(h, tn=tm, n_valid=L)                        # (B, 512) f32
    return proj(means, params["proj"]["w"], params["proj"]["b"])    # (B, emb) f32


# ----------------------------------------------------------------------------
# Pure-JAX f32 reference (same folded-BN parameters) for a numeric sanity check.
# ----------------------------------------------------------------------------
def reference_forward(ref, x):
    h = jnp.transpose(x, (0, 2, 1)).astype(jnp.float32)             # (B, N, cin)
    h = h @ ref["stem_w"]
    h = h * ref["stem_scale"] + ref["stem_shift"]
    h = jnp.where(h > 0, h, 0.2 * h)
    for taps, sc, sh in ref["down"]:
        _, L, _ = h.shape
        hp = jnp.pad(h, ((0, 0), (1, 1), (0, 0)))                   # conv pad=1
        n_out = (L - 1) // 2 + 1
        rows = []
        for n in range(n_out):
            rows.append(hp[:, 2 * n] @ taps[0] + hp[:, 2 * n + 1] @ taps[1]
                        + hp[:, 2 * n + 2] @ taps[2])
        h = jnp.stack(rows, axis=1) * sc + sh
    m = jnp.mean(h, axis=1)
    return m @ ref["proj_w"] + ref["proj_b"]


if __name__ == "__main__":
    key = jax.random.PRNGKey(0)
    kp, kx = jax.random.split(key)

    B, C_in, N = 2, 3, 16            # small point cloud: 2 batches, 3 dims, 16 points
    emb_dims = 1024
    params, ref = init_params(kp, in_channels=C_in, emb_dims=emb_dims)
    x = jax.random.normal(kx, (B, C_in, N), jnp.float32)

    fwd = jax.jit(functools.partial(graph_encoder_forward, params))
    out = jax.block_until_ready(fwd(x))
    assert out.shape == (B, emb_dims), out.shape
    assert bool(jnp.all(jnp.isfinite(out)))

    want = reference_forward(ref, x)
    err = float(jnp.max(jnp.abs(out - want))) / max(float(jnp.max(jnp.abs(want))), 1e-6)
    assert err < 0.05, f"relative-to-max error too large: {err}"
    print("KERNEL_OK")
</pallas_src>

<mosaic_0001>
module attributes {stable_mosaic.version = 11 : i64} {
  func.func @_stem_down_kernel(%arg0: i32, %arg1: i32, %arg2: memref<1x8x6xf32, #tpu.memory_space<vmem>>, %arg3: memref<1x8x6xf32, #tpu.memory_space<vmem>>, %arg4: memref<6x128xf32, #tpu.memory_space<vmem>>, %arg5: memref<1x128xf32, #tpu.memory_space<vmem>>, %arg6: memref<1x128xf32, #tpu.memory_space<vmem>>, %arg7: memref<128x128xbf16, #tpu.memory_space<vmem>>, %arg8: memref<64x128xbf16, #tpu.memory_space<vmem>>, %arg9: memref<1x128xf32, #tpu.memory_space<vmem>>, %arg10: memref<1x128xf32, #tpu.memory_space<vmem>>, %arg11: memref<1x8x128xbf16, #tpu.memory_space<vmem>>) attributes {dimension_semantics = [#tpu.dimension_semantics<parallel>, #tpu.dimension_semantics<parallel>], iteration_bounds = array<i64: 2, 4>, scalar_prefetch = 0 : i64, scratch_operands = 0 : i64, tpu.core_type = #tpu.core_type<tc>, window_params = [{transform_indices = @transform_0, window_bounds = array<i64: 1, 8, 6>}, {transform_indices = @transform_1, window_bounds = array<i64: 1, 8, 6>}, {pipeline_mode = #tpu.pipeline_mode<synchronous>, transform_indices = @transform_2, window_bounds = array<i64: 6, 128>}, {pipeline_mode = #tpu.pipeline_mode<synchronous>, transform_indices = @transform_3, window_bounds = array<i64: 1, 128>}, {pipeline_mode = #tpu.pipeline_mode<synchronous>, transform_indices = @transform_4, window_bounds = array<i64: 1, 128>}, {pipeline_mode = #tpu.pipeline_mode<synchronous>, transform_indices = @transform_5, window_bounds = array<i64: 128, 128>}, {pipeline_mode = #tpu.pipeline_mode<synchronous>, transform_indices = @transform_6, window_bounds = array<i64: 64, 128>}, {pipeline_mode = #tpu.pipeline_mode<synchronous>, transform_indices = @transform_7, window_bounds = array<i64: 1, 128>}, {pipeline_mode = #tpu.pipeline_mode<synchronous>, transform_indices = @transform_8, window_bounds = array<i64: 1, 128>}, {transform_indices = @transform_9, window_bounds = array<i64: 1, 8, 128>}]} {
    %c0 = arith.constant 0 : index
    %c0_0 = arith.constant 0 : index
    %c0_1 = arith.constant 0 : index
    %0 = vector.load %arg2[%c0, %c0_0, %c0_1] : memref<1x8x6xf32, #tpu.memory_space<vmem>>, vector<1x8x6xf32>
    %1 = vector.shape_cast %0 : vector<1x8x6xf32> to vector<8x6xf32>
    %2 = vector.extract_strided_slice %1 {offsets = [0, 0], sizes = [8, 1], strides = [1, 1]} : vector<8x6xf32> to vector<8x1xf32>
    %c0_2 = arith.constant 0 : index
    %c0_3 = arith.constant 0 : index
    %3 = vector.load %arg4[%c0_2, %c0_3] : memref<6x128xf32, #tpu.memory_space<vmem>>, vector<1x128xf32>
    %4 = vector.broadcast %2 : vector<8x1xf32> to vector<8x128xf32>
    %5 = vector.broadcast %3 : vector<1x128xf32> to vector<8x128xf32>
    %6 = arith.mulf %4, %5 : vector<8x128xf32>
    %7 = vector.extract_strided_slice %1 {offsets = [0, 1], sizes = [8, 1], strides = [1, 1]} : vector<8x6xf32> to vector<8x1xf32>
    %c1 = arith.constant 1 : index
    %c0_4 = arith.constant 0 : index
    %8 = vector.load %arg4[%c1, %c0_4] : memref<6x128xf32, #tpu.memory_space<vmem>>, vector<1x128xf32>
    %9 = vector.broadcast %7 : vector<8x1xf32> to vector<8x128xf32>
    %10 = vector.broadcast %8 : vector<1x128xf32> to vector<8x128xf32>
    %11 = arith.mulf %9, %10 : vector<8x128xf32>
    %12 = arith.addf %6, %11 : vector<8x128xf32>
    %13 = vector.extract_strided_slice %1 {offsets = [0, 2], sizes = [8, 1], strides = [1, 1]} : vector<8x6xf32> to vector<8x1xf32>
    %c2 = arith.constant 2 : index
    %c0_5 = arith.constant 0 : index
    %14 = vector.load %arg4[%c2, %c0_5] : memref<6x128xf32, #tpu.memory_space<vmem>>, vector<1x128xf32>
    %15 = vector.broadcast %13 : vector<8x1xf32> to vector<8x128xf32>
    %16 = vector.broadcast %14 : vector<1x128xf32> to vector<8x128xf32>
    %17 = arith.mulf %15, %16 : vector<8x128xf32>
    %18 = arith.addf %12, %17 : vector<8x128xf32>
    %19 = vector.extract_strided_slice %1 {offsets = [0, 3], sizes = [8, 1], strides = [1, 1]} : vector<8x6xf32> to vector<8x1xf32>
    %c3 = arith.constant 3 : index
    %c0_6 = arith.constant 0 : index
    %20 = vector.load %arg4[%c3, %c0_6] : memref<6x128xf32, #tpu.memory_space<vmem>>, vector<1x128xf32>
    %21 = vector.broadcast %19 : vector<8x1xf32> to vector<8x128xf32>
    %22 = vector.broadcast %20 : vector<1x128xf32> to vector<8x128xf32>
    %23 = arith.mulf %21, %22 : vector<8x128xf32>
    %24 = arith.addf %18, %23 : vector<8x128xf32>
    %25 = vector.extract_strided_slice %1 {offsets = [0, 4], sizes = [8, 1], strides = [1, 1]} : vector<8x6xf32> to vector<8x1xf32>
    %c4 = arith.constant 4 : index
    %c0_7 = arith.constant 0 : index
    %26 = vector.load %arg4[%c4, %c0_7] : memref<6x128xf32, #tpu.memory_space<vmem>>, vector<1x128xf32>
    %27 = vector.broadcast %25 : vector<8x1xf32> to vector<8x128xf32>
    %28 = vector.broadcast %26 : vector<1x128xf32> to vector<8x128xf32>
    %29 = arith.mulf %27, %28 : vector<8x128xf32>
    %30 = arith.addf %24, %29 : vector<8x128xf32>
    %31 = vector.extract_strided_slice %1 {offsets = [0, 5], sizes = [8, 1], strides = [1, 1]} : vector<8x6xf32> to vector<8x1xf32>
    %c5 = arith.constant 5 : index
    %c0_8 = arith.constant 0 : index
    %32 = vector.load %arg4[%c5, %c0_8] : memref<6x128xf32, #tpu.memory_space<vmem>>, vector<1x128xf32>
    %33 = vector.broadcast %31 : vector<8x1xf32> to vector<8x128xf32>
    %34 = vector.broadcast %32 : vector<1x128xf32> to vector<8x128xf32>
    %35 = arith.mulf %33, %34 : vector<8x128xf32>
    %36 = arith.addf %30, %35 : vector<8x128xf32>
    %c0_9 = arith.constant 0 : index
    %c0_10 = arith.constant 0 : index
    %37 = vector.load %arg5[%c0_9, %c0_10] : memref<1x128xf32, #tpu.memory_space<vmem>>, vector<1x128xf32>
    %38 = vector.broadcast %37 : vector<1x128xf32> to vector<8x128xf32>
    %39 = arith.mulf %36, %38 : vector<8x128xf32>
    %c0_11 = arith.constant 0 : index
    %c0_12 = arith.constant 0 : index
    %40 = vector.load %arg6[%c0_11, %c0_12] : memref<1x128xf32, #tpu.memory_space<vmem>>, vector<1x128xf32>
    %41 = vector.broadcast %40 : vector<1x128xf32> to vector<8x128xf32>
    %42 = arith.addf %39, %41 : vector<8x128xf32>
    %cst = arith.constant 0.000000e+00 : f32
    %43 = vector.broadcast %cst : f32 to vector<8x128xf32>
    %44 = arith.cmpf ogt, %42, %43 : vector<8x128xf32>
    %cst_13 = arith.constant 2.000000e-01 : f32
    %45 = vector.broadcast %cst_13 : f32 to vector<8x128xf32>
    %46 = arith.mulf %45, %42 : vector<8x128xf32>
    %47 = arith.select %44, %42, %46 : vector<8x128xi1>, vector<8x128xf32>
    %48 = arith.truncf %47 : vector<8x128xf32> to vector<8x128xbf16>
    %c0_14 = arith.constant 0 : index
    %c0_15 = arith.constant 0 : index
    %49 = vector.load %arg7[%c0_14, %c0_15] : memref<128x128xbf16, #tpu.memory_space<vmem>>, vector<128x128xbf16>
    %cst_16 = arith.constant dense<0.000000e+00> : vector<8x128xf32>
    %50 = tpu.matmul %48, %49, %cst_16 {dimension_numbers = #tpu.dot_dimension_numbers<[1], [0], [0], [1], [0, 0, 1, 1], [], []>} : vector<8x128xbf16>, vector<128x128xbf16>, vector<8x128xf32> -> vector<8x128xf32>
    %51 = vector.extract_strided_slice %47 {offsets = [0, 64], sizes = [8, 64], strides = [1, 1]} : vector<8x128xf32> to vector<8x64xf32>
    %c1_i32 = arith.constant 1 : i32
    %52 = tpu.dynamic_rotate %51 by %c1_i32 dim 0 : vector<8x64xf32>, i32 -> vector<8x64xf32>
    %c0_17 = arith.constant 0 : index
    %c7 = arith.constant 7 : index
    %c3_18 = arith.constant 3 : index
    %53 = vector.load %arg3[%c0_17, %c7, %c3_18] : memref<1x8x6xf32, #tpu.memory_space<vmem>>, vector<1x1x3xf32>
    %54 = vector.shape_cast %53 : vector<1x1x3xf32> to vector<1x3xf32>
    %55 = vector.extract_strided_slice %54 {offsets = [0, 0], sizes = [1, 1], strides = [1, 1]} : vector<1x3xf32> to vector<1x1xf32>
    %c3_19 = arith.constant 3 : index
    %c64 = arith.constant 64 : index
    %56 = vector.load %arg4[%c3_19, %c64] : memref<6x128xf32, #tpu.memory_space<vmem>>, vector<1x64xf32>
    %57 = vector.broadcast %55 : vector<1x1xf32> to vector<1x64xf32>
    %58 = arith.mulf %57, %56 : vector<1x64xf32>
    %59 = vector.extract_strided_slice %54 {offsets = [0, 1], sizes = [1, 1], strides = [1, 1]} : vector<1x3xf32> to vector<1x1xf32>
    %c4_20 = arith.constant 4 : index
    %c64_21 = arith.constant 64 : index
    %60 = vector.load %arg4[%c4_20, %c64_21] : memref<6x128xf32, #tpu.memory_space<vmem>>, vector<1x64xf32>
    %61 = vector.broadcast %59 : vector<1x1xf32> to vector<1x64xf32>
    %62 = arith.mulf %61, %60 : vector<1x64xf32>
    %63 = arith.addf %58, %62 : vector<1x64xf32>
    %64 = vector.extract_strided_slice %54 {offsets = [0, 2], sizes = [1, 1], strides = [1, 1]} : vector<1x3xf32> to vector<1x1xf32>
    %c5_22 = arith.constant 5 : index
    %c64_23 = arith.constant 64 : index
    %65 = vector.load %arg4[%c5_22, %c64_23] : memref<6x128xf32, #tpu.memory_space<vmem>>, vector<1x64xf32>
    %66 = vector.broadcast %64 : vector<1x1xf32> to vector<1x64xf32>
    %67 = arith.mulf %66, %65 : vector<1x64xf32>
    %68 = arith.addf %63, %67 : vector<1x64xf32>
    %c0_24 = arith.constant 0 : index
    %c64_25 = arith.constant 64 : index
    %69 = vector.load %arg5[%c0_24, %c64_25] : memref<1x128xf32, #tpu.memory_space<vmem>>, vector<1x64xf32>
    %70 = arith.mulf %68, %69 : vector<1x64xf32>
    %c0_26 = arith.constant 0 : index
    %c64_27 = arith.constant 64 : index
    %71 = vector.load %arg6[%c0_26, %c64_27] : memref<1x128xf32, #tpu.memory_space<vmem>>, vector<1x64xf32>
    %72 = arith.addf %70, %71 : vector<1x64xf32>
    %cst_28 = arith.constant 0.000000e+00 : f32
    %73 = vector.broadcast %cst_28 : f32 to vector<1x64xf32>
    %74 = arith.cmpf ogt, %72, %73 : vector<1x64xf32>
    %cst_29 = arith.constant 2.000000e-01 : f32
    %75 = vector.broadcast %cst_29 : f32 to vector<1x64xf32>
    %76 = arith.mulf %75, %72 : vector<1x64xf32>
    %77 = arith.select %74, %72, %76 : vector<1x64xi1>, vector<1x64xf32>
    %c0_i32 = arith.constant 0 : i32
    %78 = arith.cmpi sgt, %arg1, %c0_i32 : i32
    %cst_30 = arith.constant 0.000000e+00 : f32
    %79 = vector.broadcast %cst_30 : f32 to vector<1x64xf32>
    %80 = arith.select %78, %77, %79 : vector<1x64xf32>
    %81 = tpu.iota {dimensions = array<i32: 0>} : vector<8x64xi32>
    %c0_i32_31 = arith.constant 0 : i32
    %82 = vector.broadcast %c0_i32_31 : i32 to vector<8x64xi32>
    %83 = arith.cmpi eq, %81, %82 : vector<8x64xi32>
    %84 = vector.shape_cast %80 : vector<1x64xf32> to vector<1x64xf32>
    %85 = vector.broadcast %84 : vector<1x64xf32> to vector<8x64xf32>
    %86 = arith.select %83, %85, %52 : vector<8x64xi1>, vector<8x64xf32>
    %87 = arith.truncf %86 : vector<8x64xf32> to vector<8x64xbf16>
    %c0_32 = arith.constant 0 : index
    %c0_33 = arith.constant 0 : index
    %88 = vector.load %arg8[%c0_32, %c0_33] : memref<64x128xbf16, #tpu.memory_space<vmem>>, vector<64x128xbf16>
    %cst_34 = arith.constant dense<0.000000e+00> : vector<8x128xf32>
    %89 = tpu.matmul %87, %88, %cst_34 {dimension_numbers = #tpu.dot_dimension_numbers<[1], [0], [0], [1], [0, 0, 1, 1], [], []>} : vector<8x64xbf16>, vector<64x128xbf16>, vector<8x128xf32> -> vector<8x128xf32>
    %90 = arith.addf %50, %89 : vector<8x128xf32>
    %c0_35 = arith.constant 0 : index
    %c0_36 = arith.constant 0 : index
    %91 = vector.load %arg9[%c0_35, %c0_36] : memref<1x128xf32, #tpu.memory_space<vmem>>, vector<1x128xf32>
    %92 = vector.broadcast %91 : vector<1x128xf32> to vector<8x128xf32>
    %93 = arith.mulf %90, %92 : vector<8x128xf32>
    %c0_37 = arith.constant 0 : index
    %c0_38 = arith.constant 0 : index
    %94 = vector.load %arg10[%c0_37, %c0_38] : memref<1x128xf32, #tpu.memory_space<vmem>>, vector<1x128xf32>
    %95 = vector.broadcast %94 : vector<1x128xf32> to vector<8x128xf32>
    %96 = arith.addf %93, %95 : vector<8x128xf32>
    %c8_i32 = arith.constant 8 : i32
    %97 = arith.muli %arg1, %c8_i32 : i32
    %98 = tpu.iota {dimensions = array<i32: 0>} : vector<8x1xi32>
    %99 = vector.broadcast %97 : i32 to vector<8x1xi32>
    %100 = arith.addi %99, %98 : vector<8x1xi32>
    %c8_i32_39 = arith.constant 8 : i32
    %101 = vector.broadcast %c8_i32_39 : i32 to vector<8x1xi32>
    %102 = arith.cmpi slt, %100, %101 : vector<8x1xi32>
    %cst_40 = arith.constant 0.000000e+00 : f32
    %103 = vector.shape_cast %102 : vector<8x1xi1> to vector<8x1xi1>
    %104 = vector.broadcast %103 : vector<8x1xi1> to vector<8x128xi1>
    %105 = vector.broadcast %cst_40 : f32 to vector<8x128xf32>
    %106 = arith.select %104, %96, %105 : vector<8x128xi1>, vector<8x128xf32>
    %107 = arith.truncf %106 : vector<8x128xf32> to vector<8x128xbf16>
    %c0_41 = arith.constant 0 : index
    %c0_42 = arith.constant 0 : index
    %c0_43 = arith.constant 0 : index
    %108 = vector.load %arg11[%c0_41, %c0_42, %c0_43] : memref<1x8x128xbf16, #tpu.memory_space<vmem>>, vector<1x8x128xbf16>
    %109 = vector.shape_cast %108 : vector<1x8x128xbf16> to vector<8x128xbf16>
    %110 = vector.shape_cast %107 : vector<8x128xbf16> to vector<1x8x128xbf16>
    tpu.vector_store %arg11[%c0_41, %c0_42, %c0_43], %110 {strides = array<i32>} : memref<1x8x128xbf16, #tpu.memory_space<vmem>>, vector<1x8x128xbf16>,
    return
  }
  func.func @transform_0(%arg0: i32, %arg1: i32) -> (i32, i32, i32) {
    %c0_i32 = arith.constant 0 : i32
    %c0_i32_0 = arith.constant 0 : i32
    return %arg0, %arg1, %c0_i32 : i32, i32, i32
  }
  func.func @transform_1(%arg0: i32, %arg1: i32) -> (i32, i32, i32) {
    %c1_i32 = arith.constant 1 : i32
    %0 = arith.muli %arg1, %c1_i32 : i32
    %c1_i32_0 = arith.constant 1 : i32
    %1 = arith.subi %0, %c1_i32_0 : i32
    %c0_i32 = arith.constant 0 : i32
    %2 = arith.maxsi %1, %c0_i32 : i32
    %c0_i32_1 = arith.constant 0 : i32
    %c0_i32_2 = arith.constant 0 : i32
    return %arg0, %2, %c0_i32_1 : i32, i32, i32
  }
  func.func @transform_2(%arg0: i32, %arg1: i32) -> (i32, i32) {
    %c0_i32 = arith.constant 0 : i32
    %c0_i32_0 = arith.constant 0 : i32
    %c0_i32_1 = arith.constant 0 : i32
    return %c0_i32, %c0_i32_0 : i32, i32
  }
  func.func @transform_3(%arg0: i32, %arg1: i32) -> (i32, i32) {
    %c0_i32 = arith.constant 0 : i32
    %c0_i32_0 = arith.constant 0 : i32
    %c0_i32_1 = arith.constant 0 : i32
    return %c0_i32, %c0_i32_0 : i32, i32
  }
  func.func @transform_4(%arg0: i32, %arg1: i32) -> (i32, i32) {
    %c0_i32 = arith.constant 0 : i32
    %c0_i32_0 = arith.constant 0 : i32
    %c0_i32_1 = arith.constant 0 : i32
    return %c0_i32, %c0_i32_0 : i32, i32
  }
  func.func @transform_5(%arg0: i32, %arg1: i32) -> (i32, i32) {
    %c0_i32 = arith.constant 0 : i32
    %c0_i32_0 = arith.constant 0 : i32
    %c0_i32_1 = arith.constant 0 : i32
    return %c0_i32, %c0_i32_0 : i32, i32
  }
  func.func @transform_6(%arg0: i32, %arg1: i32) -> (i32, i32) {
    %c0_i32 = arith.constant 0 : i32
    %c0_i32_0 = arith.constant 0 : i32
    %c0_i32_1 = arith.constant 0 : i32
    return %c0_i32, %c0_i32_0 : i32, i32
  }
  func.func @transform_7(%arg0: i32, %arg1: i32) -> (i32, i32) {
    %c0_i32 = arith.constant 0 : i32
    %c0_i32_0 = arith.constant 0 : i32
    %c0_i32_1 = arith.constant 0 : i32
    return %c0_i32, %c0_i32_0 : i32, i32
  }
  func.func @transform_8(%arg0: i32, %arg1: i32) -> (i32, i32) {
    %c0_i32 = arith.constant 0 : i32
    %c0_i32_0 = arith.constant 0 : i32
    %c0_i32_1 = arith.constant 0 : i32
    return %c0_i32, %c0_i32_0 : i32, i32
  }
  func.func @transform_9(%arg0: i32, %arg1: i32) -> (i32, i32, i32) {
    %c0_i32 = arith.constant 0 : i32
    %c0_i32_0 = arith.constant 0 : i32
    return %arg0, %arg1, %c0_i32 : i32, i32, i32
  }
}

module attributes {stable_mosaic.version = 11 : i64} {
  func.func @_down_kernel(%arg0: i32, %arg1: i32, %arg2: memref<1x8x256xbf16, #tpu.memory_space<vmem>>, %arg3: memref<1x8x256xbf16, #tpu.memory_space<vmem>>, %arg4: memref<256x256xbf16, #tpu.memory_space<vmem>>, %arg5: memref<128x256xbf16, #tpu.memory_space<vmem>>, %arg6: memref<1x256xf32, #tpu.memory_space<vmem>>, %arg7: memref<1x256xf32, #tpu.memory_space<vmem>>, %arg8: memref<1x8x256xbf16, #tpu.memory_space<vmem>>) attributes {dimension_semantics = [#tpu.dimension_semantics<parallel>, #tpu.dimension_semantics<parallel>], iteration_bounds = array<i64: 2, 2>, scalar_prefetch = 0 : i64, scratch_operands = 0 : i64, tpu.core_type = #tpu.core_type<tc>, window_params = [{transform_indices = @transform_0, window_bounds = array<i64: 1, 8, 256>}, {transform_indices = @transform_1, window_bounds = array<i64: 1, 8, 256>}, {pipeline_mode = #tpu.pipeline_mode<synchronous>, transform_indices = @transform_2, window_bounds = array<i64: 256, 256>}, {pipeline_mode = #tpu.pipeline_mode<synchronous>, transform_indices = @transform_3, window_bounds = array<i64: 128, 256>}, {pipeline_mode = #tpu.pipeline_mode<synchronous>, transform_indices = @transform_4, window_bounds = array<i64: 1, 256>}, {pipeline_mode = #tpu.pipeline_mode<synchronous>, transform_indices = @transform_5, window_bounds = array<i64: 1, 256>}, {transform_indices = @transform_6, window_bounds = array<i64: 1, 8, 256>}]} {
    %c0 = arith.constant 0 : index
    %c0_0 = arith.constant 0 : index
    %c0_1 = arith.constant 0 : index
    %0 = vector.load %arg2[%c0, %c0_0, %c0_1] : memref<1x8x256xbf16, #tpu.memory_space<vmem>>, vector<1x8x256xbf16>
    %1 = vector.shape_cast %0 : vector<1x8x256xbf16> to vector<8x256xbf16>
    %c0_2 = arith.constant 0 : index
    %c0_3 = arith.constant 0 : index
    %2 = vector.load %arg4[%c0_2, %c0_3] : memref<256x256xbf16, #tpu.memory_space<vmem>>, vector<256x256xbf16>
    %cst = arith.constant dense<0.000000e+00> : vector<8x256xf32>
    %3 = tpu.matmul %1, %2, %cst {dimension_numbers = #tpu.dot_dimension_numbers<[1], [0], [0], [1], [0, 0, 1, 1], [], []>} : vector<8x256xbf16>, vector<256x256xbf16>, vector<8x256xf32> -> vector<8x256xf32>
    %4 = vector.extract_strided_slice %1 {offsets = [0, 128], sizes = [8, 128], strides = [1, 1]} : vector<8x256xbf16> to vector<8x128xbf16>
    %5 = arith.extf %4 : vector<8x128xbf16> to vector<8x128xf32>
    %c1_i32 = arith.constant 1 : i32
    %6 = tpu.dynamic_rotate %5 by %c1_i32 dim 0 : vector<8x128xf32>, i32 -> vector<8x128xf32>
    %c0_4 = arith.constant 0 : index
    %c7 = arith.constant 7 : index
    %c128 = arith.constant 128 : index
    %7 = vector.load %arg3[%c0_4, %c7, %c128] : memref<1x8x256xbf16, #tpu.memory_space<vmem>>, vector<1x1x128xbf16>
    %8 = vector.shape_cast %7 : vector<1x1x128xbf16> to vector<1x128xbf16>
    %9 = arith.extf %8 : vector<1x128xbf16> to vector<1x128xf32>
    %c0_i32 = arith.constant 0 : i32
    %10 = arith.cmpi sgt, %arg1, %c0_i32 : i32
    %cst_5 = arith.constant 0.000000e+00 : f32
    %11 = vector.broadcast %cst_5 : f32 to vector<1x128xf32>
    %12 = arith.select %10, %9, %11 : vector<1x128xf32>
    %13 = tpu.iota {dimensions = array<i32: 0>} : vector<8x128xi32>
    %c0_i32_6 = arith.constant 0 : i32
    %14 = vector.broadcast %c0_i32_6 : i32 to vector<8x128xi32>
    %15 = arith.cmpi eq, %13, %14 : vector<8x128xi32>
    %16 = vector.shape_cast %12 : vector<1x128xf32> to vector<1x128xf32>
    %17 = vector.broadcast %16 : vector<1x128xf32> to vector<8x128xf32>
    %18 = arith.select %15, %17, %6 : vector<8x128xi1>, vector<8x128xf32>
    %19 = arith.truncf %18 : vector<8x128xf32> to vector<8x128xbf16>
    %c0_7 = arith.constant 0 : index
    %c0_8 = arith.constant 0 : index
    %20 = vector.load %arg5[%c0_7, %c0_8] : memref<128x256xbf16, #tpu.memory_space<vmem>>, vector<128x256xbf16>
    %cst_9 = arith.constant dense<0.000000e+00> : vector<8x256xf32>
    %21 = tpu.matmul %19, %20, %cst_9 {dimension_numbers = #tpu.dot_dimension_numbers<[1], [0], [0], [1], [0, 0, 1, 1], [], []>} : vector<8x128xbf16>, vector<128x256xbf16>, vector<8x256xf32> -> vector<8x256xf32>
    %22 = arith.addf %3, %21 : vector<8x256xf32>
    %c0_10 = arith.constant 0 : index
    %c0_11 = arith.constant 0 : index
    %23 = vector.load %arg6[%c0_10, %c0_11] : memref<1x256xf32, #tpu.memory_space<vmem>>, vector<1x256xf32>
    %24 = vector.broadcast %23 : vector<1x256xf32> to vector<8x256xf32>
    %25 = arith.mulf %22, %24 : vector<8x256xf32>
    %c0_12 = arith.constant 0 : index
    %c0_13 = arith.constant 0 : index
    %26 = vector.load %arg7[%c0_12, %c0_13] : memref<1x256xf32, #tpu.memory_space<vmem>>, vector<1x256xf32>
    %27 = vector.broadcast %26 : vector<1x256xf32> to vector<8x256xf32>
    %28 = arith.addf %25, %27 : vector<8x256xf32>
    %c8_i32 = arith.constant 8 : i32
    %29 = arith.muli %arg1, %c8_i32 : i32
    %30 = tpu.iota {dimensions = array<i32: 0>} : vector<8x1xi32>
    %31 = vector.broadcast %29 : i32 to vector<8x1xi32>
    %32 = arith.addi %31, %30 : vector<8x1xi32>
    %c4_i32 = arith.constant 4 : i32
    %33 = vector.broadcast %c4_i32 : i32 to vector<8x1xi32>
    %34 = arith.cmpi slt, %32, %33 : vector<8x1xi32>
    %cst_14 = arith.constant 0.000000e+00 : f32
    %35 = vector.shape_cast %34 : vector<8x1xi1> to vector<8x1xi1>
    %36 = vector.broadcast %35 : vector<8x1xi1> to vector<8x256xi1>
    %37 = vector.broadcast %cst_14 : f32 to vector<8x256xf32>
    %38 = arith.select %36, %28, %37 : vector<8x256xi1>, vector<8x256xf32>
    %39 = arith.truncf %38 : vector<8x256xf32> to vector<8x256xbf16>
    %c0_15 = arith.constant 0 : index
    %c0_16 = arith.constant 0 : index
    %c0_17 = arith.constant 0 : index
    %40 = vector.load %arg8[%c0_15, %c0_16, %c0_17] : memref<1x8x256xbf16, #tpu.memory_space<vmem>>, vector<1x8x256xbf16>
    %41 = vector.shape_cast %40 : vector<1x8x256xbf16> to vector<8x256xbf16>
    %42 = vector.shape_cast %39 : vector<8x256xbf16> to vector<1x8x256xbf16>
    tpu.vector_store %arg8[%c0_15, %c0_16, %c0_17], %42 {strides = array<i32>} : memref<1x8x256xbf16, #tpu.memory_space<vmem>>, vector<1x8x256xbf16>,
    return
  }
  func.func @transform_0(%arg0: i32, %arg1: i32) -> (i32, i32, i32) {
    %c0_i32 = arith.constant 0 : i32
    %c0_i32_0 = arith.constant 0 : i32
    return %arg0, %arg1, %c0_i32 : i32, i32, i32
  }
  func.func @transform_1(%arg0: i32, %arg1: i32) -> (i32, i32, i32) {
    %c1_i32 = arith.constant 1 : i32
    %0 = arith.muli %arg1, %c1_i32 : i32
    %c1_i32_0 = arith.constant 1 : i32
    %1 = arith.subi %0, %c1_i32_0 : i32
    %c0_i32 = arith.constant 0 : i32
    %2 = arith.maxsi %1, %c0_i32 : i32
    %c0_i32_1 = arith.constant 0 : i32
    %c0_i32_2 = arith.constant 0 : i32
    return %arg0, %2, %c0_i32_1 : i32, i32, i32
  }
  func.func @transform_2(%arg0: i32, %arg1: i32) -> (i32, i32) {
    %c0_i32 = arith.constant 0 : i32
    %c0_i32_0 = arith.constant 0 : i32
    %c0_i32_1 = arith.constant 0 : i32
    return %c0_i32, %c0_i32_0 : i32, i32
  }
  func.func @transform_3(%arg0: i32, %arg1: i32) -> (i32, i32) {
    %c0_i32 = arith.constant 0 : i32
    %c0_i32_0 = arith.constant 0 : i32
    %c0_i32_1 = arith.constant 0 : i32
    return %c0_i32, %c0_i32_0 : i32, i32
  }
  func.func @transform_4(%arg0: i32, %arg1: i32) -> (i32, i32) {
    %c0_i32 = arith.constant 0 : i32
    %c0_i32_0 = arith.constant 0 : i32
    %c0_i32_1 = arith.constant 0 : i32
    return %c0_i32, %c0_i32_0 : i32, i32
  }
  func.func @transform_5(%arg0: i32, %arg1: i32) -> (i32, i32) {
    %c0_i32 = arith.constant 0 : i32
    %c0_i32_0 = arith.constant 0 : i32
    %c0_i32_1 = arith.constant 0 : i32
    return %c0_i32, %c0_i32_0 : i32, i32
  }
  func.func @transform_6(%arg0: i32, %arg1: i32) -> (i32, i32, i32) {
    %c0_i32 = arith.constant 0 : i32
    %c0_i32_0 = arith.constant 0 : i32
    return %arg0, %arg1, %c0_i32 : i32, i32, i32
  }
}

module attributes {stable_mosaic.version = 11 : i64} {
  func.func @_down_kernel(%arg0: i32, %arg1: i32, %arg2: memref<1x8x512xbf16, #tpu.memory_space<vmem>>, %arg3: memref<1x8x512xbf16, #tpu.memory_space<vmem>>, %arg4: memref<512x512xbf16, #tpu.memory_space<vmem>>, %arg5: memref<256x512xbf16, #tpu.memory_space<vmem>>, %arg6: memref<1x512xf32, #tpu.memory_space<vmem>>, %arg7: memref<1x512xf32, #tpu.memory_space<vmem>>, %arg8: memref<1x8x512xbf16, #tpu.memory_space<vmem>>) attributes {dimension_semantics = [#tpu.dimension_semantics<parallel>, #tpu.dimension_semantics<parallel>], iteration_bounds = array<i64: 2, 1>, scalar_prefetch = 0 : i64, scratch_operands = 0 : i64, tpu.core_type = #tpu.core_type<tc>, window_params = [{transform_indices = @transform_0, window_bounds = array<i64: 1, 8, 512>}, {transform_indices = @transform_1, window_bounds = array<i64: 1, 8, 512>}, {pipeline_mode = #tpu.pipeline_mode<synchronous>, transform_indices = @transform_2, window_bounds = array<i64: 512, 512>}, {pipeline_mode = #tpu.pipeline_mode<synchronous>, transform_indices = @transform_3, window_bounds = array<i64: 256, 512>}, {pipeline_mode = #tpu.pipeline_mode<synchronous>, transform_indices = @transform_4, window_bounds = array<i64: 1, 512>}, {pipeline_mode = #tpu.pipeline_mode<synchronous>, transform_indices = @transform_5, window_bounds = array<i64: 1, 512>}, {transform_indices = @transform_6, window_bounds = array<i64: 1, 8, 512>}]} {
    %c0 = arith.constant 0 : index
    %c0_0 = arith.constant 0 : index
    %c0_1 = arith.constant 0 : index
    %0 = vector.load %arg2[%c0, %c0_0, %c0_1] : memref<1x8x512xbf16, #tpu.memory_space<vmem>>, vector<1x8x512xbf16>
    %1 = vector.shape_cast %0 : vector<1x8x512xbf16> to vector<8x512xbf16>
    %c0_2 = arith.constant 0 : index
    %c0_3 = arith.constant 0 : index
    %2 = vector.load %arg4[%c0_2, %c0_3] : memref<512x512xbf16, #tpu.memory_space<vmem>>, vector<512x512xbf16>
    %cst = arith.constant dense<0.000000e+00> : vector<8x512xf32>
    %3 = tpu.matmul %1, %2, %cst {dimension_numbers = #tpu.dot_dimension_numbers<[1], [0], [0], [1], [0, 0, 1, 1], [], []>} : vector<8x512xbf16>, vector<512x512xbf16>, vector<8x512xf32> -> vector<8x512xf32>
    %4 = vector.extract_strided_slice %1 {offsets = [0, 256], sizes = [8, 256], strides = [1, 1]} : vector<8x512xbf16> to vector<8x256xbf16>
    %5 = arith.extf %4 : vector<8x256xbf16> to vector<8x256xf32>
    %c1_i32 = arith.constant 1 : i32
    %6 = tpu.dynamic_rotate %5 by %c1_i32 dim 0 : vector<8x256xf32>, i32 -> vector<8x256xf32>
    %c0_4 = arith.constant 0 : index
    %c7 = arith.constant 7 : index
    %c256 = arith.constant 256 : index
    %7 = vector.load %arg3[%c0_4, %c7, %c256] : memref<1x8x512xbf16, #tpu.memory_space<vmem>>, vector<1x1x256xbf16>
    %8 = vector.shape_cast %7 : vector<1x1x256xbf16> to vector<1x256xbf16>
    %9 = arith.extf %8 : vector<1x256xbf16> to vector<1x256xf32>
    %c0_i32 = arith.constant 0 : i32
    %10 = arith.cmpi sgt, %arg1, %c0_i32 : i32
    %cst_5 = arith.constant 0.000000e+00 : f32
    %11 = vector.broadcast %cst_5 : f32 to vector<1x256xf32>
    %12 = arith.select %10, %9, %11 : vector<1x256xf32>
    %13 = tpu.iota {dimensions = array<i32: 0>} : vector<8x256xi32>
    %c0_i32_6 = arith.constant 0 : i32
    %14 = vector.broadcast %c0_i32_6 : i32 to vector<8x256xi32>
    %15 = arith.cmpi eq, %13, %14 : vector<8x256xi32>
    %16 = vector.shape_cast %12 : vector<1x256xf32> to vector<1x256xf32>
    %17 = vector.broadcast %16 : vector<1x256xf32> to vector<8x256xf32>
    %18 = arith.select %15, %17, %6 : vector<8x256xi1>, vector<8x256xf32>
    %19 = arith.truncf %18 : vector<8x256xf32> to vector<8x256xbf16>
    %c0_7 = arith.constant 0 : index
    %c0_8 = arith.constant 0 : index
    %20 = vector.load %arg5[%c0_7, %c0_8] : memref<256x512xbf16, #tpu.memory_space<vmem>>, vector<256x512xbf16>
    %cst_9 = arith.constant dense<0.000000e+00> : vector<8x512xf32>
    %21 = tpu.matmul %19, %20, %cst_9 {dimension_numbers = #tpu.dot_dimension_numbers<[1], [0], [0], [1], [0, 0, 1, 1], [], []>} : vector<8x256xbf16>, vector<256x512xbf16>, vector<8x512xf32> -> vector<8x512xf32>
    %22 = arith.addf %3, %21 : vector<8x512xf32>
    %c0_10 = arith.constant 0 : index
    %c0_11 = arith.constant 0 : index
    %23 = vector.load %arg6[%c0_10, %c0_11] : memref<1x512xf32, #tpu.memory_space<vmem>>, vector<1x512xf32>
    %24 = vector.broadcast %23 : vector<1x512xf32> to vector<8x512xf32>
    %25 = arith.mulf %22, %24 : vector<8x512xf32>
    %c0_12 = arith.constant 0 : index
    %c0_13 = arith.constant 0 : index
    %26 = vector.load %arg7[%c0_12, %c0_13] : memref<1x512xf32, #tpu.memory_space<vmem>>, vector<1x512xf32>
    %27 = vector.broadcast %26 : vector<1x512xf32> to vector<8x512xf32>
    %28 = arith.addf %25, %27 : vector<8x512xf32>
    %c8_i32 = arith.constant 8 : i32
    %29 = arith.muli %arg1, %c8_i32 : i32
    %30 = tpu.iota {dimensions = array<i32: 0>} : vector<8x1xi32>
    %31 = vector.broadcast %29 : i32 to vector<8x1xi32>
    %32 = arith.addi %31, %30 : vector<8x1xi32>
    %c2_i32 = arith.constant 2 : i32
    %33 = vector.broadcast %c2_i32 : i32 to vector<8x1xi32>
    %34 = arith.cmpi slt, %32, %33 : vector<8x1xi32>
    %cst_14 = arith.constant 0.000000e+00 : f32
    %35 = vector.shape_cast %34 : vector<8x1xi1> to vector<8x1xi1>
    %36 = vector.broadcast %35 : vector<8x1xi1> to vector<8x512xi1>
    %37 = vector.broadcast %cst_14 : f32 to vector<8x512xf32>
    %38 = arith.select %36, %28, %37 : vector<8x512xi1>, vector<8x512xf32>
    %39 = arith.truncf %38 : vector<8x512xf32> to vector<8x512xbf16>
    %c0_15 = arith.constant 0 : index
    %c0_16 = arith.constant 0 : index
    %c0_17 = arith.constant 0 : index
    %40 = vector.load %arg8[%c0_15, %c0_16, %c0_17] : memref<1x8x512xbf16, #tpu.memory_space<vmem>>, vector<1x8x512xbf16>
    %41 = vector.shape_cast %40 : vector<1x8x512xbf16> to vector<8x512xbf16>
    %42 = vector.shape_cast %39 : vector<8x512xbf16> to vector<1x8x512xbf16>
    tpu.vector_store %arg8[%c0_15, %c0_16, %c0_17], %42 {strides = array<i32>} : memref<1x8x512xbf16, #tpu.memory_space<vmem>>, vector<1x8x512xbf16>,
    return
  }
  func.func @transform_0(%arg0: i32, %arg1: i32) -> (i32, i32, i32) {
    %c0_i32 = arith.constant 0 : i32
    %c0_i32_0 = arith.constant 0 : i32
    return %arg0, %arg1, %c0_i32 : i32, i32, i32
  }
  func.func @transform_1(%arg0: i32, %arg1: i32) -> (i32, i32, i32) {
    %c1_i32 = arith.constant 1 : i32
    %0 = arith.muli %arg1, %c1_i32 : i32
    %c1_i32_0 = arith.constant 1 : i32
    %1 = arith.subi %0, %c1_i32_0 : i32
    %c0_i32 = arith.constant 0 : i32
    %2 = arith.maxsi %1, %c0_i32 : i32
    %c0_i32_1 = arith.constant 0 : i32
    %c0_i32_2 = arith.constant 0 : i32
    return %arg0, %2, %c0_i32_1 : i32, i32, i32
  }
  func.func @transform_2(%arg0: i32, %arg1: i32) -> (i32, i32) {
    %c0_i32 = arith.constant 0 : i32
    %c0_i32_0 = arith.constant 0 : i32
    %c0_i32_1 = arith.constant 0 : i32
    return %c0_i32, %c0_i32_0 : i32, i32
  }
  func.func @transform_3(%arg0: i32, %arg1: i32) -> (i32, i32) {
    %c0_i32 = arith.constant 0 : i32
    %c0_i32_0 = arith.constant 0 : i32
    %c0_i32_1 = arith.constant 0 : i32
    return %c0_i32, %c0_i32_0 : i32, i32
  }
  func.func @transform_4(%arg0: i32, %arg1: i32) -> (i32, i32) {
    %c0_i32 = arith.constant 0 : i32
    %c0_i32_0 = arith.constant 0 : i32
    %c0_i32_1 = arith.constant 0 : i32
    return %c0_i32, %c0_i32_0 : i32, i32
  }
  func.func @transform_5(%arg0: i32, %arg1: i32) -> (i32, i32) {
    %c0_i32 = arith.constant 0 : i32
    %c0_i32_0 = arith.constant 0 : i32
    %c0_i32_1 = arith.constant 0 : i32
    return %c0_i32, %c0_i32_0 : i32, i32
  }
  func.func @transform_6(%arg0: i32, %arg1: i32) -> (i32, i32, i32) {
    %c0_i32 = arith.constant 0 : i32
    %c0_i32_0 = arith.constant 0 : i32
    return %arg0, %arg1, %c0_i32 : i32, i32, i32
  }
}

module attributes {stable_mosaic.version = 11 : i64} {
  func.func @_mean_kernel(%arg0: i32, %arg1: i32, %arg2: memref<1x8x512xbf16, #tpu.memory_space<vmem>>, %arg3: memref<1x8x512xf32, #tpu.memory_space<vmem>>) attributes {dimension_semantics = [#tpu.dimension_semantics<parallel>, #tpu.dimension_semantics<arbitrary>], iteration_bounds = array<i64: 2, 1>, scalar_prefetch = 0 : i64, scratch_operands = 0 : i64, tpu.core_type = #tpu.core_type<tc>, window_params = [{transform_indices = @transform_0, window_bounds = array<i64: 1, 8, 512>}, {transform_indices = @transform_1, window_bounds = array<i64: 1, 8, 512>}]} {
    %c0_i32 = arith.constant 0 : i32
    %0 = arith.cmpi eq, %arg1, %c0_i32 : i32
    %1 = arith.extui %0 : i1 to i32
    %c0_i32_0 = arith.constant 0 : i32
    %2 = arith.cmpi ne, %1, %c0_i32_0 : i32
    scf.if %2 {
      %cst_12 = arith.constant 0.000000e+00 : f32
      %16 = vector.broadcast %cst_12 : f32 to vector<8x512xf32>
      %c0_13 = arith.constant 0 : index
      %c0_14 = arith.constant 0 : index
      %c0_15 = arith.constant 0 : index
      %17 = vector.load %arg3[%c0_13, %c0_14, %c0_15] : memref<1x8x512xf32, #tpu.memory_space<vmem>>, vector<1x8x512xf32>
      %18 = vector.shape_cast %17 : vector<1x8x512xf32> to vector<8x512xf32>
      %19 = vector.shape_cast %16 : vector<8x512xf32> to vector<1x8x512xf32>
      tpu.vector_store %arg3[%c0_13, %c0_14, %c0_15], %19 {strides = array<i32>} : memref<1x8x512xf32, #tpu.memory_space<vmem>>, vector<1x8x512xf32>,
    } else {
    }
    %cst = arith.constant 1.000000e+00 : bf16
    %3 = vector.broadcast %cst : bf16 to vector<8x8xbf16>
    %c0 = arith.constant 0 : index
    %c0_1 = arith.constant 0 : index
    %c0_2 = arith.constant 0 : index
    %4 = vector.load %arg3[%c0, %c0_1, %c0_2] : memref<1x8x512xf32, #tpu.memory_space<vmem>>, vector<1x8x512xf32>
    %5 = vector.shape_cast %4 : vector<1x8x512xf32> to vector<8x512xf32>
    %c0_3 = arith.constant 0 : index
    %c0_4 = arith.constant 0 : index
    %c0_5 = arith.constant 0 : index
    %6 = vector.load %arg2[%c0_3, %c0_4, %c0_5] : memref<1x8x512xbf16, #tpu.memory_space<vmem>>, vector<1x8x512xbf16>
    %7 = vector.shape_cast %6 : vector<1x8x512xbf16> to vector<8x512xbf16>
    %cst_6 = arith.constant dense<0.000000e+00> : vector<8x512xf32>
    %8 = tpu.matmul %3, %7, %cst_6 {dimension_numbers = #tpu.dot_dimension_numbers<[1], [0], [0], [1], [0, 0, 1, 1], [], []>} : vector<8x8xbf16>, vector<8x512xbf16>, vector<8x512xf32> -> vector<8x512xf32>
    %9 = arith.addf %5, %8 : vector<8x512xf32>
    %c0_7 = arith.constant 0 : index
    %c0_8 = arith.constant 0 : index
    %c0_9 = arith.constant 0 : index
    %10 = vector.load %arg3[%c0_7, %c0_8, %c0_9] : memref<1x8x512xf32, #tpu.memory_space<vmem>>, vector<1x8x512xf32>
    %11 = vector.shape_cast %10 : vector<1x8x512xf32> to vector<8x512xf32>
    %12 = vector.shape_cast %9 : vector<8x512xf32> to vector<1x8x512xf32>
    tpu.vector_store %arg3[%c0_7, %c0_8, %c0_9], %12 {strides = array<i32>} : memref<1x8x512xf32, #tpu.memory_space<vmem>>, vector<1x8x512xf32>,
    %c0_i32_10 = arith.constant 0 : i32
    %13 = arith.cmpi eq, %arg1, %c0_i32_10 : i32
    %14 = arith.extui %13 : i1 to i32
    %c0_i32_11 = arith.constant 0 : i32
    %15 = arith.cmpi ne, %14, %c0_i32_11 : i32
    scf.if %15 {
      %c0_12 = arith.constant 0 : index
      %c0_13 = arith.constant 0 : index
      %c0_14 = arith.constant 0 : index
      %16 = vector.load %arg3[%c0_12, %c0_13, %c0_14] : memref<1x8x512xf32, #tpu.memory_space<vmem>>, vector<1x8x512xf32>
      %17 = vector.shape_cast %16 : vector<1x8x512xf32> to vector<8x512xf32>
      %cst_15 = arith.constant 5.000000e-01 : f32
      %18 = vector.broadcast %cst_15 : f32 to vector<8x512xf32>
      %19 = arith.mulf %17, %18 : vector<8x512xf32>
      %c0_16 = arith.constant 0 : index
      %c0_17 = arith.constant 0 : index
      %c0_18 = arith.constant 0 : index
      %20 = vector.load %arg3[%c0_16, %c0_17, %c0_18] : memref<1x8x512xf32, #tpu.memory_space<vmem>>, vector<1x8x512xf32>
      %21 = vector.shape_cast %20 : vector<1x8x512xf32> to vector<8x512xf32>
      %22 = vector.shape_cast %19 : vector<8x512xf32> to vector<1x8x512xf32>
      tpu.vector_store %arg3[%c0_16, %c0_17, %c0_18], %22 {strides = array<i32>} : memref<1x8x512xf32, #tpu.memory_space<vmem>>, vector<1x8x512xf32>,
    } else {
    }
    return
  }
  func.func @transform_0(%arg0: i32, %arg1: i32) -> (i32, i32, i32) {
    %c0_i32 = arith.constant 0 : i32
    %c0_i32_0 = arith.constant 0 : i32
    return %arg0, %arg1, %c0_i32 : i32, i32, i32
  }
  func.func @transform_1(%arg0: i32, %arg1: i32) -> (i32, i32, i32) {
    %c0_i32 = arith.constant 0 : i32
    %c0_i32_0 = arith.constant 0 : i32
    %c0_i32_1 = arith.constant 0 : i32
    return %arg0, %c0_i32, %c0_i32_0 : i32, i32, i32
  }
}

module attributes {stable_mosaic.version = 11 : i64} {
  func.func @_proj_kernel(%arg0: i32, %arg1: memref<2x512xf32, #tpu.memory_space<vmem>>, %arg2: memref<512x1024xf32, #tpu.memory_space<vmem>>, %arg3: memref<1x1024xf32, #tpu.memory_space<vmem>>, %arg4: memref<2x1024xf32, #tpu.memory_space<vmem>>) attributes {dimension_semantics = [#tpu.dimension_semantics<arbitrary>], iteration_bounds = array<i64: 1>, scalar_prefetch = 0 : i64, scratch_operands = 0 : i64, tpu.core_type = #tpu.core_type<tc>, window_params = [{pipeline_mode = #tpu.pipeline_mode<synchronous>, transform_indices = @transform_0, window_bounds = array<i64: 2, 512>}, {pipeline_mode = #tpu.pipeline_mode<synchronous>, transform_indices = @transform_1, window_bounds = array<i64: 512, 1024>}, {pipeline_mode = #tpu.pipeline_mode<synchronous>, transform_indices = @transform_2, window_bounds = array<i64: 1, 1024>}, {pipeline_mode = #tpu.pipeline_mode<synchronous>, transform_indices = @transform_3, window_bounds = array<i64: 2, 1024>}]} {
    %c0 = arith.constant 0 : index
    %c0_0 = arith.constant 0 : index
    %0 = vector.load %arg1[%c0, %c0_0] : memref<2x512xf32, #tpu.memory_space<vmem>>, vector<2x512xf32>
    %c0_1 = arith.constant 0 : index
    %c0_2 = arith.constant 0 : index
    %1 = vector.load %arg2[%c0_1, %c0_2] : memref<512x1024xf32, #tpu.memory_space<vmem>>, vector<512x1024xf32>
    %cst = arith.constant dense<0.000000e+00> : vector<2x1024xf32>
    %2 = tpu.matmul %0, %1, %cst {dimension_numbers = #tpu.dot_dimension_numbers<[1], [0], [0], [1], [0, 0, 1, 1], [], []>} : vector<2x512xf32>, vector<512x1024xf32>, vector<2x1024xf32> -> vector<2x1024xf32>
    %c0_3 = arith.constant 0 : index
    %c0_4 = arith.constant 0 : index
    %3 = vector.load %arg3[%c0_3, %c0_4] : memref<1x1024xf32, #tpu.memory_space<vmem>>, vector<1x1024xf32>
    %4 = vector.broadcast %3 : vector<1x1024xf32> to vector<2x1024xf32>
    %5 = arith.addf %2, %4 : vector<2x1024xf32>
    %c0_5 = arith.constant 0 : index
    %c0_6 = arith.constant 0 : index
    %6 = vector.load %arg4[%c0_5, %c0_6] : memref<2x1024xf32, #tpu.memory_space<vmem>>, vector<2x1024xf32>
    tpu.vector_store %arg4[%c0_5, %c0_6], %5 {strides = array<i32>} : memref<2x1024xf32, #tpu.memory_space<vmem>>, vector<2x1024xf32>,
    return
  }
  func.func @transform_0(%arg0: i32) -> (i32, i32) {
    %c0_i32 = arith.constant 0 : i32
    %c0_i32_0 = arith.constant 0 : i32
    %c0_i32_1 = arith.constant 0 : i32
    return %c0_i32, %c0_i32_0 : i32, i32
  }
  func.func @transform_1(%arg0: i32) -> (i32, i32) {
    %c0_i32 = arith.constant 0 : i32
    %c0_i32_0 = arith.constant 0 : i32
    %c0_i32_1 = arith.constant 0 : i32
    return %c0_i32, %c0_i32_0 : i32, i32
  }
  func.func @transform_2(%arg0: i32) -> (i32, i32) {
    %c0_i32 = arith.constant 0 : i32
    %c0_i32_0 = arith.constant 0 : i32
    %c0_i32_1 = arith.constant 0 : i32
    return %c0_i32, %c0_i32_0 : i32, i32
  }
  func.func @transform_3(%arg0: i32) -> (i32, i32) {
    %c0_i32 = arith.constant 0 : i32
    %c0_i32_0 = arith.constant 0 : i32
    %c0_i32_1 = arith.constant 0 : i32
    return %c0_i32, %c0_i32_0 : i32, i32
  }
}

</mosaic_0001>

<llo_original>
// kernel: graph_encoder_forward.5
$region0: #{graph_encoder_forward.5}
  #allocation0 [shape = 'u32[]', space=smem, size = 0x4, offset = 0x4, fixed_abs, tag = 'smem constant byte address 0x4 - core index']
  #allocation1 [shape = 'u32[144,128]{1,0:T(1,128)}', space=vmem, size = 0x12000, scoped, tag = 'internal scratch']
  %s0 = inlined_call_operand.vmem [shape: f32[2,32,6], index: 0, kind: input, shape index: {}, may-alias: {0,1}]
  %s1 = inlined_call_operand.vmem [shape: f32[2,32,6], index: 1, kind: input, shape index: {}, may-alias: {0,1}]
  %s2 = inlined_call_operand.hbm [shape: f32[6,128], index: 2, kind: input, shape index: {}]
  %s3 = inlined_call_operand.hbm [shape: f32[1,128], index: 3, kind: input, shape index: {}]
  %s4 = inlined_call_operand.hbm [shape: f32[1,128], index: 4, kind: input, shape index: {}]
  %s5 = inlined_call_operand.hbm [shape: bf16[128,128], index: 5, kind: input, shape index: {}]
  %s6 = inlined_call_operand.hbm [shape: bf16[64,128], index: 6, kind: input, shape index: {}]
  %s7 = inlined_call_operand.hbm [shape: f32[1,128], index: 7, kind: input, shape index: {}]
  %s8 = inlined_call_operand.hbm [shape: f32[1,128], index: 8, kind: input, shape index: {}]
  %s9 = inlined_call_operand.vmem [shape: bf16[2,32,128], index: 9, kind: output, shape index: {}]
  %s10 = sld [smem:[#allocation0]]
  $region97: #{graph_encoder_forward.5} parent=0
    _
  %s12 = ssub.s32 1, %s10
  %s13 = scalar_select 0, %s12, %s10
  $region1: #{graph_encoder_forward.5} parent=0
    #allocation2 [shape = 'u8[4096]{0}', space=vmem, size = 0x1000, scoped, tag = 'input window, operand 2, single buffered']
    #allocation3 [shape = 's32[2]{0}', space=sflag, size = 0x8, scoped, tag = 'scoped memory for graph_encoder_forward.5']
    #allocation4 [shape = 'u8[512]{0}', space=vmem, size = 0x400, scoped, tag = 'input window, operand 3, single buffered']
    #allocation5 [shape = 's32[1]{0}', space=sflag, size = 0x4, scoped, tag = 'scoped memory for graph_encoder_forward.5']
    #allocation6 [shape = 'u8[512]{0}', space=vmem, size = 0x400, scoped, tag = 'input window, operand 4, single buffered']
    #allocation7 [shape = 'u8[32768]{0}', space=vmem, size = 0x8000, scoped, tag = 'input window, operand 5, single buffered']
    #allocation8 [shape = 's32[1]{0}', space=sflag, size = 0x4, scoped, tag = 'scoped memory for graph_encoder_forward.5']
    #allocation9 [shape = 'u8[16384]{0}', space=vmem, size = 0x4000, scoped, tag = 'input window, operand 6, single buffered']
    #allocation10 [shape = 'u8[512]{0}', space=vmem, size = 0x400, scoped, tag = 'input window, operand 7, single buffered']
    #allocation11 [shape = 's32[1]{0}', space=sflag, size = 0x4, scoped, tag = 'scoped memory for graph_encoder_forward.5']
    #allocation12 [shape = 'u8[512]{0}', space=vmem, size = 0x400, scoped, tag = 'input window, operand 8, single buffered']
    %14 = vsyncpa [#allocation3], 0
    %15 = vsyncpa [#allocation5], 0
    %16 = vsyncpa [#allocation8], 0
    %17 = vsyncpa [#allocation11], 0
    loop: start=0, step=1, limit=10
    $region2: #{graph_encoder_forward.5} parent=1 // loop_pre_header
      _
    $region3: #{graph_encoder_forward.5} parent=1 // loop_header
      %s19 = sphi 0, %s23
      %p20 = scmp.ge.s32.totalorder %s19, 10
      %s26 = sphi 0, %s38
      %s27 = sphi 0, %s34
      %s28 = sphi 0, %s26
      %s29 = sphi 0, %s27
      %s30 = sphi 0, %s28
      %s31 = sphi 0, %s29
      %s43 = sphi 0, %s45
      %s46 = sphi 0, %s43
      %s47 = sphi 0, %s46
      %s63 = sphi 0, %s47
      %s77 = sphi 0, %s79
      %s80 = sphi 0, %s77
      %s81 = sphi 0, %s80
      %s97 = sphi 0, %s81
      %s101 = sphi 0, %s101
      %s103 = sphi 0, %s101
      %s104 = sphi 0, %s103
      %s118 = sphi 0, %s104
      %s122 = sphi 0, %s122
      %s124 = sphi 0, %s122
      %s125 = sphi 0, %s124
      %s139 = sphi 0, %s125
      %s143 = sphi 0, %s143
      %s145 = sphi 0, %s143
      %s146 = sphi 0, %s145
      %s160 = sphi 0, %s146
      %s164 = sphi 0, %s164
      %s166 = sphi 0, %s164
      %s167 = sphi 0, %s166
      %s181 = sphi 0, %s167
      %s185 = sphi 0, %s185
      %s187 = sphi 0, %s185
      %s188 = sphi 0, %s187
      %s202 = sphi 0, %s188
      %s206 = sphi 0, %s206
      %s208 = sphi 0, %s206
      %s209 = sphi 0, %s208
      %s223 = sphi 0, %s209
      %s227 = sphi 0, %s227
      %s229 = sphi 0, %s227
      %s230 = sphi 0, %s229
      %s244 = sphi 0, %s230
      %s252 = sphi 0, %s254
      %s255 = sphi 0, %s252
      %s256 = sphi 0, %s255
      %s272 = sphi 0, %s256
    $region4: #{graph_encoder_forward.5} parent=1 // loop_header_branch
      %22 = sbr.rel (%p20) target = $region8
    $region5: #{graph_encoder_forward.5} parent=1 // loop_body
      %s24 = ssub.s32 %s19, 1
      %s25 = ssub.s32 %s19, 2
      %s32 = sadd.s32 1, %s27
      %p33 = scmp.ge.s32.totalorder %s32, 4
      %s34 = scalar_select %p33, 0, %s32
      %s35 = sadd.s32 1, %s26
      %s36 = scalar_select %p33, %s35, %s26
      %p37 = scmp.ge.s32.totalorder %s36, 2
      %s38 = scalar_select %p37, 0, %s36
      %s39 = ssub.s32 %s26, %s38
      %s40 = ssub.s32 %s27, %s34
      %s41 = sor.u32 %s39, %s40
      %p42 = scmp.eq.s32.totalorder %s41, 0
      %s44 = sadd.s32 %s43, 1
      %s45 = scalar_select %p42, %s43, %s44
      %p48 = pneg %p42
      %p49 = scmp.eq.s32.totalorder %s19, 7
      %p50 = por %p48, %p49
      %p51 = scmp.ne.s32.totalorder %s43, %s46
      %p52 = scmp.eq.s32.totalorder %s19, 0
      %p53 = por %p51, %p52
      %p54 = scmp.ne.s32.totalorder %s43, %s46
      %p55 = scmp.eq.s32.totalorder %s24, 7
      %p56 = por %p54, %p55
      %p57 = scmp.ne.s32.totalorder %s46, %s47
      %p58 = scmp.eq.s32.totalorder %s24, 0
      %p59 = por %p57, %p58
      %p60 = scmp.ne.s32.totalorder %s46, %s47
      %p61 = scmp.eq.s32.totalorder %s25, 7
      %p62 = por %p60, %p61
      %p64 = scmp.ne.s32.totalorder %s47, %s63
      %p65 = scmp.eq.s32.totalorder %s25, 0
      %p66 = por %p64, %p65
      %s67 = ssub.s32 %s27, 1
      %p68 = scmp.gt.s32.totalorder %s67, 0
      %s69 = scalar_select %p68, %s67, 0
      %s70 = ssub.s32 %s34, 1
      %p71 = scmp.gt.s32.totalorder %s70, 0
      %s72 = scalar_select %p71, %s70, 0
      %s73 = ssub.s32 %s26, %s38
      %s74 = ssub.s32 %s69, %s72
      %s75 = sor.u32 %s73, %s74
      %p76 = scmp.eq.s32.totalorder %s75, 0
      %s78 = sadd.s32 %s77, 1
      %s79 = scalar_select %p76, %s77, %s78
      %p82 = pneg %p76
      %p83 = scmp.eq.s32.totalorder %s19, 7
      %p84 = por %p82, %p83
      %p85 = scmp.ne.s32.totalorder %s77, %s80
      %p86 = scmp.eq.s32.totalorder %s19, 0
      %p87 = por %p85, %p86
      %p88 = scmp.ne.s32.totalorder %s77, %s80
      %p89 = scmp.eq.s32.totalorder %s24, 7
      %p90 = por %p88, %p89
      %p91 = scmp.ne.s32.totalorder %s80, %s81
      %p92 = scmp.eq.s32.totalorder %s24, 0
      %p93 = por %p91, %p92
      %p94 = scmp.ne.s32.totalorder %s80, %s81
      %p95 = scmp.eq.s32.totalorder %s25, 7
      %p96 = por %p94, %p95
      %p98 = scmp.ne.s32.totalorder %s81, %s97
      %p99 = scmp.eq.s32.totalorder %s25, 0
      %p100 = por %p98, %p99
      %s102 = sadd.s32 %s101, 1
      %p105 = scmp.eq.s32.totalorder %s19, 7
      %p106 = scmp.ne.s32.totalorder %s101, %s103
      %p107 = scmp.eq.s32.totalorder %s19, 0
      %p108 = por %p106, %p107
      %p109 = scmp.ne.s32.totalorder %s101, %s103
      %p110 = scmp.eq.s32.totalorder %s24, 7
      %p111 = por %p109, %p110
      %p112 = scmp.ne.s32.totalorder %s103, %s104
      %p113 = scmp.eq.s32.totalorder %s24, 0
      %p114 = por %p112, %p113
      %p115 = scmp.ne.s32.totalorder %s103, %s104
      %p116 = scmp.eq.s32.totalorder %s25, 7
      %p117 = por %p115, %p116
      %p119 = scmp.ne.s32.totalorder %s104, %s118
      %p120 = scmp.eq.s32.totalorder %s25, 0
      %p121 = por %p119, %p120
      %s123 = sadd.s32 %s122, 1
      %p126 = scmp.eq.s32.totalorder %s19, 7
      %p127 = scmp.ne.s32.totalorder %s122, %s124
      %p128 = scmp.eq.s32.totalorder %s19, 0
      %p129 = por %p127, %p128
      %p130 = scmp.ne.s32.totalorder %s122, %s124
      %p131 = scmp.eq.s32.totalorder %s24, 7
      %p132 = por %p130, %p131
      %p133 = scmp.ne.s32.totalorder %s124, %s125
      %p134 = scmp.eq.s32.totalorder %s24, 0
      %p135 = por %p133, %p134
      %p136 = scmp.ne.s32.totalorder %s124, %s125
      %p137 = scmp.eq.s32.totalorder %s25, 7
      %p138 = por %p136, %p137
      %p140 = scmp.ne.s32.totalorder %s125, %s139
      %p141 = scmp.eq.s32.totalorder %s25, 0
      %p142 = por %p140, %p141
      %s144 = sadd.s32 %s143, 1
      %p147 = scmp.eq.s32.totalorder %s19, 7
      %p148 = scmp.ne.s32.totalorder %s143, %s145
      %p149 = scmp.eq.s32.totalorder %s19, 0
      %p150 = por %p148, %p149
      %p151 = scmp.ne.s32.totalorder %s143, %s145
      %p152 = scmp.eq.s32.totalorder %s24, 7
      %p153 = por %p151, %p152
      %p154 = scmp.ne.s32.totalorder %s145, %s146
      %p155 = scmp.eq.s32.totalorder %s24, 0
      %p156 = por %p154, %p155
      %p157 = scmp.ne.s32.totalorder %s145, %s146
      %p158 = scmp.eq.s32.totalorder %s25, 7
      %p159 = por %p157, %p158
      %p161 = scmp.ne.s32.totalorder %s146, %s160
      %p162 = scmp.eq.s32.totalorder %s25, 0
      %p163 = por %p161, %p162
      %s165 = sadd.s32 %s164, 1
      %p168 = scmp.eq.s32.totalorder %s19, 7
      %p169 = scmp.ne.s32.totalorder %s164, %s166
      %p170 = scmp.eq.s32.totalorder %s19, 0
      %p171 = por %p169, %p170
      %p172 = scmp.ne.s32.totalorder %s164, %s166
      %p173 = scmp.eq.s32.totalorder %s24, 7
      %p174 = por %p172, %p173
      %p175 = scmp.ne.s32.totalorder %s166, %s167
      %p176 = scmp.eq.s32.totalorder %s24, 0
      %p177 = por %p175, %p176
      %p178 = scmp.ne.s32.totalorder %s166, %s167
      %p179 = scmp.eq.s32.totalorder %s25, 7
      %p180 = por %p178, %p179
      %p182 = scmp.ne.s32.totalorder %s167, %s181
      %p183 = scmp.eq.s32.totalorder %s25, 0
      %p184 = por %p182, %p183
      %s186 = sadd.s32 %s185, 1
      %p189 = scmp.eq.s32.totalorder %s19, 7
      %p190 = scmp.ne.s32.totalorder %s185, %s187
      %p191 = scmp.eq.s32.totalorder %s19, 0
      %p192 = por %p190, %p191
      %p193 = scmp.ne.s32.totalorder %s185, %s187
      %p194 = scmp.eq.s32.totalorder %s24, 7
      %p195 = por %p193, %p194
      %p196 = scmp.ne.s32.totalorder %s187, %s188
      %p197 = scmp.eq.s32.totalorder %s24, 0
      %p198 = por %p196, %p197
      %p199 = scmp.ne.s32.totalorder %s187, %s188
      %p200 = scmp.eq.s32.totalorder %s25, 7
      %p201 = por %p199, %p200
      %p203 = scmp.ne.s32.totalorder %s188, %s202
      %p204 = scmp.eq.s32.totalorder %s25, 0
      %p205 = por %p203, %p204
      %s207 = sadd.s32 %s206, 1
      %p210 = scmp.eq.s32.totalorder %s19, 7
      %p211 = scmp.ne.s32.totalorder %s206, %s208
      %p212 = scmp.eq.s32.totalorder %s19, 0
      %p213 = por %p211, %p212
      %p214 = scmp.ne.s32.totalorder %s206, %s208
      %p215 = scmp.eq.s32.totalorder %s24, 7
      %p216 = por %p214, %p215
      %p217 = scmp.ne.s32.totalorder %s208, %s209
      %p218 = scmp.eq.s32.totalorder %s24, 0
      %p219 = por %p217, %p218
      %p220 = scmp.ne.s32.totalorder %s208, %s209
      %p221 = scmp.eq.s32.totalorder %s25, 7
      %p222 = por %p220, %p221
      %p224 = scmp.ne.s32.totalorder %s209, %s223
      %p225 = scmp.eq.s32.totalorder %s25, 0
      %p226 = por %p224, %p225
      %s228 = sadd.s32 %s227, 1
      %p231 = scmp.eq.s32.totalorder %s19, 7
      %p232 = scmp.ne.s32.totalorder %s227, %s229
      %p233 = scmp.eq.s32.totalorder %s19, 0
      %p234 = por %p232, %p233
      %p235 = scmp.ne.s32.totalorder %s227, %s229
      %p236 = scmp.eq.s32.totalorder %s24, 7
      %p237 = por %p235, %p236
      %p238 = scmp.ne.s32.totalorder %s229, %s230
      %p239 = scmp.eq.s32.totalorder %s24, 0
      %p240 = por %p238, %p239
      %p241 = scmp.ne.s32.totalorder %s229, %s230
      %p242 = scmp.eq.s32.totalorder %s25, 7
      %p243 = por %p241, %p242
      %p245 = scmp.ne.s32.totalorder %s230, %s244
      %p246 = scmp.eq.s32.totalorder %s25, 0
      %p247 = por %p245, %p246
      %s248 = ssub.s32 %s26, %s38
      %s249 = ssub.s32 %s27, %s34
      %s250 = sor.u32 %s248, %s249
      %p251 = scmp.eq.s32.totalorder %s250, 0
      %s253 = sadd.s32 %s252, 1
      %s254 = scalar_select %p251, %s252, %s253
      %p257 = pneg %p251
      %p258 = scmp.eq.s32.totalorder %s19, 7
      %p259 = por %p257, %p258
      %p260 = scmp.ne.s32.totalorder %s252, %s255
      %p261 = scmp.eq.s32.totalorder %s19, 0
      %p262 = por %p260, %p261
      %p263 = scmp.ne.s32.totalorder %s252, %s255
      %p264 = scmp.eq.s32.totalorder %s24, 7
      %p265 = por %p263, %p264
      %p266 = scmp.ne.s32.totalorder %s255, %s256
      %p267 = scmp.eq.s32.totalorder %s24, 0
      %p268 = por %p266, %p267
      %p269 = scmp.ne.s32.totalorder %s255, %s256
      %p270 = scmp.eq.s32.totalorder %s25, 7
      %p271 = por %p269, %p270
      %p273 = scmp.ne.s32.totalorder %s256, %s272
      %p274 = scmp.eq.s32.totalorder %s25, 0
      %p275 = por %p273, %p274
      %p276 = scmp.le.s32.totalorder 1, %s19
      %p277 = scmp.lt.s32.totalorder %s19, 9
      %p278 = pnand %p276, %p277
      %p279 = pneg %p278
      // Predicated region
      $region9: #{graph_encoder_forward.5} parent=5 // pred_check
        _
      $region10: #{graph_encoder_forward.5} parent=5 // pred_check_branch
        %281 = sbr.rel (%p278) target = $region12
      $region11: #{graph_encoder_forward.5} parent=5 // pred_region
        %s282 = ssub.s32 %s19, 1
        // Predicated region
        $region13: #{graph_encoder_forward.5} parent=11 // pred_check
          %p283 = pneg %p114
        $region14: #{graph_encoder_forward.5} parent=11 // pred_check_branch
          %285 = sbr.rel (%p283) target = $region16
        $region15: #{graph_encoder_forward.5} parent=11 // pred_region
          %s287 = ssub.s32 128, 128
          %288 = vsyncadd [#allocation3], %s287
          %s290 = sshll.u32 [#allocation2], 4
          %s291 = int_to_ptr.vmem [resolvable:$true] %s290
          %293 = dma.hbm_to_vmem [thread:$0]  %s2, 128, %s291, [#allocation3]
        $region16: #{graph_encoder_forward.5} parent=11 // pred_fallthru
          _
        // Predicated region
        $region17: #{graph_encoder_forward.5} parent=11 // pred_check
          %p294 = pneg %p135
        $region18: #{graph_encoder_forward.5} parent=11 // pred_check_branch
          %296 = sbr.rel (%p294) target = $region20
        $region19: #{graph_encoder_forward.5} parent=11 // pred_region
          %s298 = ssub.s32 16, 16
          %299 = vsyncadd [#allocation5], %s298
          %s301 = sshll.u32 [#allocation4], 4
          %s302 = int_to_ptr.vmem [resolvable:$true] %s301
          %304 = dma.hbm_to_vmem [thread:$0]  %s3, 16, %s302, [#allocation5]
        $region20: #{graph_encoder_forward.5} parent=11 // pred_fallthru
          _
        // Predicated region
        $region21: #{graph_encoder_forward.5} parent=11 // pred_check
          %p305 = pneg %p156
        $region22: #{graph_encoder_forward.5} parent=11 // pred_check_branch
          %307 = sbr.rel (%p305) target = $region24
        $region23: #{graph_encoder_forward.5} parent=11 // pred_region
          %s309 = ssub.s32 16, 16
          %310 = vsyncadd [#allocation5], %s309
          %s312 = sshll.u32 [#allocation6], 4
          %s313 = int_to_ptr.vmem [resolvable:$true] %s312
          %315 = dma.hbm_to_vmem [thread:$0]  %s4, 16, %s313, [#allocation5]
        $region24: #{graph_encoder_forward.5} parent=11 // pred_fallthru
          _
        // Predicated region
        $region25: #{graph_encoder_forward.5} parent=11 // pred_check
          %p316 = pneg %p177
        $region26: #{graph_encoder_forward.5} parent=11 // pred_check_branch
          %318 = sbr.rel (%p316) target = $region28
        $region27: #{graph_encoder_forward.5} parent=11 // pred_region
          %s320 = ssub.s32 1024, 1024
          %321 = vsyncadd [#allocation8], %s320
          %s322 = sshll.u32 [#allocation7], 4
          %s323 = int_to_ptr.vmem [resolvable:$true] %s322
          %328 = dma.hbm_to_vmem [thread:$0]  %s5, 1024, %s323, [#allocation8], 64, 64, 4
        $region28: #{graph_encoder_forward.5} parent=11 // pred_fallthru
          _
        // Predicated region
        $region29: #{graph_encoder_forward.5} parent=11 // pred_check
          %p329 = pneg %p198
        $region30: #{graph_encoder_forward.5} parent=11 // pred_check_branch
          %331 = sbr.rel (%p329) target = $region32
        $region31: #{graph_encoder_forward.5} parent=11 // pred_region
          %s333 = ssub.s32 512, 512
          %334 = vsyncadd [#allocation8], %s333
          %s335 = sshll.u32 [#allocation9], 4
          %s336 = int_to_ptr.vmem [resolvable:$true] %s335
          %341 = dma.hbm_to_vmem [thread:$0]  %s6, 512, %s336, [#allocation8], 64, 64, 4
        $region32: #{graph_encoder_forward.5} parent=11 // pred_fallthru
          _
        // Predicated region
        $region33: #{graph_encoder_forward.5} parent=11 // pred_check
          %p342 = pneg %p219
        $region34: #{graph_encoder_forward.5} parent=11 // pred_check_branch
          %344 = sbr.rel (%p342) target = $region36
        $region35: #{graph_encoder_forward.5} parent=11 // pred_region
          %s346 = ssub.s32 16, 16
          %347 = vsyncadd [#allocation11], %s346
          %s349 = sshll.u32 [#allocation10], 4
          %s350 = int_to_ptr.vmem [resolvable:$true] %s349
          %352 = dma.hbm_to_vmem [thread:$0]  %s7, 16, %s350, [#allocation11]
        $region36: #{graph_encoder_forward.5} parent=11 // pred_fallthru
          _
        // Predicated region
        $region37: #{graph_encoder_forward.5} parent=11 // pred_check
          %p353 = pneg %p240
        $region38: #{graph_encoder_forward.5} parent=11 // pred_check_branch
          %355 = sbr.rel (%p353) target = $region40
        $region39: #{graph_encoder_forward.5} parent=11 // pred_region
          %s357 = ssub.s32 16, 16
          %358 = vsyncadd [#allocation11], %s357
          %s360 = sshll.u32 [#allocation12], 4
          %s361 = int_to_ptr.vmem [resolvable:$true] %s360
          %363 = dma.hbm_to_vmem [thread:$0]  %s8, 16, %s361, [#allocation11]
        $region40: #{graph_encoder_forward.5} parent=11 // pred_fallthru
          _
      $region12: #{graph_encoder_forward.5} parent=5 // pred_fallthru
        _
      %p364 = scmp.lt.s32.totalorder %s19, 8
      // Predicated region
      $region41: #{graph_encoder_forward.5} parent=5 // pred_check
        %p365 = pneg %p364
      $region42: #{graph_encoder_forward.5} parent=5 // pred_check_branch
        %367 = sbr.rel (%p365) target = $region44
      $region43: #{graph_encoder_forward.5} parent=5 // pred_region
        // Predicated region
        $region45: #{graph_encoder_forward.5} parent=43 // pred_check
          %p368 = pneg %p53
        $region46: #{graph_encoder_forward.5} parent=43 // pred_check_branch
          %370 = sbr.rel (%p368) target = $region48
        $region47: #{graph_encoder_forward.5} parent=43 // pred_region
          %p371 = scmp.lt.s32.totalorder %s26, 1
          %s372 = scalar_select %p371, %s26, 1
          %p373 = scmp.lt.s32.totalorder %s27, 3
          %s374 = scalar_select %p373, %s27, 3
          %s375 = smul.addr %s372, 4
          %s376 = sadd.s32 %s374, %s375
          %s377 = smul.addr %s376, 8
          %s378 = scalar_lea.vmem %s0, %s377
        $region48: #{graph_encoder_forward.5} parent=43 // pred_fallthru
          _
        // Predicated region
        $region49: #{graph_encoder_forward.5} parent=43 // pred_check
          %p379 = pneg %p87
        $region50: #{graph_encoder_forward.5} parent=43 // pred_check_branch
          %381 = sbr.rel (%p379) target = $region52
        $region51: #{graph_encoder_forward.5} parent=43 // pred_region
          %s382 = ssub.s32 %s27, 1
          %p383 = scmp.gt.s32.totalorder %s382, 0
          %s384 = scalar_select %p383, %s382, 0
          %p385 = scmp.lt.s32.totalorder %s26, 1
          %s386 = scalar_select %p385, %s26, 1
          %p387 = scmp.lt.s32.totalorder %s384, 3
          %s388 = scalar_select %p387, %s384, 3
          %s389 = smul.addr %s386, 4
          %s390 = sadd.s32 %s388, %s389
          %s391 = smul.addr %s390, 8
          %s392 = scalar_lea.vmem %s1, %s391
          %s393 = ssub.s32 %s27, 1
          %p394 = scmp.gt.s32.totalorder %s393, 0
          %s395 = scalar_select %p394, %s393, 0
        $region52: #{graph_encoder_forward.5} parent=43 // pred_fallthru
          _
      $region44: #{graph_encoder_forward.5} parent=5 // pred_fallthru
        _
      %p396 = scmp.le.s32.totalorder 1, %s19
      %p397 = scmp.lt.s32.totalorder %s19, 9
      %p398 = pnand %p396, %p397
      %p399 = pneg %p398
      // Predicated region
      $region53: #{graph_encoder_forward.5} parent=5 // pred_check
        _
      $region54: #{graph_encoder_forward.5} parent=5 // pred_check_branch
        %401 = sbr.rel (%p398) target = $region56
      $region55: #{graph_encoder_forward.5} parent=5 // pred_region
        %s402 = ssub.s32 %s19, 1
        // Predicated region
        $region57: #{graph_encoder_forward.5} parent=55 // pred_check
          %p403 = pneg %p114
        $region58: #{graph_encoder_forward.5} parent=55 // pred_check_branch
          %405 = sbr.rel (%p403) target = $region60
        $region59: #{graph_encoder_forward.5} parent=55 // pred_region
          %406 = dma.done [#allocation3], 128
        $region60: #{graph_encoder_forward.5} parent=55 // pred_fallthru
          _
        // Predicated region
        $region61: #{graph_encoder_forward.5} parent=55 // pred_check
          %p407 = pneg %p135
        $region62: #{graph_encoder_forward.5} parent=55 // pred_check_branch
          %409 = sbr.rel (%p407) target = $region64
        $region63: #{graph_encoder_forward.5} parent=55 // pred_region
          %410 = dma.done [#allocation5], 16
        $region64: #{graph_encoder_forward.5} parent=55 // pred_fallthru
          _
        // Predicated region
        $region65: #{graph_encoder_forward.5} parent=55 // pred_check
          %p411 = pneg %p156
        $region66: #{graph_encoder_forward.5} parent=55 // pred_check_branch
          %413 = sbr.rel (%p411) target = $region68
        $region67: #{graph_encoder_forward.5} parent=55 // pred_region
          %414 = dma.done [#allocation5], 16
        $region68: #{graph_encoder_forward.5} parent=55 // pred_fallthru
          _
        // Predicated region
        $region69: #{graph_encoder_forward.5} parent=55 // pred_check
          %p415 = pneg %p177
        $region70: #{graph_encoder_forward.5} parent=55 // pred_check_branch
          %417 = sbr.rel (%p415) target = $region72
        $region71: #{graph_encoder_forward.5} parent=55 // pred_region
          %418 = dma.done [#allocation8], 1024
        $region72: #{graph_encoder_forward.5} parent=55 // pred_fallthru
          _
        // Predicated region
        $region73: #{graph_encoder_forward.5} parent=55 // pred_check
          %p419 = pneg %p198
        $region74: #{graph_encoder_forward.5} parent=55 // pred_check_branch
          %421 = sbr.rel (%p419) target = $region76
        $region75: #{graph_encoder_forward.5} parent=55 // pred_region
          %422 = dma.done [#allocation8], 512
        $region76: #{graph_encoder_forward.5} parent=55 // pred_fallthru
          _
        // Predicated region
        $region77: #{graph_encoder_forward.5} parent=55 // pred_check
          %p423 = pneg %p219
        $region78: #{graph_encoder_forward.5} parent=55 // pred_check_branch
          %425 = sbr.rel (%p423) target = $region80
        $region79: #{graph_encoder_forward.5} parent=55 // pred_region
          %426 = dma.done [#allocation11], 16
        $region80: #{graph_encoder_forward.5} parent=55 // pred_fallthru
          _
        // Predicated region
        $region81: #{graph_encoder_forward.5} parent=55 // pred_check
          %p427 = pneg %p240
        $region82: #{graph_encoder_forward.5} parent=55 // pred_check_branch
          %429 = sbr.rel (%p427) target = $region84
        $region83: #{graph_encoder_forward.5} parent=55 // pred_region
          %430 = dma.done [#allocation11], 16
        $region84: #{graph_encoder_forward.5} parent=55 // pred_fallthru
          _
        %p431 = scmp.lt.s32.totalorder %s28, 1
        %s432 = scalar_select %p431, %s28, 1
        %p433 = scmp.lt.s32.totalorder %s29, 3
        %s434 = scalar_select %p433, %s29, 3
        %s435 = smul.addr %s432, 4
        %s436 = sadd.s32 %s434, %s435
        %s437 = smul.addr %s436, 8
        %s438 = scalar_lea.vmem %s0, %s437
        %p439 = pneg %p59
        %p440 = pneg %p56
        %s441 = ssub.s32 %s29, 1
        %p442 = scmp.gt.s32.totalorder %s441, 0
        %s443 = scalar_select %p442, %s441, 0
        %p444 = scmp.lt.s32.totalorder %s28, 1
        %s445 = scalar_select %p444, %s28, 1
        %p446 = scmp.lt.s32.totalorder %s443, 3
        %s447 = scalar_select %p446, %s443, 3
        %s448 = smul.addr %s445, 4
        %s449 = sadd.s32 %s447, %s448
        %s450 = smul.addr %s449, 8
        %s451 = scalar_lea.vmem %s1, %s450
        %p452 = pneg %p93
        %p453 = pneg %p90
        %p454 = pneg %p114
        %p455 = pneg %p111
        %p456 = pneg %p135
        %p457 = pneg %p132
        %p458 = pneg %p156
        %p459 = pneg %p153
        %p460 = pneg %p177
        %p461 = pneg %p174
        %p462 = pneg %p198
        %p463 = pneg %p195
        %p464 = pneg %p219
        %p465 = pneg %p216
        %p466 = pneg %p240
        %p467 = pneg %p237
        %p468 = pneg %p268
        %p469 = pneg %p265
        %p470 = scmp.lt.s32.totalorder %s28, 1
        %s471 = scalar_select %p470, %s28, 1
        %p472 = scmp.lt.s32.totalorder %s29, 3
        %s473 = scalar_select %p472, %s29, 3
        %s474 = smul.addr %s471, 4
        %s475 = sadd.s32 %s473, %s474
        %s476 = smul.addr %s475, 4
        %s477 = scalar_lea.vmem %s9, %s476
        %p478 = scmp.lt.s32.totalorder %s28, 1
        %s479 = scalar_select %p478, %s28, 1
        %p480 = scmp.lt.s32.totalorder %s29, 3
        %s481 = scalar_select %p480, %s29, 3
        %s482 = smul.addr %s479, 4
        %s483 = sadd.s32 %s481, %s482
        %s484 = smul.addr %s483, 8
        %s485 = scalar_lea.vmem %s0, %s484
        %s486 = ssub.s32 %s29, 1
        %p487 = scmp.gt.s32.totalorder %s486, 0
        %s488 = scalar_select %p487, %s486, 0
        %p489 = scmp.lt.s32.totalorder %s28, 1
        %s490 = scalar_select %p489, %s28, 1
        %p491 = scmp.lt.s32.totalorder %s488, 3
        %s492 = scalar_select %p491, %s488, 3
        %s493 = smul.addr %s490, 4
        %s494 = sadd.s32 %s492, %s493
        %s495 = smul.addr %s494, 8
        %s496 = scalar_lea.vmem %s1, %s495
        %s497 = ssub.s32 %s29, 1
        %p498 = scmp.gt.s32.totalorder %s497, 0
        %s499 = scalar_select %p498, %s497, 0
        %p500 = scmp.lt.s32.totalorder %s28, 1
        %s501 = scalar_select %p500, %s28, 1
        %p502 = scmp.lt.s32.totalorder %s29, 3
        %s503 = scalar_select %p502, %s29, 3
        %s504 = smul.addr %s501, 4
        %s505 = sadd.s32 %s503, %s504
        %s506 = smul.addr %s505, 4
        %s507 = scalar_lea.vmem %s9, %s506
        %v509 = vld [vmem:[%s485] sm:$0xff]
        %v510 = vld [vmem:[#allocation2] sm:$0x1]
        %512 = vset.pattern.permute.xlu0 0
        %513 = vperm.xlu0 %512, %v509
        %v514 = vpop.permute.xlu0 %513
        %v516 = vlaneseq
        %v517 = vshrl.u32 %v516, 7
        %v518 = vsub.s32 0, %v517
        %v519 = vrot.slane %v510, %v518
        %v520 = vmul.f32 %v514, %v519
        %v521 = vld [vmem:[#allocation2 + $0x1] sm:$0x1]
        %522 = vset.pattern.permute.xlu0 1
        %523 = vperm.xlu0 %522, %v509
        %v524 = vpop.permute.xlu0 %523
        %v526 = vlaneseq
        %v527 = vshrl.u32 %v526, 7
        %v528 = vsub.s32 0, %v527
        %v529 = vrot.slane %v521, %v528
        %v530 = vmul.f32 %v524, %v529
        %v531 = vadd.f32 %v520, %v530
        %v532 = vld [vmem:[#allocation2 + $0x2] sm:$0x1]
        %533 = vset.pattern.permute.xlu0 2
        %534 = vperm.xlu0 %533, %v509
        %v535 = vpop.permute.xlu0 %534
        %v537 = vlaneseq
        %v538 = vshrl.u32 %v537, 7
        %v539 = vsub.s32 0, %v538
        %v540 = vrot.slane %v532, %v539
        %v541 = vmul.f32 %v535, %v540
        %v542 = vadd.f32 %v531, %v541
        %v543 = vld [vmem:[#allocation2 + $0x3] sm:$0x1]
        %544 = vset.pattern.permute.xlu0 3
        %545 = vperm.xlu0 %544, %v509
        %v546 = vpop.permute.xlu0 %545
        %v548 = vlaneseq
        %v549 = vshrl.u32 %v548, 7
        %v550 = vsub.s32 0, %v549
        %v551 = vrot.slane %v543, %v550
        %v552 = vmul.f32 %v546, %v551
        %v553 = vadd.f32 %v542, %v552
        %v554 = vld [vmem:[#allocation2 + $0x4] sm:$0x1]
        %555 = vset.pattern.permute.xlu0 4
        %556 = vperm.xlu0 %555, %v509
        %v557 = vpop.permute.xlu0 %556
        %v559 = vlaneseq
        %v560 = vshrl.u32 %v559, 7
        %v561 = vsub.s32 0, %v560
        %v562 = vrot.slane %v554, %v561
        %v563 = vmul.f32 %v557, %v562
        %v564 = vadd.f32 %v553, %v563
        %v565 = vld [vmem:[#allocation2 + $0x5] sm:$0x1]
        %566 = vset.pattern.permute.xlu0 5
        %567 = vperm.xlu0 %566, %v509
        %v568 = vpop.permute.xlu0 %567
        %v570 = vlaneseq
        %v571 = vshrl.u32 %v570, 7
        %v572 = vsub.s32 0, %v571
        %v573 = vrot.slane %v565, %v572
        %v574 = vmul.f32 %v568, %v573
        %v575 = vadd.f32 %v564, %v574
        %v576 = vld [vmem:[#allocation4] sm:$0x1]
        %v578 = vlaneseq
        %v579 = vshrl.u32 %v578, 7
        %v580 = vsub.s32 0, %v579
        %v581 = vrot.slane %v576, %v580
        %v583 = vmul.f32 %v575, %v581
        %v584 = vld [vmem:[#allocation6] sm:$0x1]
        %v586 = vlaneseq
        %v587 = vshrl.u32 %v586, 7
        %v588 = vsub.s32 0, %v587
        %v589 = vrot.slane %v584, %v588
        %v591 = vadd.f32 %v583, %v589
        %vm592 = vcmp.gt.f32.partialorder %v591, 0.0
        %v593 = vmul.f32 %v591, 0.2
        %v594 = vsel %vm592, %v591, %v593
        %v595 = vpack.c.bf16 %v594, %v594
        %v596 = vld [vmem:[#allocation7] sm:$0xf]
        %v597 = vld [vmem:[#allocation7 + $0x4] sm:$0xf]
        %v598 = vld [vmem:[#allocation7 + $0x8] sm:$0xf]
        %v599 = vld [vmem:[#allocation7 + $0xc] sm:$0xf]
        %v600 = vld [vmem:[#allocation7 + $0x10] sm:$0xf]
        %v601 = vld [vmem:[#allocation7 + $0x14] sm:$0xf]
        %v602 = vld [vmem:[#allocation7 + $0x18] sm:$0xf]
        %v603 = vld [vmem:[#allocation7 + $0x1c] sm:$0xf]
        %v604 = vld [vmem:[#allocation7 + $0x20] sm:$0xf]
        %v605 = vld [vmem:[#allocation7 + $0x24] sm:$0xf]
        %v606 = vld [vmem:[#allocation7 + $0x28] sm:$0xf]
        %v607 = vld [vmem:[#allocation7 + $0x2c] sm:$0xf]
        %v608 = vld [vmem:[#allocation7 + $0x30] sm:$0xf]
        %v609 = vld [vmem:[#allocation7 + $0x34] sm:$0xf]
        %v610 = vld [vmem:[#allocation7 + $0x38] sm:$0xf]
        %v611 = vld [vmem:[#allocation7 + $0x3c] sm:$0xf]
        %613 = vrot.lane.b32.xlu0 %v594, 64
        %v614 = vpop.permute.xlu0 %613
        %v616 = vrot.slane %v614, 7
        %v617 = vld [vmem:[%s496 + $0x7] sm:$0x1]
        %619 = vset.pattern.permute.xlu0 3
        %620 = vperm.xlu0 %619, %v617
        %v621 = vpop.permute.xlu0 %620
        %v623 = vmul.f32 %v621, %v543
        %624 = vset.pattern.permute.xlu0 4
        %625 = vperm.xlu0 %624, %v617
        %v626 = vpop.permute.xlu0 %625
        %v628 = vmul.f32 %v626, %v554
        %v629 = vadd.f32 %v623, %v628
        %630 = vset.pattern.permute.xlu0 5
        %631 = vperm.xlu0 %630, %v617
        %v632 = vpop.permute.xlu0 %631
        %v634 = vmul.f32 %v632, %v565
        %v635 = vadd.f32 %v629, %v634
        %v636 = vmul.f32 %v635, %v576
        %v637 = vadd.f32 %v636, %v584
        %vm638 = vcmp.gt.f32.partialorder %v637, 0.0
        %v639 = vmul.f32 %v637, 0.2
        %v640 = vsel %vm638, %v637, %v639
        %p641 = scmp.gt.s32.totalorder %s29, 0
        %s642 = scalar_select %p641, 1, 0
        %v643 = vstv %s642
        %vm644 = vcmp.eq.s32.totalorder %v643, 1
        %v645 = vsel %vm644, %v640, 0.0
        %v646 = vlaneseq
        %v647 = vshrl.u32 %v646, 7
        %vm648 = vcmp.eq.s32.totalorder %v647, 0
        %v649 = vlaneseq
        %v650 = vshrl.u32 %v649, 7
        %v651 = vsub.s32 0, %v650
        %v652 = vrot.slane %v645, %v651
        %654 = vrot.lane.b32.xlu0 %v616, 64
        %v655 = vpop.permute.xlu0 %654
        %v657 = vsel %vm648, %v652, %v655
        %v658 = vpack.c.bf16 %v657, %v657
        %v659 = vld [vmem:[#allocation9] sm:$0xf]
        %v660 = vld [vmem:[#allocation9 + $0x4] sm:$0xf]
        %v661 = vld [vmem:[#allocation9 + $0x8] sm:$0xf]
        %v662 = vld [vmem:[#allocation9 + $0xc] sm:$0xf]
        %v663 = vld [vmem:[#allocation9 + $0x10] sm:$0xf]
        %v664 = vld [vmem:[#allocation9 + $0x14] sm:$0xf]
        %v665 = vld [vmem:[#allocation9 + $0x18] sm:$0xf]
        %v666 = vld [vmem:[#allocation9 + $0x1c] sm:$0xf]
        %668 = vrot.lane.b32.xlu0 %v658, 64
        %v669 = vpop.permute.xlu0 %668
        %v678 = vunpack.c.l.b16 %v659
        %v679 = vunpack.c.l.b16 %v660
        %v680 = vunpack.c.l.b16 %v661
        %v681 = vunpack.c.l.b16 %v662
        %v682 = vunpack.c.l.b16 %v663
        %v683 = vunpack.c.l.b16 %v664
        %v684 = vunpack.c.l.b16 %v665
        %v685 = vunpack.c.l.b16 %v666
        %v686 = vpack.c.b16 %v679, %v678
        %v687 = vpack.c.b16 %v681, %v680
        %v688 = vpack.c.b16 %v683, %v682
        %v689 = vpack.c.b16 %v685, %v684
        %vm694 = vcmask 523264
        %v696 = vsel %vm694, %v669, 0
        %698 = vmatprep.subr.bf16.mxu0 0
        %699 = vmatpush1.bf16.msra.mxu0 %v686
        %700 = vmatprep.subr.bf16.mxu0 0
        %701 = vmatpush1.bf16.msra.mxu0 %v687
        %702 = vmatprep.subr.bf16.mxu0 0
        %703 = vmatpush1.bf16.msra.mxu0 %v688
        %704 = vmatprep.subr.bf16.mxu0 0
        %705 = vmatpush1.bf16.msra.mxu0 %v689
        %706 = vmatprep.subr.bf16.mxu0 0
        %707 = vmatpush1.bf16.msra.mxu0 0
        %708 = vmatprep.subr.bf16.mxu0 0
        %709 = vmatpush1.bf16.msra.mxu0 0
        %710 = vmatprep.subr.bf16.mxu0 0
        %711 = vmatpush1.bf16.msra.mxu0 0
        %712 = vmatprep.subr.bf16.mxu0 0
        %713 = vmatpush1.bf16.msra.mxu0 0
        %714 = vmatprep.subr.bf16.mxu0 0
        %715 = vmatpush1.bf16.msra.mxu0 0
        %716 = vmatprep.subr.bf16.mxu0 0
        %717 = vmatpush1.bf16.msra.mxu0 0
        %718 = vmatprep.subr.bf16.mxu0 0
        %719 = vmatpush1.bf16.msra.mxu0 0
        %720 = vmatprep.subr.bf16.mxu0 0
        %721 = vmatpush1.bf16.msra.mxu0 0
        %722 = vmatprep.subr.bf16.mxu0 0
        %723 = vmatpush1.bf16.msra.mxu0 0
        %724 = vmatprep.subr.bf16.mxu0 0
        %725 = vmatpush1.bf16.msra.mxu0 0
        %726 = vmatprep.subr.bf16.mxu0 0
        %727 = vmatpush1.bf16.msra.mxu0 0
        %728 = vmatprep.subr.bf16.mxu0 0
        %729 = vmatpush1.bf16.msra.mxu0 0
        %730 = vmatprep.mubr.bf16.mxu0 0
        %731 = vmatmul.mubr.bf16.gmra.mrb[0].mxu0 %v696
        %v732 = vpop.f32.mrb[0].mxu0
        %v733 = vadd.f32 0.0, %v732
        %v734 = vpop.f32.mrb[0].mxu0
        %v735 = vpop.f32.mrb[0].mxu0
        %v736 = vpop.f32.mrb[0].mxu0
        %737 = vdwg.mxu0
        %v754 = vunpack.c.l.b16 %v596
        %v755 = vunpack.c.l.b16 %v597
        %v756 = vunpack.c.l.b16 %v598
        %v757 = vunpack.c.l.b16 %v599
        %v758 = vunpack.c.l.b16 %v600
        %v759 = vunpack.c.l.b16 %v601
        %v760 = vunpack.c.l.b16 %v602
        %v761 = vunpack.c.l.b16 %v603
        %v762 = vunpack.c.l.b16 %v604
        %v763 = vunpack.c.l.b16 %v605
        %v764 = vunpack.c.l.b16 %v606
        %v765 = vunpack.c.l.b16 %v607
        %v766 = vunpack.c.l.b16 %v608
        %v767 = vunpack.c.l.b16 %v609
        %v768 = vunpack.c.l.b16 %v610
        %v769 = vunpack.c.l.b16 %v611
        %v770 = vpack.c.b16 %v755, %v754
        %v771 = vpack.c.b16 %v757, %v756
        %v772 = vpack.c.b16 %v759, %v758
        %v773 = vpack.c.b16 %v761, %v760
        %v774 = vpack.c.b16 %v763, %v762
        %v775 = vpack.c.b16 %v765, %v764
        %v776 = vpack.c.b16 %v767, %v766
        %v777 = vpack.c.b16 %v769, %v768
        %786 = vmatprep.subr.bf16.mxu0 0
        %787 = vmatpush1.bf16.msra.mxu0 %v770
        %788 = vmatprep.subr.bf16.mxu0 0
        %789 = vmatpush1.bf16.msra.mxu0 %v771
        %790 = vmatprep.subr.bf16.mxu0 0
        %791 = vmatpush1.bf16.msra.mxu0 %v772
        %792 = vmatprep.subr.bf16.mxu0 0
        %793 = vmatpush1.bf16.msra.mxu0 %v773
        %794 = vmatprep.subr.bf16.mxu0 0
        %795 = vmatpush1.bf16.msra.mxu0 %v774
        %796 = vmatprep.subr.bf16.mxu0 0
        %797 = vmatpush1.bf16.msra.mxu0 %v775
        %798 = vmatprep.subr.bf16.mxu0 0
        %799 = vmatpush1.bf16.msra.mxu0 %v776
        %800 = vmatprep.subr.bf16.mxu0 0
        %801 = vmatpush1.bf16.msra.mxu0 %v777
        %802 = vmatprep.subr.bf16.mxu0 0
        %803 = vmatpush1.bf16.msra.mxu0 0
        %804 = vmatprep.subr.bf16.mxu0 0
        %805 = vmatpush1.bf16.msra.mxu0 0
        %806 = vmatprep.subr.bf16.mxu0 0
        %807 = vmatpush1.bf16.msra.mxu0 0
        %808 = vmatprep.subr.bf16.mxu0 0
        %809 = vmatpush1.bf16.msra.mxu0 0
        %810 = vmatprep.subr.bf16.mxu0 0
        %811 = vmatpush1.bf16.msra.mxu0 0
        %812 = vmatprep.subr.bf16.mxu0 0
        %813 = vmatpush1.bf16.msra.mxu0 0
        %814 = vmatprep.subr.bf16.mxu0 0
        %815 = vmatpush1.bf16.msra.mxu0 0
        %816 = vmatprep.subr.bf16.mxu0 0
        %817 = vmatpush1.bf16.msra.mxu0 0
        %818 = vmatprep.mubr.bf16.mxu0 0
        %819 = vmatmul.mubr.bf16.gmra.mrb[0].mxu0 %v595
        %v820 = vpop.f32.mrb[0].mxu0
        %v821 = vadd.f32 %v733, %v820
        %v822 = vpop.f32.mrb[0].mxu0
        %v823 = vpop.f32.mrb[0].mxu0
        %v824 = vpop.f32.mrb[0].mxu0
        %825 = vdwg.mxu0
        %v826 = vld [vmem:[#allocation10] sm:$0x1]
        %v828 = vlaneseq
        %v829 = vshrl.u32 %v828, 7
        %v830 = vsub.s32 0, %v829
        %v831 = vrot.slane %v826, %v830
        %v833 = vmul.f32 %v821, %v831
        %v834 = vld [vmem:[#allocation12] sm:$0x1]
        %v836 = vlaneseq
        %v837 = vshrl.u32 %v836, 7
        %v838 = vsub.s32 0, %v837
        %v839 = vrot.slane %v834, %v838
        %v841 = vadd.f32 %v833, %v839
        %s842 = smul.u32 %s29, 8
        %v843 = vstv %s842
        %v844 = vadd.s32 %v843, %v647
        %vm845 = vcmp.lt.s32.totalorder %v844, 8
        %v846 = vsel %vm845, 1, 0
        %vm847 = vcmp.eq.s32.totalorder %v846, 1
        %v848 = vsel %vm847, %v841, 0.0
        %v849 = vpack.c.bf16 %v848, %v848
        %850 = vst [vmem:[%s507] sm:$0xf] %v849
        %p851 = scmp.lt.s32.totalorder %s28, 1
        %s852 = scalar_select %p851, %s28, 1
        %p853 = scmp.lt.s32.totalorder %s29, 3
        %s854 = scalar_select %p853, %s29, 3
        %s855 = smul.addr %s852, 4
        %s856 = sadd.s32 %s854, %s855
        %s857 = smul.addr %s856, 4
        %s858 = scalar_lea.vmem %s9, %s857
        // Predicated region
        $region85: #{graph_encoder_forward.5} parent=55 // pred_check
          %p859 = pneg %p265
        $region86: #{graph_encoder_forward.5} parent=55 // pred_check_branch
          %861 = sbr.rel (%p859) target = $region88
        $region87: #{graph_encoder_forward.5} parent=55 // pred_region
          _
        $region88: #{graph_encoder_forward.5} parent=55 // pred_fallthru
          _
      $region56: #{graph_encoder_forward.5} parent=5 // pred_fallthru
        _
      %p862 = scmp.le.s32.totalorder 2, %s19
      // Predicated region
      $region89: #{graph_encoder_forward.5} parent=5 // pred_check
        %p863 = pneg %p862
      $region90: #{graph_encoder_forward.5} parent=5 // pred_check_branch
        %865 = sbr.rel (%p863) target = $region92
      $region91: #{graph_encoder_forward.5} parent=5 // pred_region
        %s866 = ssub.s32 %s19, 2
        // Predicated region
        $region93: #{graph_encoder_forward.5} parent=91 // pred_check
          %p867 = pneg %p271
        $region94: #{graph_encoder_forward.5} parent=91 // pred_check_branch
          %869 = sbr.rel (%p867) target = $region96
        $region95: #{graph_encoder_forward.5} parent=91 // pred_region
          %p870 = scmp.lt.s32.totalorder %s30, 1
          %s871 = scalar_select %p870, %s30, 1
          %p872 = scmp.lt.s32.totalorder %s31, 3
          %s873 = scalar_select %p872, %s31, 3
          %s874 = smul.addr %s871, 4
          %s875 = sadd.s32 %s873, %s874
          %s876 = smul.addr %s875, 4
          %s877 = scalar_lea.vmem %s9, %s876
        $region96: #{graph_encoder_forward.5} parent=91 // pred_fallthru
          _
      $region92: #{graph_encoder_forward.5} parent=5 // pred_fallthru
        _
    $region6: #{graph_encoder_forward.5} parent=1 // loop_footer
      %s23 = sadd.s32 1, %s19
    $region7: #{graph_encoder_forward.5} parent=1 // loop_footer_branch
      %18 = sbr.rel target = $region3
    $region8: #{graph_encoder_forward.5} parent=1 // loop_exit
      _
    %878 = vsyncpa [#allocation3], 1
    %s879 = scalar_lea.sflag [#allocation3], 1
    %880 = vsyncpa %s879, 1
    %881 = vsyncpa [#allocation5], 1
    %882 = vsyncpa [#allocation8], 1
    %883 = vsyncpa [#allocation11], 1

// kernel: graph_encoder_forward.6
$region0: #{graph_encoder_forward.6}
  #allocation0 [shape = 'u32[]', space=smem, size = 0x4, offset = 0x4, fixed_abs, tag = 'smem constant byte address 0x4 - core index']
  #allocation1 [shape = 'u32[144,128]{1,0:T(1,128)}', space=vmem, size = 0x12000, scoped, tag = 'internal scratch']
  %s0 = inlined_call_operand.vmem [shape: bf16[2,16,256], index: 0, kind: input, shape index: {}, may-alias: {0,1}]
  %s1 = inlined_call_operand.vmem [shape: bf16[2,16,256], index: 1, kind: input, shape index: {}, may-alias: {0,1}]
  %s2 = inlined_call_operand.vmem [shape: bf16[256,256], index: 2, kind: input, shape index: {}]
  %s3 = inlined_call_operand.vmem [shape: bf16[128,256], index: 3, kind: input, shape index: {}]
  %s4 = inlined_call_operand.hbm [shape: f32[1,256], index: 4, kind: input, shape index: {}]
  %s5 = inlined_call_operand.hbm [shape: f32[1,256], index: 5, kind: input, shape index: {}]
  %s6 = inlined_call_operand.vmem [shape: bf16[2,16,256], index: 6, kind: output, shape index: {}]
  %s7 = sld [smem:[#allocation0]]
  $region65: #{graph_encoder_forward.6} parent=0
    _
  %s9 = ssub.s32 1, %s7
  %s10 = scalar_select 0, %s9, %s7
  $region1: #{graph_encoder_forward.6} parent=0
    #allocation2 [shape = 'u8[1024]{0}', space=vmem, size = 0x400, scoped, tag = 'input window, operand 4, single buffered']
    #allocation3 [shape = 's32[2]{0}', space=sflag, size = 0x8, scoped, tag = 'scoped memory for graph_encoder_forward.6']
    #allocation4 [shape = 'u8[1024]{0}', space=vmem, size = 0x400, scoped, tag = 'input window, operand 5, single buffered']
    #allocation5 [shape = 's32[1]{0}', space=sflag, size = 0x4, scoped, tag = 'scoped memory for graph_encoder_forward.6']
    %11 = vsyncpa [#allocation3], 0
    %12 = vsyncpa [#allocation5], 0
    loop: start=0, step=1, limit=6
    $region2: #{graph_encoder_forward.6} parent=1 // loop_pre_header
      _
    $region3: #{graph_encoder_forward.6} parent=1 // loop_header
      %s14 = sphi 0, %s18
      %p15 = scmp.ge.s32.totalorder %s14, 6
      %s21 = sphi 0, %s33
      %s22 = sphi 0, %s29
      %s23 = sphi 0, %s21
      %s24 = sphi 0, %s22
      %s25 = sphi 0, %s23
      %s26 = sphi 0, %s24
      %s38 = sphi 0, %s40
      %s41 = sphi 0, %s38
      %s42 = sphi 0, %s41
      %s58 = sphi 0, %s42
      %s72 = sphi 0, %s74
      %s75 = sphi 0, %s72
      %s76 = sphi 0, %s75
      %s92 = sphi 0, %s76
      %s96 = sphi 0, %s96
      %s98 = sphi 0, %s96
      %s99 = sphi 0, %s98
      %s113 = sphi 0, %s99
      %s117 = sphi 0, %s117
      %s119 = sphi 0, %s117
      %s120 = sphi 0, %s119
      %s134 = sphi 0, %s120
      %s138 = sphi 0, %s138
      %s140 = sphi 0, %s138
      %s141 = sphi 0, %s140
      %s155 = sphi 0, %s141
      %s159 = sphi 0, %s159
      %s161 = sphi 0, %s159
      %s162 = sphi 0, %s161
      %s176 = sphi 0, %s162
      %s184 = sphi 0, %s186
      %s187 = sphi 0, %s184
      %s188 = sphi 0, %s187
      %s204 = sphi 0, %s188
    $region4: #{graph_encoder_forward.6} parent=1 // loop_header_branch
      %17 = sbr.rel (%p15) target = $region8
    $region5: #{graph_encoder_forward.6} parent=1 // loop_body
      %s19 = ssub.s32 %s14, 1
      %s20 = ssub.s32 %s14, 2
      %s27 = sadd.s32 1, %s22
      %p28 = scmp.ge.s32.totalorder %s27, 2
      %s29 = scalar_select %p28, 0, %s27
      %s30 = sadd.s32 1, %s21
      %s31 = scalar_select %p28, %s30, %s21
      %p32 = scmp.ge.s32.totalorder %s31, 2
      %s33 = scalar_select %p32, 0, %s31
      %s34 = ssub.s32 %s21, %s33
      %s35 = ssub.s32 %s22, %s29
      %s36 = sor.u32 %s34, %s35
      %p37 = scmp.eq.s32.totalorder %s36, 0
      %s39 = sadd.s32 %s38, 1
      %s40 = scalar_select %p37, %s38, %s39
      %p43 = pneg %p37
      %p44 = scmp.eq.s32.totalorder %s14, 3
      %p45 = por %p43, %p44
      %p46 = scmp.ne.s32.totalorder %s38, %s41
      %p47 = scmp.eq.s32.totalorder %s14, 0
      %p48 = por %p46, %p47
      %p49 = scmp.ne.s32.totalorder %s38, %s41
      %p50 = scmp.eq.s32.totalorder %s19, 3
      %p51 = por %p49, %p50
      %p52 = scmp.ne.s32.totalorder %s41, %s42
      %p53 = scmp.eq.s32.totalorder %s19, 0
      %p54 = por %p52, %p53
      %p55 = scmp.ne.s32.totalorder %s41, %s42
      %p56 = scmp.eq.s32.totalorder %s20, 3
      %p57 = por %p55, %p56
      %p59 = scmp.ne.s32.totalorder %s42, %s58
      %p60 = scmp.eq.s32.totalorder %s20, 0
      %p61 = por %p59, %p60
      %s62 = ssub.s32 %s22, 1
      %p63 = scmp.gt.s32.totalorder %s62, 0
      %s64 = scalar_select %p63, %s62, 0
      %s65 = ssub.s32 %s29, 1
      %p66 = scmp.gt.s32.totalorder %s65, 0
      %s67 = scalar_select %p66, %s65, 0
      %s68 = ssub.s32 %s21, %s33
      %s69 = ssub.s32 %s64, %s67
      %s70 = sor.u32 %s68, %s69
      %p71 = scmp.eq.s32.totalorder %s70, 0
      %s73 = sadd.s32 %s72, 1
      %s74 = scalar_select %p71, %s72, %s73
      %p77 = pneg %p71
      %p78 = scmp.eq.s32.totalorder %s14, 3
      %p79 = por %p77, %p78
      %p80 = scmp.ne.s32.totalorder %s72, %s75
      %p81 = scmp.eq.s32.totalorder %s14, 0
      %p82 = por %p80, %p81
      %p83 = scmp.ne.s32.totalorder %s72, %s75
      %p84 = scmp.eq.s32.totalorder %s19, 3
      %p85 = por %p83, %p84
      %p86 = scmp.ne.s32.totalorder %s75, %s76
      %p87 = scmp.eq.s32.totalorder %s19, 0
      %p88 = por %p86, %p87
      %p89 = scmp.ne.s32.totalorder %s75, %s76
      %p90 = scmp.eq.s32.totalorder %s20, 3
      %p91 = por %p89, %p90
      %p93 = scmp.ne.s32.totalorder %s76, %s92
      %p94 = scmp.eq.s32.totalorder %s20, 0
      %p95 = por %p93, %p94
      %s97 = sadd.s32 %s96, 1
      %p100 = scmp.eq.s32.totalorder %s14, 3
      %p101 = scmp.ne.s32.totalorder %s96, %s98
      %p102 = scmp.eq.s32.totalorder %s14, 0
      %p103 = por %p101, %p102
      %p104 = scmp.ne.s32.totalorder %s96, %s98
      %p105 = scmp.eq.s32.totalorder %s19, 3
      %p106 = por %p104, %p105
      %p107 = scmp.ne.s32.totalorder %s98, %s99
      %p108 = scmp.eq.s32.totalorder %s19, 0
      %p109 = por %p107, %p108
      %p110 = scmp.ne.s32.totalorder %s98, %s99
      %p111 = scmp.eq.s32.totalorder %s20, 3
      %p112 = por %p110, %p111
      %p114 = scmp.ne.s32.totalorder %s99, %s113
      %p115 = scmp.eq.s32.totalorder %s20, 0
      %p116 = por %p114, %p115
      %s118 = sadd.s32 %s117, 1
      %p121 = scmp.eq.s32.totalorder %s14, 3
      %p122 = scmp.ne.s32.totalorder %s117, %s119
      %p123 = scmp.eq.s32.totalorder %s14, 0
      %p124 = por %p122, %p123
      %p125 = scmp.ne.s32.totalorder %s117, %s119
      %p126 = scmp.eq.s32.totalorder %s19, 3
      %p127 = por %p125, %p126
      %p128 = scmp.ne.s32.totalorder %s119, %s120
      %p129 = scmp.eq.s32.totalorder %s19, 0
      %p130 = por %p128, %p129
      %p131 = scmp.ne.s32.totalorder %s119, %s120
      %p132 = scmp.eq.s32.totalorder %s20, 3
      %p133 = por %p131, %p132
      %p135 = scmp.ne.s32.totalorder %s120, %s134
      %p136 = scmp.eq.s32.totalorder %s20, 0
      %p137 = por %p135, %p136
      %s139 = sadd.s32 %s138, 1
      %p142 = scmp.eq.s32.totalorder %s14, 3
      %p143 = scmp.ne.s32.totalorder %s138, %s140
      %p144 = scmp.eq.s32.totalorder %s14, 0
      %p145 = por %p143, %p144
      %p146 = scmp.ne.s32.totalorder %s138, %s140
      %p147 = scmp.eq.s32.totalorder %s19, 3
      %p148 = por %p146, %p147
      %p149 = scmp.ne.s32.totalorder %s140, %s141
      %p150 = scmp.eq.s32.totalorder %s19, 0
      %p151 = por %p149, %p150
      %p152 = scmp.ne.s32.totalorder %s140, %s141
      %p153 = scmp.eq.s32.totalorder %s20, 3
      %p154 = por %p152, %p153
      %p156 = scmp.ne.s32.totalorder %s141, %s155
      %p157 = scmp.eq.s32.totalorder %s20, 0
      %p158 = por %p156, %p157
      %s160 = sadd.s32 %s159, 1
      %p163 = scmp.eq.s32.totalorder %s14, 3
      %p164 = scmp.ne.s32.totalorder %s159, %s161
      %p165 = scmp.eq.s32.totalorder %s14, 0
      %p166 = por %p164, %p165
      %p167 = scmp.ne.s32.totalorder %s159, %s161
      %p168 = scmp.eq.s32.totalorder %s19, 3
      %p169 = por %p167, %p168
      %p170 = scmp.ne.s32.totalorder %s161, %s162
      %p171 = scmp.eq.s32.totalorder %s19, 0
      %p172 = por %p170, %p171
      %p173 = scmp.ne.s32.totalorder %s161, %s162
      %p174 = scmp.eq.s32.totalorder %s20, 3
      %p175 = por %p173, %p174
      %p177 = scmp.ne.s32.totalorder %s162, %s176
      %p178 = scmp.eq.s32.totalorder %s20, 0
      %p179 = por %p177, %p178
      %s180 = ssub.s32 %s21, %s33
      %s181 = ssub.s32 %s22, %s29
      %s182 = sor.u32 %s180, %s181
      %p183 = scmp.eq.s32.totalorder %s182, 0
      %s185 = sadd.s32 %s184, 1
      %s186 = scalar_select %p183, %s184, %s185
      %p189 = pneg %p183
      %p190 = scmp.eq.s32.totalorder %s14, 3
      %p191 = por %p189, %p190
      %p192 = scmp.ne.s32.totalorder %s184, %s187
      %p193 = scmp.eq.s32.totalorder %s14, 0
      %p194 = por %p192, %p193
      %p195 = scmp.ne.s32.totalorder %s184, %s187
      %p196 = scmp.eq.s32.totalorder %s19, 3
      %p197 = por %p195, %p196
      %p198 = scmp.ne.s32.totalorder %s187, %s188
      %p199 = scmp.eq.s32.totalorder %s19, 0
      %p200 = por %p198, %p199
      %p201 = scmp.ne.s32.totalorder %s187, %s188
      %p202 = scmp.eq.s32.totalorder %s20, 3
      %p203 = por %p201, %p202
      %p205 = scmp.ne.s32.totalorder %s188, %s204
      %p206 = scmp.eq.s32.totalorder %s20, 0
      %p207 = por %p205, %p206
      %p208 = scmp.le.s32.totalorder 1, %s14
      %p209 = scmp.lt.s32.totalorder %s14, 5
      %p210 = pnand %p208, %p209
      %p211 = pneg %p210
      // Predicated region
      $region9: #{graph_encoder_forward.6} parent=5 // pred_check
        _
      $region10: #{graph_encoder_forward.6} parent=5 // pred_check_branch
        %213 = sbr.rel (%p210) target = $region12
      $region11: #{graph_encoder_forward.6} parent=5 // pred_region
        %s214 = ssub.s32 %s14, 1
        // Predicated region
        $region13: #{graph_encoder_forward.6} parent=11 // pred_check
          %p215 = pneg %p109
        $region14: #{graph_encoder_forward.6} parent=11 // pred_check_branch
          %217 = sbr.rel (%p215) target = $region16
        $region15: #{graph_encoder_forward.6} parent=11 // pred_region
          _
        $region16: #{graph_encoder_forward.6} parent=11 // pred_fallthru
          _
        // Predicated region
        $region17: #{graph_encoder_forward.6} parent=11 // pred_check
          %p218 = pneg %p130
        $region18: #{graph_encoder_forward.6} parent=11 // pred_check_branch
          %220 = sbr.rel (%p218) target = $region20
        $region19: #{graph_encoder_forward.6} parent=11 // pred_region
          _
        $region20: #{graph_encoder_forward.6} parent=11 // pred_fallthru
          _
        // Predicated region
        $region21: #{graph_encoder_forward.6} parent=11 // pred_check
          %p221 = pneg %p151
        $region22: #{graph_encoder_forward.6} parent=11 // pred_check_branch
          %223 = sbr.rel (%p221) target = $region24
        $region23: #{graph_encoder_forward.6} parent=11 // pred_region
          %s225 = ssub.s32 32, 32
          %226 = vsyncadd [#allocation3], %s225
          %s228 = sshll.u32 [#allocation2], 4
          %s229 = int_to_ptr.vmem [resolvable:$true] %s228
          %231 = dma.hbm_to_vmem [thread:$0]  %s4, 32, %s229, [#allocation3]
        $region24: #{graph_encoder_forward.6} parent=11 // pred_fallthru
          _
        // Predicated region
        $region25: #{graph_encoder_forward.6} parent=11 // pred_check
          %p232 = pneg %p172
        $region26: #{graph_encoder_forward.6} parent=11 // pred_check_branch
          %234 = sbr.rel (%p232) target = $region28
        $region27: #{graph_encoder_forward.6} parent=11 // pred_region
          %s236 = ssub.s32 32, 32
          %237 = vsyncadd [#allocation5], %s236
          %s239 = sshll.u32 [#allocation4], 4
          %s240 = int_to_ptr.vmem [resolvable:$true] %s239
          %242 = dma.hbm_to_vmem [thread:$0]  %s5, 32, %s240, [#allocation5]
        $region28: #{graph_encoder_forward.6} parent=11 // pred_fallthru
          _
      $region12: #{graph_encoder_forward.6} parent=5 // pred_fallthru
        _
      %p243 = scmp.lt.s32.totalorder %s14, 4
      // Predicated region
      $region29: #{graph_encoder_forward.6} parent=5 // pred_check
        %p244 = pneg %p243
      $region30: #{graph_encoder_forward.6} parent=5 // pred_check_branch
        %246 = sbr.rel (%p244) target = $region32
      $region31: #{graph_encoder_forward.6} parent=5 // pred_region
        // Predicated region
        $region33: #{graph_encoder_forward.6} parent=31 // pred_check
          %p247 = pneg %p48
        $region34: #{graph_encoder_forward.6} parent=31 // pred_check_branch
          %249 = sbr.rel (%p247) target = $region36
        $region35: #{graph_encoder_forward.6} parent=31 // pred_region
          %p250 = scmp.lt.s32.totalorder %s21, 1
          %s251 = scalar_select %p250, %s21, 1
          %p252 = scmp.lt.s32.totalorder %s22, 1
          %s253 = scalar_select %p252, %s22, 1
          %s254 = smul.addr %s253, 2
          %s255 = smul.addr %s251, 4
          %s256 = sadd.s32 %s254, %s255
          %s257 = smul.addr %s256, 4
          %s258 = scalar_lea.vmem %s0, %s257
        $region36: #{graph_encoder_forward.6} parent=31 // pred_fallthru
          _
        // Predicated region
        $region37: #{graph_encoder_forward.6} parent=31 // pred_check
          %p259 = pneg %p82
        $region38: #{graph_encoder_forward.6} parent=31 // pred_check_branch
          %261 = sbr.rel (%p259) target = $region40
        $region39: #{graph_encoder_forward.6} parent=31 // pred_region
          %s262 = ssub.s32 %s22, 1
          %p263 = scmp.gt.s32.totalorder %s262, 0
          %s264 = scalar_select %p263, %s262, 0
          %p265 = scmp.lt.s32.totalorder %s21, 1
          %s266 = scalar_select %p265, %s21, 1
          %p267 = scmp.lt.s32.totalorder %s264, 1
          %s268 = scalar_select %p267, %s264, 1
          %s269 = smul.addr %s268, 2
          %s270 = smul.addr %s266, 4
          %s271 = sadd.s32 %s269, %s270
          %s272 = smul.addr %s271, 4
          %s273 = scalar_lea.vmem %s1, %s272
          %s274 = ssub.s32 %s22, 1
          %p275 = scmp.gt.s32.totalorder %s274, 0
          %s276 = scalar_select %p275, %s274, 0
        $region40: #{graph_encoder_forward.6} parent=31 // pred_fallthru
          _
      $region32: #{graph_encoder_forward.6} parent=5 // pred_fallthru
        _
      %p277 = scmp.le.s32.totalorder 1, %s14
      %p278 = scmp.lt.s32.totalorder %s14, 5
      %p279 = pnand %p277, %p278
      %p280 = pneg %p279
      // Predicated region
      $region41: #{graph_encoder_forward.6} parent=5 // pred_check
        _
      $region42: #{graph_encoder_forward.6} parent=5 // pred_check_branch
        %282 = sbr.rel (%p279) target = $region44
      $region43: #{graph_encoder_forward.6} parent=5 // pred_region
        %s283 = ssub.s32 %s14, 1
        // Predicated region
        $region45: #{graph_encoder_forward.6} parent=43 // pred_check
          %p284 = pneg %p151
        $region46: #{graph_encoder_forward.6} parent=43 // pred_check_branch
          %286 = sbr.rel (%p284) target = $region48
        $region47: #{graph_encoder_forward.6} parent=43 // pred_region
          %287 = dma.done [#allocation3], 32
        $region48: #{graph_encoder_forward.6} parent=43 // pred_fallthru
          _
        // Predicated region
        $region49: #{graph_encoder_forward.6} parent=43 // pred_check
          %p288 = pneg %p172
        $region50: #{graph_encoder_forward.6} parent=43 // pred_check_branch
          %290 = sbr.rel (%p288) target = $region52
        $region51: #{graph_encoder_forward.6} parent=43 // pred_region
          %291 = dma.done [#allocation5], 32
        $region52: #{graph_encoder_forward.6} parent=43 // pred_fallthru
          _
        %p292 = scmp.lt.s32.totalorder %s23, 1
        %s293 = scalar_select %p292, %s23, 1
        %p294 = scmp.lt.s32.totalorder %s24, 1
        %s295 = scalar_select %p294, %s24, 1
        %s296 = smul.addr %s295, 2
        %s297 = smul.addr %s293, 4
        %s298 = sadd.s32 %s296, %s297
        %s299 = smul.addr %s298, 4
        %s300 = scalar_lea.vmem %s0, %s299
        %p301 = pneg %p54
        %p302 = pneg %p51
        %s303 = ssub.s32 %s24, 1
        %p304 = scmp.gt.s32.totalorder %s303, 0
        %s305 = scalar_select %p304, %s303, 0
        %p306 = scmp.lt.s32.totalorder %s23, 1
        %s307 = scalar_select %p306, %s23, 1
        %p308 = scmp.lt.s32.totalorder %s305, 1
        %s309 = scalar_select %p308, %s305, 1
        %s310 = smul.addr %s309, 2
        %s311 = smul.addr %s307, 4
        %s312 = sadd.s32 %s310, %s311
        %s313 = smul.addr %s312, 4
        %s314 = scalar_lea.vmem %s1, %s313
        %p315 = pneg %p88
        %p316 = pneg %p85
        %p317 = pneg %p109
        %p318 = pneg %p106
        %p319 = pneg %p130
        %p320 = pneg %p127
        %p321 = pneg %p151
        %p322 = pneg %p148
        %p323 = pneg %p172
        %p324 = pneg %p169
        %p325 = pneg %p200
        %p326 = pneg %p197
        %p327 = scmp.lt.s32.totalorder %s23, 1
        %s328 = scalar_select %p327, %s23, 1
        %p329 = scmp.lt.s32.totalorder %s24, 1
        %s330 = scalar_select %p329, %s24, 1
        %s331 = smul.addr %s330, 2
        %s332 = smul.addr %s328, 4
        %s333 = sadd.s32 %s331, %s332
        %s334 = smul.addr %s333, 4
        %s335 = scalar_lea.vmem %s6, %s334
        %p336 = scmp.lt.s32.totalorder %s23, 1
        %s337 = scalar_select %p336, %s23, 1
        %p338 = scmp.lt.s32.totalorder %s24, 1
        %s339 = scalar_select %p338, %s24, 1
        %s340 = smul.addr %s339, 2
        %s341 = smul.addr %s337, 4
        %s342 = sadd.s32 %s340, %s341
        %s343 = smul.addr %s342, 4
        %s344 = scalar_lea.vmem %s0, %s343
        %s345 = ssub.s32 %s24, 1
        %p346 = scmp.gt.s32.totalorder %s345, 0
        %s347 = scalar_select %p346, %s345, 0
        %p348 = scmp.lt.s32.totalorder %s23, 1
        %s349 = scalar_select %p348, %s23, 1
        %p350 = scmp.lt.s32.totalorder %s347, 1
        %s351 = scalar_select %p350, %s347, 1
        %s352 = smul.addr %s351, 2
        %s353 = smul.addr %s349, 4
        %s354 = sadd.s32 %s352, %s353
        %s355 = smul.addr %s354, 4
        %s356 = scalar_lea.vmem %s1, %s355
        %s357 = ssub.s32 %s24, 1
        %p358 = scmp.gt.s32.totalorder %s357, 0
        %s359 = scalar_select %p358, %s357, 0
        %p360 = scmp.lt.s32.totalorder %s23, 1
        %s361 = scalar_select %p360, %s23, 1
        %p362 = scmp.lt.s32.totalorder %s24, 1
        %s363 = scalar_select %p362, %s24, 1
        %s364 = smul.addr %s363, 2
        %s365 = smul.addr %s361, 4
        %s366 = sadd.s32 %s364, %s365
        %s367 = smul.addr %s366, 4
        %s368 = scalar_lea.vmem %s6, %s367
        %v370 = vld [vmem:[%s344] sm:$0xff]
        %v371 = vld [vmem:[%s2] sm:$0xff]
        %v372 = vld [vmem:[%s2 + $0x8] sm:$0xff]
        %v373 = vld [vmem:[%s2 + $0x10] sm:$0xff]
        %v374 = vld [vmem:[%s2 + $0x18] sm:$0xff]
        %v375 = vld [vmem:[%s2 + $0x20] sm:$0xff]
        %v376 = vld [vmem:[%s2 + $0x28] sm:$0xff]
        %v377 = vld [vmem:[%s2 + $0x30] sm:$0xff]
        %v378 = vld [vmem:[%s2 + $0x38] sm:$0xff]
        %v379 = vld [vmem:[%s2 + $0x40] sm:$0xff]
        %v380 = vld [vmem:[%s2 + $0x48] sm:$0xff]
        %v381 = vld [vmem:[%s2 + $0x50] sm:$0xff]
        %v382 = vld [vmem:[%s2 + $0x58] sm:$0xff]
        %v383 = vld [vmem:[%s2 + $0x60] sm:$0xff]
        %v384 = vld [vmem:[%s2 + $0x68] sm:$0xff]
        %v385 = vld [vmem:[%s2 + $0x70] sm:$0xff]
        %v386 = vld [vmem:[%s2 + $0x78] sm:$0xff]
        %v387 = vld [vmem:[%s2 + $0x80] sm:$0xff]
        %v388 = vld [vmem:[%s2 + $0x88] sm:$0xff]
        %v389 = vld [vmem:[%s2 + $0x90] sm:$0xff]
        %v390 = vld [vmem:[%s2 + $0x98] sm:$0xff]
        %v391 = vld [vmem:[%s2 + $0xa0] sm:$0xff]
        %v392 = vld [vmem:[%s2 + $0xa8] sm:$0xff]
        %v393 = vld [vmem:[%s2 + $0xb0] sm:$0xff]
        %v394 = vld [vmem:[%s2 + $0xb8] sm:$0xff]
        %v395 = vld [vmem:[%s2 + $0xc0] sm:$0xff]
        %v396 = vld [vmem:[%s2 + $0xc8] sm:$0xff]
        %v397 = vld [vmem:[%s2 + $0xd0] sm:$0xff]
        %v398 = vld [vmem:[%s2 + $0xd8] sm:$0xff]
        %v399 = vld [vmem:[%s2 + $0xe0] sm:$0xff]
        %v400 = vld [vmem:[%s2 + $0xe8] sm:$0xff]
        %v401 = vld [vmem:[%s2 + $0xf0] sm:$0xff]
        %v402 = vld [vmem:[%s2 + $0xf8] sm:$0xff]
        %v404 = vrot.slane %v370, 4
        %v406 = vunpack.c.l.bf16 %v404
        %v407 = vrot.slane %v406, 7
        %v408 = vld [vmem:[%s356 + $0x4] sm:$0x8]
        %v409 = vunpack.c.l.bf16 %v408
        %p410 = scmp.gt.s32.totalorder %s24, 0
        %s411 = scalar_select %p410, 1, 0
        %v412 = vstv %s411
        %vm413 = vcmp.eq.s32.totalorder %v412, 1
        %v414 = vsel %vm413, %v409, 0.0
        %v415 = vlaneseq
        %v416 = vshrl.u32 %v415, 7
        %vm417 = vcmp.eq.s32.totalorder %v416, 0
        %v418 = vlaneseq
        %v419 = vshrl.u32 %v418, 7
        %v420 = vsub.s32 7, %v419
        %v421 = vrot.slane %v414, %v420
        %v422 = vsel %vm417, %v421, %v407
        %v423 = vpack.c.bf16 %v422, %v422
        %v424 = vld [vmem:[%s3] sm:$0xff]
        %v425 = vld [vmem:[%s3 + $0x8] sm:$0xff]
        %v426 = vld [vmem:[%s3 + $0x10] sm:$0xff]
        %v427 = vld [vmem:[%s3 + $0x18] sm:$0xff]
        %v428 = vld [vmem:[%s3 + $0x20] sm:$0xff]
        %v429 = vld [vmem:[%s3 + $0x28] sm:$0xff]
        %v430 = vld [vmem:[%s3 + $0x30] sm:$0xff]
        %v431 = vld [vmem:[%s3 + $0x38] sm:$0xff]
        %v432 = vld [vmem:[%s3 + $0x40] sm:$0xff]
        %v433 = vld [vmem:[%s3 + $0x48] sm:$0xff]
        %v434 = vld [vmem:[%s3 + $0x50] sm:$0xff]
        %v435 = vld [vmem:[%s3 + $0x58] sm:$0xff]
        %v436 = vld [vmem:[%s3 + $0x60] sm:$0xff]
        %v437 = vld [vmem:[%s3 + $0x68] sm:$0xff]
        %v438 = vld [vmem:[%s3 + $0x70] sm:$0xff]
        %v439 = vld [vmem:[%s3 + $0x78] sm:$0xff]
        %v456 = vunpack.c.l.b16 %v424
        %v457 = vunpack.c.h.b16 %v424
        %v458 = vunpack.c.l.b16 %v425
        %v459 = vunpack.c.h.b16 %v425
        %v460 = vunpack.c.l.b16 %v426
        %v461 = vunpack.c.h.b16 %v426
        %v462 = vunpack.c.l.b16 %v427
        %v463 = vunpack.c.h.b16 %v427
        %v464 = vunpack.c.l.b16 %v428
        %v465 = vunpack.c.h.b16 %v428
        %v466 = vunpack.c.l.b16 %v429
        %v467 = vunpack.c.h.b16 %v429
        %v468 = vunpack.c.l.b16 %v430
        %v469 = vunpack.c.h.b16 %v430
        %v470 = vunpack.c.l.b16 %v431
        %v471 = vunpack.c.h.b16 %v431
        %v472 = vunpack.c.l.b16 %v432
        %v473 = vunpack.c.h.b16 %v432
        %v474 = vunpack.c.l.b16 %v433
        %v475 = vunpack.c.h.b16 %v433
        %v476 = vunpack.c.l.b16 %v434
        %v477 = vunpack.c.h.b16 %v434
        %v478 = vunpack.c.l.b16 %v435
        %v479 = vunpack.c.h.b16 %v435
        %v480 = vunpack.c.l.b16 %v436
        %v481 = vunpack.c.h.b16 %v436
        %v482 = vunpack.c.l.b16 %v437
        %v483 = vunpack.c.h.b16 %v437
        %v484 = vunpack.c.l.b16 %v438
        %v485 = vunpack.c.h.b16 %v438
        %v486 = vunpack.c.l.b16 %v439
        %v487 = vunpack.c.h.b16 %v439
        %v488 = vpack.c.b16 %v458, %v456
        %v489 = vpack.c.b16 %v459, %v457
        %v490 = vpack.c.b16 %v462, %v460
        %v491 = vpack.c.b16 %v463, %v461
        %v492 = vpack.c.b16 %v466, %v464
        %v493 = vpack.c.b16 %v467, %v465
        %v494 = vpack.c.b16 %v470, %v468
        %v495 = vpack.c.b16 %v471, %v469
        %v496 = vpack.c.b16 %v474, %v472
        %v497 = vpack.c.b16 %v475, %v473
        %v498 = vpack.c.b16 %v478, %v476
        %v499 = vpack.c.b16 %v479, %v477
        %v500 = vpack.c.b16 %v482, %v480
        %v501 = vpack.c.b16 %v483, %v481
        %v502 = vpack.c.b16 %v486, %v484
        %v503 = vpack.c.b16 %v487, %v485
        %520 = vmatprep.subr.bf16.mxu0 %v489
        %521 = vmatpush1.bf16.msra.mxu0 %v488
        %522 = vmatprep.subr.bf16.mxu0 %v491
        %523 = vmatpush1.bf16.msra.mxu0 %v490
        %524 = vmatprep.subr.bf16.mxu0 %v493
        %525 = vmatpush1.bf16.msra.mxu0 %v492
        %526 = vmatprep.subr.bf16.mxu0 %v495
        %527 = vmatpush1.bf16.msra.mxu0 %v494
        %528 = vmatprep.subr.bf16.mxu0 %v497
        %529 = vmatpush1.bf16.msra.mxu0 %v496
        %530 = vmatprep.subr.bf16.mxu0 %v499
        %531 = vmatpush1.bf16.msra.mxu0 %v498
        %532 = vmatprep.subr.bf16.mxu0 %v501
        %533 = vmatpush1.bf16.msra.mxu0 %v500
        %534 = vmatprep.subr.bf16.mxu0 %v503
        %535 = vmatpush1.bf16.msra.mxu0 %v502
        %536 = vmatprep.subr.bf16.mxu0 0
        %537 = vmatpush1.bf16.msra.mxu0 0
        %538 = vmatprep.subr.bf16.mxu0 0
        %539 = vmatpush1.bf16.msra.mxu0 0
        %540 = vmatprep.subr.bf16.mxu0 0
        %541 = vmatpush1.bf16.msra.mxu0 0
        %542 = vmatprep.subr.bf16.mxu0 0
        %543 = vmatpush1.bf16.msra.mxu0 0
        %544 = vmatprep.subr.bf16.mxu0 0
        %545 = vmatpush1.bf16.msra.mxu0 0
        %546 = vmatprep.subr.bf16.mxu0 0
        %547 = vmatpush1.bf16.msra.mxu0 0
        %548 = vmatprep.subr.bf16.mxu0 0
        %549 = vmatpush1.bf16.msra.mxu0 0
        %550 = vmatprep.subr.bf16.mxu0 0
        %551 = vmatpush1.bf16.msra.mxu0 0
        %552 = vmatprep.mubr.bf16.mxu0 0
        %553 = vmatmul.mubr.bf16.gmra.mrb[0].mxu0 %v423
        %v554 = vpop.f32.mrb[0].mxu0
        %v555 = vadd.f32 0.0, %v554
        %v556 = vpop.f32.mrb[0].mxu0
        %v557 = vadd.f32 0.0, %v556
        %v558 = vpop.f32.mrb[0].mxu0
        %v559 = vpop.f32.mrb[0].mxu0
        %560 = vdwg.mxu0
        %v561 = vunpack.c.l.b16 %v370
        %v562 = vunpack.c.h.b16 %v370
        %v563 = vpack.c.b16 %v561, %v561
        %v564 = vpack.c.b16 %v562, %v562
        %v599 = vunpack.c.l.b16 %v371
        %v600 = vunpack.c.h.b16 %v371
        %v601 = vunpack.c.l.b16 %v372
        %v602 = vunpack.c.h.b16 %v372
        %v603 = vunpack.c.l.b16 %v373
        %v604 = vunpack.c.h.b16 %v373
        %v605 = vunpack.c.l.b16 %v374
        %v606 = vunpack.c.h.b16 %v374
        %v607 = vunpack.c.l.b16 %v375
        %v608 = vunpack.c.h.b16 %v375
        %v609 = vunpack.c.l.b16 %v376
        %v610 = vunpack.c.h.b16 %v376
        %v611 = vunpack.c.l.b16 %v377
        %v612 = vunpack.c.h.b16 %v377
        %v613 = vunpack.c.l.b16 %v378
        %v614 = vunpack.c.h.b16 %v378
        %v615 = vunpack.c.l.b16 %v379
        %v616 = vunpack.c.h.b16 %v379
        %v617 = vunpack.c.l.b16 %v380
        %v618 = vunpack.c.h.b16 %v380
        %v619 = vunpack.c.l.b16 %v381
        %v620 = vunpack.c.h.b16 %v381
        %v621 = vunpack.c.l.b16 %v382
        %v622 = vunpack.c.h.b16 %v382
        %v623 = vunpack.c.l.b16 %v383
        %v624 = vunpack.c.h.b16 %v383
        %v625 = vunpack.c.l.b16 %v384
        %v626 = vunpack.c.h.b16 %v384
        %v627 = vunpack.c.l.b16 %v385
        %v628 = vunpack.c.h.b16 %v385
        %v629 = vunpack.c.l.b16 %v386
        %v630 = vunpack.c.h.b16 %v386
        %v631 = vunpack.c.l.b16 %v387
        %v632 = vunpack.c.h.b16 %v387
        %v633 = vunpack.c.l.b16 %v388
        %v634 = vunpack.c.h.b16 %v388
        %v635 = vunpack.c.l.b16 %v389
        %v636 = vunpack.c.h.b16 %v389
        %v637 = vunpack.c.l.b16 %v390
        %v638 = vunpack.c.h.b16 %v390
        %v639 = vunpack.c.l.b16 %v391
        %v640 = vunpack.c.h.b16 %v391
        %v641 = vunpack.c.l.b16 %v392
        %v642 = vunpack.c.h.b16 %v392
        %v643 = vunpack.c.l.b16 %v393
        %v644 = vunpack.c.h.b16 %v393
        %v645 = vunpack.c.l.b16 %v394
        %v646 = vunpack.c.h.b16 %v394
        %v647 = vunpack.c.l.b16 %v395
        %v648 = vunpack.c.h.b16 %v395
        %v649 = vunpack.c.l.b16 %v396
        %v650 = vunpack.c.h.b16 %v396
        %v651 = vunpack.c.l.b16 %v397
        %v652 = vunpack.c.h.b16 %v397
        %v653 = vunpack.c.l.b16 %v398
        %v654 = vunpack.c.h.b16 %v398
        %v655 = vunpack.c.l.b16 %v399
        %v656 = vunpack.c.h.b16 %v399
        %v657 = vunpack.c.l.b16 %v400
        %v658 = vunpack.c.h.b16 %v400
        %v659 = vunpack.c.l.b16 %v401
        %v660 = vunpack.c.h.b16 %v401
        %v661 = vunpack.c.l.b16 %v402
        %v662 = vunpack.c.h.b16 %v402
        %v663 = vpack.c.b16 %v601, %v599
        %v664 = vpack.c.b16 %v602, %v600
        %v665 = vpack.c.b16 %v605, %v603
        %v666 = vpack.c.b16 %v606, %v604
        %v667 = vpack.c.b16 %v609, %v607
        %v668 = vpack.c.b16 %v610, %v608
        %v669 = vpack.c.b16 %v613, %v611
        %v670 = vpack.c.b16 %v614, %v612
        %v671 = vpack.c.b16 %v617, %v615
        %v672 = vpack.c.b16 %v618, %v616
        %v673 = vpack.c.b16 %v621, %v619
        %v674 = vpack.c.b16 %v622, %v620
        %v675 = vpack.c.b16 %v625, %v623
        %v676 = vpack.c.b16 %v626, %v624
        %v677 = vpack.c.b16 %v629, %v627
        %v678 = vpack.c.b16 %v630, %v628
        %v679 = vpack.c.b16 %v633, %v631
        %v680 = vpack.c.b16 %v634, %v632
        %v681 = vpack.c.b16 %v637, %v635
        %v682 = vpack.c.b16 %v638, %v636
        %v683 = vpack.c.b16 %v641, %v639
        %v684 = vpack.c.b16 %v642, %v640
        %v685 = vpack.c.b16 %v645, %v643
        %v686 = vpack.c.b16 %v646, %v644
        %v687 = vpack.c.b16 %v649, %v647
        %v688 = vpack.c.b16 %v650, %v648
        %v689 = vpack.c.b16 %v653, %v651
        %v690 = vpack.c.b16 %v654, %v652
        %v691 = vpack.c.b16 %v657, %v655
        %v692 = vpack.c.b16 %v658, %v656
        %v693 = vpack.c.b16 %v661, %v659
        %v694 = vpack.c.b16 %v662, %v660
        %727 = vmatprep.subr.bf16.mxu0 %v664
        %728 = vmatpush1.bf16.msra.mxu0 %v663
        %729 = vmatprep.subr.bf16.mxu0 %v666
        %730 = vmatpush1.bf16.msra.mxu0 %v665
        %731 = vmatprep.subr.bf16.mxu0 %v668
        %732 = vmatpush1.bf16.msra.mxu0 %v667
        %733 = vmatprep.subr.bf16.mxu0 %v670
        %734 = vmatpush1.bf16.msra.mxu0 %v669
        %735 = vmatprep.subr.bf16.mxu0 %v672
        %736 = vmatpush1.bf16.msra.mxu0 %v671
        %737 = vmatprep.subr.bf16.mxu0 %v674
        %738 = vmatpush1.bf16.msra.mxu0 %v673
        %739 = vmatprep.subr.bf16.mxu0 %v676
        %740 = vmatpush1.bf16.msra.mxu0 %v675
        %741 = vmatprep.subr.bf16.mxu0 %v678
        %742 = vmatpush1.bf16.msra.mxu0 %v677
        %743 = vmatprep.subr.bf16.mxu0 %v680
        %744 = vmatpush1.bf16.msra.mxu0 %v679
        %745 = vmatprep.subr.bf16.mxu0 %v682
        %746 = vmatpush1.bf16.msra.mxu0 %v681
        %747 = vmatprep.subr.bf16.mxu0 %v684
        %748 = vmatpush1.bf16.msra.mxu0 %v683
        %749 = vmatprep.subr.bf16.mxu0 %v686
        %750 = vmatpush1.bf16.msra.mxu0 %v685
        %751 = vmatprep.subr.bf16.mxu0 %v688
        %752 = vmatpush1.bf16.msra.mxu0 %v687
        %753 = vmatprep.subr.bf16.mxu0 %v690
        %754 = vmatpush1.bf16.msra.mxu0 %v689
        %755 = vmatprep.subr.bf16.mxu0 %v692
        %756 = vmatpush1.bf16.msra.mxu0 %v691
        %757 = vmatprep.subr.bf16.mxu0 %v694
        %758 = vmatpush1.bf16.msra.mxu0 %v693
        %759 = vmatprep.mubr.bf16.mxu0 %v564
        %760 = vmatmul.mubr.bf16.gmra.mrb[0].mxu0 %v563
        %v761 = vpop.f32.mrb[0].mxu0
        %v762 = vadd.f32 %v555, %v761
        %v763 = vpop.f32.mrb[0].mxu0
        %v764 = vadd.f32 %v557, %v763
        %v765 = vpop.f32.mrb[0].mxu0
        %v766 = vpop.f32.mrb[0].mxu0
        %767 = vdwg.mxu0
        %v768 = vld [vmem:[#allocation2] sm:$0x3]
        %v770 = vlaneseq
        %v771 = vshrl.u32 %v770, 7
        %v772 = vsub.s32 0, %v771
        %v773 = vrot.slane %v768, %v772
        %v774 = vlaneseq
        %v775 = vshrl.u32 %v774, 7
        %v776 = vsub.s32 1, %v775
        %v777 = vrot.slane %v768, %v776
        %v780 = vmul.f32 %v762, %v773
        %v781 = vmul.f32 %v764, %v777
        %v782 = vld [vmem:[#allocation4] sm:$0x3]
        %v784 = vlaneseq
        %v785 = vshrl.u32 %v784, 7
        %v786 = vsub.s32 0, %v785
        %v787 = vrot.slane %v782, %v786
        %v788 = vlaneseq
        %v789 = vshrl.u32 %v788, 7
        %v790 = vsub.s32 1, %v789
        %v791 = vrot.slane %v782, %v790
        %v794 = vadd.f32 %v780, %v787
        %v795 = vadd.f32 %v781, %v791
        %s796 = smul.u32 %s24, 8
        %v797 = vstv %s796
        %v798 = vadd.s32 %v797, %v416
        %vm799 = vcmp.lt.s32.totalorder %v798, 4
        %v800 = vsel %vm799, 1, 0
        %vm801 = vcmp.eq.s32.totalorder %v800, 1
        %v802 = vsel %vm801, %v794, 0.0
        %v803 = vsel %vm801, %v795, 0.0
        %v804 = vpack.c.bf16 %v802, %v802
        %v805 = vpack.c.bf16 %v803, %v803
        %v808 = vunpack.c.l.b16 %v804
        %v809 = vunpack.c.l.b16 %v805
        %v810 = vpack.c.b16 %v809, %v808
        %812 = vst [vmem:[%s368] sm:$0xff] %v810
        %p813 = scmp.lt.s32.totalorder %s23, 1
        %s814 = scalar_select %p813, %s23, 1
        %p815 = scmp.lt.s32.totalorder %s24, 1
        %s816 = scalar_select %p815, %s24, 1
        %s817 = smul.addr %s816, 2
        %s818 = smul.addr %s814, 4
        %s819 = sadd.s32 %s817, %s818
        %s820 = smul.addr %s819, 4
        %s821 = scalar_lea.vmem %s6, %s820
        // Predicated region
        $region53: #{graph_encoder_forward.6} parent=43 // pred_check
          %p822 = pneg %p197
        $region54: #{graph_encoder_forward.6} parent=43 // pred_check_branch
          %824 = sbr.rel (%p822) target = $region56
        $region55: #{graph_encoder_forward.6} parent=43 // pred_region
          _
        $region56: #{graph_encoder_forward.6} parent=43 // pred_fallthru
          _
      $region44: #{graph_encoder_forward.6} parent=5 // pred_fallthru
        _
      %p825 = scmp.le.s32.totalorder 2, %s14
      // Predicated region
      $region57: #{graph_encoder_forward.6} parent=5 // pred_check
        %p826 = pneg %p825
      $region58: #{graph_encoder_forward.6} parent=5 // pred_check_branch
        %828 = sbr.rel (%p826) target = $region60
      $region59: #{graph_encoder_forward.6} parent=5 // pred_region
        %s829 = ssub.s32 %s14, 2
        // Predicated region
        $region61: #{graph_encoder_forward.6} parent=59 // pred_check
          %p830 = pneg %p203
        $region62: #{graph_encoder_forward.6} parent=59 // pred_check_branch
          %832 = sbr.rel (%p830) target = $region64
        $region63: #{graph_encoder_forward.6} parent=59 // pred_region
          %p833 = scmp.lt.s32.totalorder %s25, 1
          %s834 = scalar_select %p833, %s25, 1
          %p835 = scmp.lt.s32.totalorder %s26, 1
          %s836 = scalar_select %p835, %s26, 1
          %s837 = smul.addr %s836, 2
          %s838 = smul.addr %s834, 4
          %s839 = sadd.s32 %s837, %s838
          %s840 = smul.addr %s839, 4
          %s841 = scalar_lea.vmem %s6, %s840
        $region64: #{graph_encoder_forward.6} parent=59 // pred_fallthru
          _
      $region60: #{graph_encoder_forward.6} parent=5 // pred_fallthru
        _
    $region6: #{graph_encoder_forward.6} parent=1 // loop_footer
      %s18 = sadd.s32 1, %s14
    $region7: #{graph_encoder_forward.6} parent=1 // loop_footer_branch
      %13 = sbr.rel target = $region3
    $region8: #{graph_encoder_forward.6} parent=1 // loop_exit
      _
    %842 = vsyncpa [#allocation3], 1
    %s843 = scalar_lea.sflag [#allocation3], 1
    %844 = vsyncpa %s843, 1
    %845 = vsyncpa [#allocation5], 1

// kernel: graph_encoder_forward.8
$region0: #{graph_encoder_forward.8}
  #allocation0 [shape = 'u32[]', space=smem, size = 0x4, offset = 0x4, fixed_abs, tag = 'smem constant byte address 0x4 - core index']
  #allocation1 [shape = 'u32[144,128]{1,0:T(1,128)}', space=vmem, size = 0x12000, scoped, tag = 'internal scratch']
  %s0 = inlined_call_operand.vmem [shape: bf16[2,8,512], index: 0, kind: input, shape index: {}]
  %s1 = inlined_call_operand.vmem [shape: f32[2,8,512], index: 1, kind: output, shape index: {}]
  %s2 = sld [smem:[#allocation0]]
  $region45: #{graph_encoder_forward.8} parent=0
    _
  %s4 = ssub.s32 1, %s2
  %s5 = scalar_select 0, %s4, %s2
  loop: start=0, step=1, limit=4
  $region2: #{graph_encoder_forward.8} parent=0 // loop_pre_header
    _
  $region3: #{graph_encoder_forward.8} parent=0 // loop_header
    %s7 = sphi 0, %s11
    %p8 = scmp.ge.s32.totalorder %s7, 4
    %s14 = sphi 0, %s26
    %s15 = sphi 0, %s22
    %s16 = sphi 0, %s14
    %s17 = sphi 0, %s15
    %s18 = sphi 0, %s16
    %s19 = sphi 0, %s17
    %s31 = sphi 0, %s33
    %s34 = sphi 0, %s31
    %s35 = sphi 0, %s34
    %s51 = sphi 0, %s35
    %s57 = sphi 0, %s59
    %s60 = sphi 0, %s57
    %s61 = sphi 0, %s60
    %s77 = sphi 0, %s61
  $region4: #{graph_encoder_forward.8} parent=0 // loop_header_branch
    %10 = sbr.rel (%p8) target = $region8
  $region5: #{graph_encoder_forward.8} parent=0 // loop_body
    %s12 = ssub.s32 %s7, 1
    %s13 = ssub.s32 %s7, 2
    %s20 = sadd.s32 1, %s15
    %p21 = scmp.ge.s32.totalorder %s20, 1
    %s22 = scalar_select %p21, 0, %s20
    %s23 = sadd.s32 1, %s14
    %s24 = scalar_select %p21, %s23, %s14
    %p25 = scmp.ge.s32.totalorder %s24, 2
    %s26 = scalar_select %p25, 0, %s24
    %s27 = ssub.s32 %s14, %s26
    %s28 = ssub.s32 %s15, %s22
    %s29 = sor.u32 %s27, %s28
    %p30 = scmp.eq.s32.totalorder %s29, 0
    %s32 = sadd.s32 %s31, 1
    %s33 = scalar_select %p30, %s31, %s32
    %p36 = pneg %p30
    %p37 = scmp.eq.s32.totalorder %s7, 1
    %p38 = por %p36, %p37
    %p39 = scmp.ne.s32.totalorder %s31, %s34
    %p40 = scmp.eq.s32.totalorder %s7, 0
    %p41 = por %p39, %p40
    %p42 = scmp.ne.s32.totalorder %s31, %s34
    %p43 = scmp.eq.s32.totalorder %s12, 1
    %p44 = por %p42, %p43
    %p45 = scmp.ne.s32.totalorder %s34, %s35
    %p46 = scmp.eq.s32.totalorder %s12, 0
    %p47 = por %p45, %p46
    %p48 = scmp.ne.s32.totalorder %s34, %s35
    %p49 = scmp.eq.s32.totalorder %s13, 1
    %p50 = por %p48, %p49
    %p52 = scmp.ne.s32.totalorder %s35, %s51
    %p53 = scmp.eq.s32.totalorder %s13, 0
    %p54 = por %p52, %p53
    %s55 = ssub.s32 %s14, %s26
    %p56 = scmp.eq.s32.totalorder %s55, 0
    %s58 = sadd.s32 %s57, 1
    %s59 = scalar_select %p56, %s57, %s58
    %p62 = pneg %p56
    %p63 = scmp.eq.s32.totalorder %s7, 1
    %p64 = por %p62, %p63
    %p65 = scmp.ne.s32.totalorder %s57, %s60
    %p66 = scmp.eq.s32.totalorder %s7, 0
    %p67 = por %p65, %p66
    %p68 = scmp.ne.s32.totalorder %s57, %s60
    %p69 = scmp.eq.s32.totalorder %s12, 1
    %p70 = por %p68, %p69
    %p71 = scmp.ne.s32.totalorder %s60, %s61
    %p72 = scmp.eq.s32.totalorder %s12, 0
    %p73 = por %p71, %p72
    %p74 = scmp.ne.s32.totalorder %s60, %s61
    %p75 = scmp.eq.s32.totalorder %s13, 1
    %p76 = por %p74, %p75
    %p78 = scmp.ne.s32.totalorder %s61, %s77
    %p79 = scmp.eq.s32.totalorder %s13, 0
    %p80 = por %p78, %p79
    %p81 = scmp.le.s32.totalorder 1, %s7
    %p82 = scmp.lt.s32.totalorder %s7, 3
    %p83 = pnand %p81, %p82
    %p84 = pneg %p83
    // Predicated region
    $region9: #{graph_encoder_forward.8} parent=5 // pred_check
      _
    $region10: #{graph_encoder_forward.8} parent=5 // pred_check_branch
      %86 = sbr.rel (%p83) target = $region12
    $region11: #{graph_encoder_forward.8} parent=5 // pred_region
      %s87 = ssub.s32 %s7, 1
    $region12: #{graph_encoder_forward.8} parent=5 // pred_fallthru
      _
    %p88 = scmp.lt.s32.totalorder %s7, 2
    // Predicated region
    $region13: #{graph_encoder_forward.8} parent=5 // pred_check
      %p89 = pneg %p88
    $region14: #{graph_encoder_forward.8} parent=5 // pred_check_branch
      %91 = sbr.rel (%p89) target = $region16
    $region15: #{graph_encoder_forward.8} parent=5 // pred_region
      // Predicated region
      $region17: #{graph_encoder_forward.8} parent=15 // pred_check
        %p92 = pneg %p41
      $region18: #{graph_encoder_forward.8} parent=15 // pred_check_branch
        %94 = sbr.rel (%p92) target = $region20
      $region19: #{graph_encoder_forward.8} parent=15 // pred_region
        %p95 = scmp.lt.s32.totalorder %s14, 1
        %s96 = scalar_select %p95, %s14, 1
        %p97 = scmp.lt.s32.totalorder %s15, 0
        %s98 = scalar_select %p97, %s15, 0
        %s99 = smul.addr %s98, 4
        %s100 = smul.addr %s96, 4
        %s101 = sadd.s32 %s99, %s100
        %s102 = smul.addr %s101, 4
        %s103 = scalar_lea.vmem %s0, %s102
      $region20: #{graph_encoder_forward.8} parent=15 // pred_fallthru
        _
    $region16: #{graph_encoder_forward.8} parent=5 // pred_fallthru
      _
    %p104 = scmp.le.s32.totalorder 1, %s7
    %p105 = scmp.lt.s32.totalorder %s7, 3
    %p106 = pnand %p104, %p105
    %p107 = pneg %p106
    // Predicated region
    $region21: #{graph_encoder_forward.8} parent=5 // pred_check
      _
    $region22: #{graph_encoder_forward.8} parent=5 // pred_check_branch
      %109 = sbr.rel (%p106) target = $region24
    $region23: #{graph_encoder_forward.8} parent=5 // pred_region
      %s110 = ssub.s32 %s7, 1
      %p111 = scmp.lt.s32.totalorder %s16, 1
      %s112 = scalar_select %p111, %s16, 1
      %p113 = scmp.lt.s32.totalorder %s17, 0
      %s114 = scalar_select %p113, %s17, 0
      %s115 = smul.addr %s114, 4
      %s116 = smul.addr %s112, 4
      %s117 = sadd.s32 %s115, %s116
      %s118 = smul.addr %s117, 4
      %s119 = scalar_lea.vmem %s0, %s118
      %p120 = pneg %p47
      %p121 = pneg %p44
      %p122 = pneg %p73
      %p123 = pneg %p70
      %p124 = scmp.lt.s32.totalorder %s16, 1
      %s125 = scalar_select %p124, %s16, 1
      %s126 = smul.addr %s125, 4
      %s127 = smul.addr %s126, 8
      %s128 = scalar_lea.vmem %s1, %s127
      %p129 = scmp.lt.s32.totalorder %s16, 1
      %s130 = scalar_select %p129, %s16, 1
      %p131 = scmp.lt.s32.totalorder %s17, 0
      %s132 = scalar_select %p131, %s17, 0
      %s133 = smul.addr %s132, 4
      %s134 = smul.addr %s130, 4
      %s135 = sadd.s32 %s133, %s134
      %s136 = smul.addr %s135, 4
      %s137 = scalar_lea.vmem %s0, %s136
      %p138 = scmp.lt.s32.totalorder %s16, 1
      %s139 = scalar_select %p138, %s16, 1
      %s140 = smul.addr %s139, 4
      %s141 = smul.addr %s140, 8
      %s142 = scalar_lea.vmem %s1, %s141
      %p145 = scmp.eq.s32.totalorder %s17, 0
      // Predicated region
      $region25: #{graph_encoder_forward.8} parent=23 // pred_check
        %p146 = pneg %p145
      $region26: #{graph_encoder_forward.8} parent=23 // pred_check_branch
        %148 = sbr.rel (%p146) target = $region28
      $region27: #{graph_encoder_forward.8} parent=23 // pred_region
        %149 = vst [vmem:[%s142] sm:$0xff] 0.0
        %150 = vst [vmem:[%s142 + $0x8] sm:$0xff] 0.0
        %151 = vst [vmem:[%s142 + $0x10] sm:$0xff] 0.0
        %152 = vst [vmem:[%s142 + $0x18] sm:$0xff] 0.0
      $region28: #{graph_encoder_forward.8} parent=23 // pred_fallthru
        _
      %v153 = vld [vmem:[%s142] sm:$0xff]
      %v154 = vld [vmem:[%s142 + $0x8] sm:$0xff]
      %v155 = vld [vmem:[%s142 + $0x10] sm:$0xff]
      %v156 = vld [vmem:[%s142 + $0x18] sm:$0xff]
      %v157 = vld [vmem:[%s137] sm:$0xff]
      %v158 = vld [vmem:[%s137 + $0x8] sm:$0xff]
      %v161 = vunpack.c.l.b16 %v157
      %v162 = vunpack.c.h.b16 %v157
      %v163 = vunpack.c.l.b16 %v158
      %v164 = vunpack.c.h.b16 %v158
      %v165 = vpack.c.b16 %v161, %v161
      %v166 = vpack.c.b16 %v162, %v162
      %v167 = vpack.c.b16 %v163, %v163
      %v168 = vpack.c.b16 %v164, %v164
      %vm169 = vcmask 64512
      %v171 = vsel %vm169, 1065369472, 0
      %vm173 = vcmask 1043456
      %v175 = vsel %vm173, %v165, 0
      %v178 = vsel %vm173, %v166, 0
      %v181 = vsel %vm173, %v167, 0
      %v184 = vsel %vm173, %v168, 0
      %186 = vmatprep.subr.bf16.mxu0 %v178
      %187 = vmatpush1.bf16.msra.mxu0 %v175
      %188 = vmatprep.subr.bf16.mxu0 0
      %189 = vmatpush1.bf16.msra.mxu0 0
      %190 = vmatprep.subr.bf16.mxu0 0
      %191 = vmatpush1.bf16.msra.mxu0 0
      %192 = vmatprep.subr.bf16.mxu0 0
      %193 = vmatpush1.bf16.msra.mxu0 0
      %194 = vmatprep.subr.bf16.mxu0 0
      %195 = vmatpush1.bf16.msra.mxu0 0
      %196 = vmatprep.subr.bf16.mxu0 0
      %197 = vmatpush1.bf16.msra.mxu0 0
      %198 = vmatprep.subr.bf16.mxu0 0
      %199 = vmatpush1.bf16.msra.mxu0 0
      %200 = vmatprep.subr.bf16.mxu0 0
      %201 = vmatpush1.bf16.msra.mxu0 0
      %202 = vmatprep.subr.bf16.mxu0 0
      %203 = vmatpush1.bf16.msra.mxu0 0
      %204 = vmatprep.subr.bf16.mxu0 0
      %205 = vmatpush1.bf16.msra.mxu0 0
      %206 = vmatprep.subr.bf16.mxu0 0
      %207 = vmatpush1.bf16.msra.mxu0 0
      %208 = vmatprep.subr.bf16.mxu0 0
      %209 = vmatpush1.bf16.msra.mxu0 0
      %210 = vmatprep.subr.bf16.mxu0 0
      %211 = vmatpush1.bf16.msra.mxu0 0
      %212 = vmatprep.subr.bf16.mxu0 0
      %213 = vmatpush1.bf16.msra.mxu0 0
      %214 = vmatprep.subr.bf16.mxu0 0
      %215 = vmatpush1.bf16.msra.mxu0 0
      %216 = vmatprep.subr.bf16.mxu0 0
      %217 = vmatpush1.bf16.msra.mxu0 0
      %218 = vmatprep.mubr.bf16.mxu0 0
      %219 = vmatmul.mubr.bf16.gmra.mrb[0].mxu0 %v171
      %v220 = vpop.f32.mrb[0].mxu0
      %v221 = vadd.f32 0.0, %v220
      %v222 = vpop.f32.mrb[0].mxu0
      %v223 = vadd.f32 0.0, %v222
      %v224 = vpop.f32.mrb[0].mxu0
      %v225 = vpop.f32.mrb[0].mxu0
      %226 = vdwg.mxu0
      %227 = vmatprep.subr.bf16.mxu0 %v184
      %228 = vmatpush1.bf16.msra.mxu0 %v181
      %229 = vmatprep.subr.bf16.mxu0 0
      %230 = vmatpush1.bf16.msra.mxu0 0
      %231 = vmatprep.subr.bf16.mxu0 0
      %232 = vmatpush1.bf16.msra.mxu0 0
      %233 = vmatprep.subr.bf16.mxu0 0
      %234 = vmatpush1.bf16.msra.mxu0 0
      %235 = vmatprep.subr.bf16.mxu0 0
      %236 = vmatpush1.bf16.msra.mxu0 0
      %237 = vmatprep.subr.bf16.mxu0 0
      %238 = vmatpush1.bf16.msra.mxu0 0
      %239 = vmatprep.subr.bf16.mxu0 0
      %240 = vmatpush1.bf16.msra.mxu0 0
      %241 = vmatprep.subr.bf16.mxu0 0
      %242 = vmatpush1.bf16.msra.mxu0 0
      %243 = vmatprep.subr.bf16.mxu0 0
      %244 = vmatpush1.bf16.msra.mxu0 0
      %245 = vmatprep.subr.bf16.mxu0 0
      %246 = vmatpush1.bf16.msra.mxu0 0
      %247 = vmatprep.subr.bf16.mxu0 0
      %248 = vmatpush1.bf16.msra.mxu0 0
      %249 = vmatprep.subr.bf16.mxu0 0
      %250 = vmatpush1.bf16.msra.mxu0 0
      %251 = vmatprep.subr.bf16.mxu0 0
      %252 = vmatpush1.bf16.msra.mxu0 0
      %253 = vmatprep.subr.bf16.mxu0 0
      %254 = vmatpush1.bf16.msra.mxu0 0
      %255 = vmatprep.subr.bf16.mxu0 0
      %256 = vmatpush1.bf16.msra.mxu0 0
      %257 = vmatprep.subr.bf16.mxu0 0
      %258 = vmatpush1.bf16.msra.mxu0 0
      %259 = vmatprep.mubr.bf16.mxu0 0
      %260 = vmatmul.mubr.bf16.gmra.mrb[0].mxu0 %v171
      %v261 = vpop.f32.mrb[0].mxu0
      %v262 = vadd.f32 0.0, %v261
      %v263 = vpop.f32.mrb[0].mxu0
      %v264 = vadd.f32 0.0, %v263
      %v265 = vpop.f32.mrb[0].mxu0
      %v266 = vpop.f32.mrb[0].mxu0
      %267 = vdwg.mxu0
      %v268 = vadd.f32 %v153, %v221
      %v269 = vadd.f32 %v154, %v223
      %v270 = vadd.f32 %v155, %v262
      %v271 = vadd.f32 %v156, %v264
      %272 = vst [vmem:[%s142] sm:$0xff] %v268
      %273 = vst [vmem:[%s142 + $0x8] sm:$0xff] %v269
      %274 = vst [vmem:[%s142 + $0x10] sm:$0xff] %v270
      %275 = vst [vmem:[%s142 + $0x18] sm:$0xff] %v271
      // Predicated region
      $region29: #{graph_encoder_forward.8} parent=23 // pred_check
        %p276 = pneg %p145
      $region30: #{graph_encoder_forward.8} parent=23 // pred_check_branch
        %278 = sbr.rel (%p276) target = $region32
      $region31: #{graph_encoder_forward.8} parent=23 // pred_region
        %v279 = vld [vmem:[%s142] sm:$0xff]
        %v280 = vld [vmem:[%s142 + $0x8] sm:$0xff]
        %v281 = vld [vmem:[%s142 + $0x10] sm:$0xff]
        %v282 = vld [vmem:[%s142 + $0x18] sm:$0xff]
        %v283 = vmul.f32 %v279, 0.5
        %v284 = vmul.f32 %v280, 0.5
        %v285 = vmul.f32 %v281, 0.5
        %v286 = vmul.f32 %v282, 0.5
        %287 = vst [vmem:[%s142] sm:$0xff] %v283
        %288 = vst [vmem:[%s142 + $0x8] sm:$0xff] %v284
        %289 = vst [vmem:[%s142 + $0x10] sm:$0xff] %v285
        %290 = vst [vmem:[%s142 + $0x18] sm:$0xff] %v286
      $region32: #{graph_encoder_forward.8} parent=23 // pred_fallthru
        _
      %p291 = scmp.lt.s32.totalorder %s16, 1
      %s292 = scalar_select %p291, %s16, 1
      %s293 = smul.addr %s292, 4
      %s294 = smul.addr %s293, 8
      %s295 = scalar_lea.vmem %s1, %s294
      // Predicated region
      $region33: #{graph_encoder_forward.8} parent=23 // pred_check
        %p296 = pneg %p70
      $region34: #{graph_encoder_forward.8} parent=23 // pred_check_branch
        %298 = sbr.rel (%p296) target = $region36
      $region35: #{graph_encoder_forward.8} parent=23 // pred_region
        _
      $region36: #{graph_encoder_forward.8} parent=23 // pred_fallthru
        _
    $region24: #{graph_encoder_forward.8} parent=5 // pred_fallthru
      _
    %p299 = scmp.le.s32.totalorder 2, %s7
    // Predicated region
    $region37: #{graph_encoder_forward.8} parent=5 // pred_check
      %p300 = pneg %p299
    $region38: #{graph_encoder_forward.8} parent=5 // pred_check_branch
      %302 = sbr.rel (%p300) target = $region40
    $region39: #{graph_encoder_forward.8} parent=5 // pred_region
      %s303 = ssub.s32 %s7, 2
      // Predicated region
      $region41: #{graph_encoder_forward.8} parent=39 // pred_check
        %p304 = pneg %p76
      $region42: #{graph_encoder_forward.8} parent=39 // pred_check_branch
        %306 = sbr.rel (%p304) target = $region44
      $region43: #{graph_encoder_forward.8} parent=39 // pred_region
        %p307 = scmp.lt.s32.totalorder %s18, 1
        %s308 = scalar_select %p307, %s18, 1
        %s309 = smul.addr %s308, 4
        %s310 = smul.addr %s309, 8
        %s311 = scalar_lea.vmem %s1, %s310
      $region44: #{graph_encoder_forward.8} parent=39 // pred_fallthru
        _
    $region40: #{graph_encoder_forward.8} parent=5 // pred_fallthru
      _
  $region6: #{graph_encoder_forward.8} parent=0 // loop_footer
    %s11 = sadd.s32 1, %s7
  $region7: #{graph_encoder_forward.8} parent=0 // loop_footer_branch
    %6 = sbr.rel target = $region3
  $region8: #{graph_encoder_forward.8} parent=0 // loop_exit
    _

// kernel: graph_encoder_forward.7
$region0: #{graph_encoder_forward.7}
  #allocation0 [shape = 'u32[]', space=smem, size = 0x4, offset = 0x4, fixed_abs, tag = 'smem constant byte address 0x4 - core index']
  #allocation1 [shape = 'u32[144,128]{1,0:T(1,128)}', space=vmem, size = 0x12000, scoped, tag = 'internal scratch']
  %s0 = inlined_call_operand.vmem [shape: bf16[2,8,512], index: 0, kind: input, shape index: {}, may-alias: {0,1}]
  %s1 = inlined_call_operand.vmem [shape: bf16[2,8,512], index: 1, kind: input, shape index: {}, may-alias: {0,1}]
  %s2 = inlined_call_operand.vmem [shape: bf16[512,512], index: 2, kind: input, shape index: {}]
  %s3 = inlined_call_operand.vmem [shape: bf16[256,512], index: 3, kind: input, shape index: {}]
  %s4 = inlined_call_operand.vmem [shape: f32[1,512], index: 4, kind: input, shape index: {}]
  %s5 = inlined_call_operand.vmem [shape: f32[1,512], index: 5, kind: input, shape index: {}]
  %s6 = inlined_call_operand.vmem [shape: bf16[2,8,512], index: 6, kind: output, shape index: {}]
  %s7 = sld [smem:[#allocation0]]
  $region57: #{graph_encoder_forward.7} parent=0
    _
  %s9 = ssub.s32 1, %s7
  %s10 = scalar_select 0, %s9, %s7
  loop: start=0, step=1, limit=4
  $region2: #{graph_encoder_forward.7} parent=0 // loop_pre_header
    _
  $region3: #{graph_encoder_forward.7} parent=0 // loop_header
    %s12 = sphi 0, %s16
    %p13 = scmp.ge.s32.totalorder %s12, 4
    %s19 = sphi 0, %s31
    %s20 = sphi 0, %s27
    %s21 = sphi 0, %s19
    %s22 = sphi 0, %s20
    %s23 = sphi 0, %s21
    %s24 = sphi 0, %s22
    %s36 = sphi 0, %s38
    %s39 = sphi 0, %s36
    %s40 = sphi 0, %s39
    %s56 = sphi 0, %s40
    %s70 = sphi 0, %s72
    %s73 = sphi 0, %s70
    %s74 = sphi 0, %s73
    %s90 = sphi 0, %s74
    %s94 = sphi 0, %s94
    %s96 = sphi 0, %s94
    %s97 = sphi 0, %s96
    %s111 = sphi 0, %s97
    %s115 = sphi 0, %s115
    %s117 = sphi 0, %s115
    %s118 = sphi 0, %s117
    %s132 = sphi 0, %s118
    %s136 = sphi 0, %s136
    %s138 = sphi 0, %s136
    %s139 = sphi 0, %s138
    %s153 = sphi 0, %s139
    %s157 = sphi 0, %s157
    %s159 = sphi 0, %s157
    %s160 = sphi 0, %s159
    %s174 = sphi 0, %s160
    %s182 = sphi 0, %s184
    %s185 = sphi 0, %s182
    %s186 = sphi 0, %s185
    %s202 = sphi 0, %s186
  $region4: #{graph_encoder_forward.7} parent=0 // loop_header_branch
    %15 = sbr.rel (%p13) target = $region8
  $region5: #{graph_encoder_forward.7} parent=0 // loop_body
    %s17 = ssub.s32 %s12, 1
    %s18 = ssub.s32 %s12, 2
    %s25 = sadd.s32 1, %s20
    %p26 = scmp.ge.s32.totalorder %s25, 1
    %s27 = scalar_select %p26, 0, %s25
    %s28 = sadd.s32 1, %s19
    %s29 = scalar_select %p26, %s28, %s19
    %p30 = scmp.ge.s32.totalorder %s29, 2
    %s31 = scalar_select %p30, 0, %s29
    %s32 = ssub.s32 %s19, %s31
    %s33 = ssub.s32 %s20, %s27
    %s34 = sor.u32 %s32, %s33
    %p35 = scmp.eq.s32.totalorder %s34, 0
    %s37 = sadd.s32 %s36, 1
    %s38 = scalar_select %p35, %s36, %s37
    %p41 = pneg %p35
    %p42 = scmp.eq.s32.totalorder %s12, 1
    %p43 = por %p41, %p42
    %p44 = scmp.ne.s32.totalorder %s36, %s39
    %p45 = scmp.eq.s32.totalorder %s12, 0
    %p46 = por %p44, %p45
    %p47 = scmp.ne.s32.totalorder %s36, %s39
    %p48 = scmp.eq.s32.totalorder %s17, 1
    %p49 = por %p47, %p48
    %p50 = scmp.ne.s32.totalorder %s39, %s40
    %p51 = scmp.eq.s32.totalorder %s17, 0
    %p52 = por %p50, %p51
    %p53 = scmp.ne.s32.totalorder %s39, %s40
    %p54 = scmp.eq.s32.totalorder %s18, 1
    %p55 = por %p53, %p54
    %p57 = scmp.ne.s32.totalorder %s40, %s56
    %p58 = scmp.eq.s32.totalorder %s18, 0
    %p59 = por %p57, %p58
    %s60 = ssub.s32 %s20, 1
    %p61 = scmp.gt.s32.totalorder %s60, 0
    %s62 = scalar_select %p61, %s60, 0
    %s63 = ssub.s32 %s27, 1
    %p64 = scmp.gt.s32.totalorder %s63, 0
    %s65 = scalar_select %p64, %s63, 0
    %s66 = ssub.s32 %s19, %s31
    %s67 = ssub.s32 %s62, %s65
    %s68 = sor.u32 %s66, %s67
    %p69 = scmp.eq.s32.totalorder %s68, 0
    %s71 = sadd.s32 %s70, 1
    %s72 = scalar_select %p69, %s70, %s71
    %p75 = pneg %p69
    %p76 = scmp.eq.s32.totalorder %s12, 1
    %p77 = por %p75, %p76
    %p78 = scmp.ne.s32.totalorder %s70, %s73
    %p79 = scmp.eq.s32.totalorder %s12, 0
    %p80 = por %p78, %p79
    %p81 = scmp.ne.s32.totalorder %s70, %s73
    %p82 = scmp.eq.s32.totalorder %s17, 1
    %p83 = por %p81, %p82
    %p84 = scmp.ne.s32.totalorder %s73, %s74
    %p85 = scmp.eq.s32.totalorder %s17, 0
    %p86 = por %p84, %p85
    %p87 = scmp.ne.s32.totalorder %s73, %s74
    %p88 = scmp.eq.s32.totalorder %s18, 1
    %p89 = por %p87, %p88
    %p91 = scmp.ne.s32.totalorder %s74, %s90
    %p92 = scmp.eq.s32.totalorder %s18, 0
    %p93 = por %p91, %p92
    %s95 = sadd.s32 %s94, 1
    %p98 = scmp.eq.s32.totalorder %s12, 1
    %p99 = scmp.ne.s32.totalorder %s94, %s96
    %p100 = scmp.eq.s32.totalorder %s12, 0
    %p101 = por %p99, %p100
    %p102 = scmp.ne.s32.totalorder %s94, %s96
    %p103 = scmp.eq.s32.totalorder %s17, 1
    %p104 = por %p102, %p103
    %p105 = scmp.ne.s32.totalorder %s96, %s97
    %p106 = scmp.eq.s32.totalorder %s17, 0
    %p107 = por %p105, %p106
    %p108 = scmp.ne.s32.totalorder %s96, %s97
    %p109 = scmp.eq.s32.totalorder %s18, 1
    %p110 = por %p108, %p109
    %p112 = scmp.ne.s32.totalorder %s97, %s111
    %p113 = scmp.eq.s32.totalorder %s18, 0
    %p114 = por %p112, %p113
    %s116 = sadd.s32 %s115, 1
    %p119 = scmp.eq.s32.totalorder %s12, 1
    %p120 = scmp.ne.s32.totalorder %s115, %s117
    %p121 = scmp.eq.s32.totalorder %s12, 0
    %p122 = por %p120, %p121
    %p123 = scmp.ne.s32.totalorder %s115, %s117
    %p124 = scmp.eq.s32.totalorder %s17, 1
    %p125 = por %p123, %p124
    %p126 = scmp.ne.s32.totalorder %s117, %s118
    %p127 = scmp.eq.s32.totalorder %s17, 0
    %p128 = por %p126, %p127
    %p129 = scmp.ne.s32.totalorder %s117, %s118
    %p130 = scmp.eq.s32.totalorder %s18, 1
    %p131 = por %p129, %p130
    %p133 = scmp.ne.s32.totalorder %s118, %s132
    %p134 = scmp.eq.s32.totalorder %s18, 0
    %p135 = por %p133, %p134
    %s137 = sadd.s32 %s136, 1
    %p140 = scmp.eq.s32.totalorder %s12, 1
    %p141 = scmp.ne.s32.totalorder %s136, %s138
    %p142 = scmp.eq.s32.totalorder %s12, 0
    %p143 = por %p141, %p142
    %p144 = scmp.ne.s32.totalorder %s136, %s138
    %p145 = scmp.eq.s32.totalorder %s17, 1
    %p146 = por %p144, %p145
    %p147 = scmp.ne.s32.totalorder %s138, %s139
    %p148 = scmp.eq.s32.totalorder %s17, 0
    %p149 = por %p147, %p148
    %p150 = scmp.ne.s32.totalorder %s138, %s139
    %p151 = scmp.eq.s32.totalorder %s18, 1
    %p152 = por %p150, %p151
    %p154 = scmp.ne.s32.totalorder %s139, %s153
    %p155 = scmp.eq.s32.totalorder %s18, 0
    %p156 = por %p154, %p155
    %s158 = sadd.s32 %s157, 1
    %p161 = scmp.eq.s32.totalorder %s12, 1
    %p162 = scmp.ne.s32.totalorder %s157, %s159
    %p163 = scmp.eq.s32.totalorder %s12, 0
    %p164 = por %p162, %p163
    %p165 = scmp.ne.s32.totalorder %s157, %s159
    %p166 = scmp.eq.s32.totalorder %s17, 1
    %p167 = por %p165, %p166
    %p168 = scmp.ne.s32.totalorder %s159, %s160
    %p169 = scmp.eq.s32.totalorder %s17, 0
    %p170 = por %p168, %p169
    %p171 = scmp.ne.s32.totalorder %s159, %s160
    %p172 = scmp.eq.s32.totalorder %s18, 1
    %p173 = por %p171, %p172
    %p175 = scmp.ne.s32.totalorder %s160, %s174
    %p176 = scmp.eq.s32.totalorder %s18, 0
    %p177 = por %p175, %p176
    %s178 = ssub.s32 %s19, %s31
    %s179 = ssub.s32 %s20, %s27
    %s180 = sor.u32 %s178, %s179
    %p181 = scmp.eq.s32.totalorder %s180, 0
    %s183 = sadd.s32 %s182, 1
    %s184 = scalar_select %p181, %s182, %s183
    %p187 = pneg %p181
    %p188 = scmp.eq.s32.totalorder %s12, 1
    %p189 = por %p187, %p188
    %p190 = scmp.ne.s32.totalorder %s182, %s185
    %p191 = scmp.eq.s32.totalorder %s12, 0
    %p192 = por %p190, %p191
    %p193 = scmp.ne.s32.totalorder %s182, %s185
    %p194 = scmp.eq.s32.totalorder %s17, 1
    %p195 = por %p193, %p194
    %p196 = scmp.ne.s32.totalorder %s185, %s186
    %p197 = scmp.eq.s32.totalorder %s17, 0
    %p198 = por %p196, %p197
    %p199 = scmp.ne.s32.totalorder %s185, %s186
    %p200 = scmp.eq.s32.totalorder %s18, 1
    %p201 = por %p199, %p200
    %p203 = scmp.ne.s32.totalorder %s186, %s202
    %p204 = scmp.eq.s32.totalorder %s18, 0
    %p205 = por %p203, %p204
    %p206 = scmp.le.s32.totalorder 1, %s12
    %p207 = scmp.lt.s32.totalorder %s12, 3
    %p208 = pnand %p206, %p207
    %p209 = pneg %p208
    // Predicated region
    $region9: #{graph_encoder_forward.7} parent=5 // pred_check
      _
    $region10: #{graph_encoder_forward.7} parent=5 // pred_check_branch
      %211 = sbr.rel (%p208) target = $region12
    $region11: #{graph_encoder_forward.7} parent=5 // pred_region
      %s212 = ssub.s32 %s12, 1
      // Predicated region
      $region13: #{graph_encoder_forward.7} parent=11 // pred_check
        %p213 = pneg %p107
      $region14: #{graph_encoder_forward.7} parent=11 // pred_check_branch
        %215 = sbr.rel (%p213) target = $region16
      $region15: #{graph_encoder_forward.7} parent=11 // pred_region
        _
      $region16: #{graph_encoder_forward.7} parent=11 // pred_fallthru
        _
      // Predicated region
      $region17: #{graph_encoder_forward.7} parent=11 // pred_check
        %p216 = pneg %p128
      $region18: #{graph_encoder_forward.7} parent=11 // pred_check_branch
        %218 = sbr.rel (%p216) target = $region20
      $region19: #{graph_encoder_forward.7} parent=11 // pred_region
        _
      $region20: #{graph_encoder_forward.7} parent=11 // pred_fallthru
        _
      // Predicated region
      $region21: #{graph_encoder_forward.7} parent=11 // pred_check
        %p219 = pneg %p149
      $region22: #{graph_encoder_forward.7} parent=11 // pred_check_branch
        %221 = sbr.rel (%p219) target = $region24
      $region23: #{graph_encoder_forward.7} parent=11 // pred_region
        _
      $region24: #{graph_encoder_forward.7} parent=11 // pred_fallthru
        _
      // Predicated region
      $region25: #{graph_encoder_forward.7} parent=11 // pred_check
        %p222 = pneg %p170
      $region26: #{graph_encoder_forward.7} parent=11 // pred_check_branch
        %224 = sbr.rel (%p222) target = $region28
      $region27: #{graph_encoder_forward.7} parent=11 // pred_region
        _
      $region28: #{graph_encoder_forward.7} parent=11 // pred_fallthru
        _
    $region12: #{graph_encoder_forward.7} parent=5 // pred_fallthru
      _
    %p225 = scmp.lt.s32.totalorder %s12, 2
    // Predicated region
    $region29: #{graph_encoder_forward.7} parent=5 // pred_check
      %p226 = pneg %p225
    $region30: #{graph_encoder_forward.7} parent=5 // pred_check_branch
      %228 = sbr.rel (%p226) target = $region32
    $region31: #{graph_encoder_forward.7} parent=5 // pred_region
      // Predicated region
      $region33: #{graph_encoder_forward.7} parent=31 // pred_check
        %p229 = pneg %p46
      $region34: #{graph_encoder_forward.7} parent=31 // pred_check_branch
        %231 = sbr.rel (%p229) target = $region36
      $region35: #{graph_encoder_forward.7} parent=31 // pred_region
        %p232 = scmp.lt.s32.totalorder %s19, 1
        %s233 = scalar_select %p232, %s19, 1
        %p234 = scmp.lt.s32.totalorder %s20, 0
        %s235 = scalar_select %p234, %s20, 0
        %s236 = smul.addr %s235, 4
        %s237 = smul.addr %s233, 4
        %s238 = sadd.s32 %s236, %s237
        %s239 = smul.addr %s238, 4
        %s240 = scalar_lea.vmem %s0, %s239
      $region36: #{graph_encoder_forward.7} parent=31 // pred_fallthru
        _
      // Predicated region
      $region37: #{graph_encoder_forward.7} parent=31 // pred_check
        %p241 = pneg %p80
      $region38: #{graph_encoder_forward.7} parent=31 // pred_check_branch
        %243 = sbr.rel (%p241) target = $region40
      $region39: #{graph_encoder_forward.7} parent=31 // pred_region
        %s244 = ssub.s32 %s20, 1
        %p245 = scmp.gt.s32.totalorder %s244, 0
        %s246 = scalar_select %p245, %s244, 0
        %p247 = scmp.lt.s32.totalorder %s19, 1
        %s248 = scalar_select %p247, %s19, 1
        %p249 = scmp.lt.s32.totalorder %s246, 0
        %s250 = scalar_select %p249, %s246, 0
        %s251 = smul.addr %s250, 4
        %s252 = smul.addr %s248, 4
        %s253 = sadd.s32 %s251, %s252
        %s254 = smul.addr %s253, 4
        %s255 = scalar_lea.vmem %s1, %s254
        %s256 = ssub.s32 %s20, 1
        %p257 = scmp.gt.s32.totalorder %s256, 0
        %s258 = scalar_select %p257, %s256, 0
      $region40: #{graph_encoder_forward.7} parent=31 // pred_fallthru
        _
    $region32: #{graph_encoder_forward.7} parent=5 // pred_fallthru
      _
    %p259 = scmp.le.s32.totalorder 1, %s12
    %p260 = scmp.lt.s32.totalorder %s12, 3
    %p261 = pnand %p259, %p260
    %p262 = pneg %p261
    // Predicated region
    $region41: #{graph_encoder_forward.7} parent=5 // pred_check
      _
    $region42: #{graph_encoder_forward.7} parent=5 // pred_check_branch
      %264 = sbr.rel (%p261) target = $region44
    $region43: #{graph_encoder_forward.7} parent=5 // pred_region
      %s265 = ssub.s32 %s12, 1
      %p266 = scmp.lt.s32.totalorder %s21, 1
      %s267 = scalar_select %p266, %s21, 1
      %p268 = scmp.lt.s32.totalorder %s22, 0
      %s269 = scalar_select %p268, %s22, 0
      %s270 = smul.addr %s269, 4
      %s271 = smul.addr %s267, 4
      %s272 = sadd.s32 %s270, %s271
      %s273 = smul.addr %s272, 4
      %s274 = scalar_lea.vmem %s0, %s273
      %p275 = pneg %p52
      %p276 = pneg %p49
      %s277 = ssub.s32 %s22, 1
      %p278 = scmp.gt.s32.totalorder %s277, 0
      %s279 = scalar_select %p278, %s277, 0
      %p280 = scmp.lt.s32.totalorder %s21, 1
      %s281 = scalar_select %p280, %s21, 1
      %p282 = scmp.lt.s32.totalorder %s279, 0
      %s283 = scalar_select %p282, %s279, 0
      %s284 = smul.addr %s283, 4
      %s285 = smul.addr %s281, 4
      %s286 = sadd.s32 %s284, %s285
      %s287 = smul.addr %s286, 4
      %s288 = scalar_lea.vmem %s1, %s287
      %p289 = pneg %p86
      %p290 = pneg %p83
      %p291 = pneg %p107
      %p292 = pneg %p104
      %p293 = pneg %p128
      %p294 = pneg %p125
      %p295 = pneg %p149
      %p296 = pneg %p146
      %p297 = pneg %p170
      %p298 = pneg %p167
      %p299 = pneg %p198
      %p300 = pneg %p195
      %p301 = scmp.lt.s32.totalorder %s21, 1
      %s302 = scalar_select %p301, %s21, 1
      %p303 = scmp.lt.s32.totalorder %s22, 0
      %s304 = scalar_select %p303, %s22, 0
      %s305 = smul.addr %s304, 4
      %s306 = smul.addr %s302, 4
      %s307 = sadd.s32 %s305, %s306
      %s308 = smul.addr %s307, 4
      %s309 = scalar_lea.vmem %s6, %s308
      %p310 = scmp.lt.s32.totalorder %s21, 1
      %s311 = scalar_select %p310, %s21, 1
      %p312 = scmp.lt.s32.totalorder %s22, 0
      %s313 = scalar_select %p312, %s22, 0
      %s314 = smul.addr %s313, 4
      %s315 = smul.addr %s311, 4
      %s316 = sadd.s32 %s314, %s315
      %s317 = smul.addr %s316, 4
      %s318 = scalar_lea.vmem %s0, %s317
      %s319 = ssub.s32 %s22, 1
      %p320 = scmp.gt.s32.totalorder %s319, 0
      %s321 = scalar_select %p320, %s319, 0
      %p322 = scmp.lt.s32.totalorder %s21, 1
      %s323 = scalar_select %p322, %s21, 1
      %p324 = scmp.lt.s32.totalorder %s321, 0
      %s325 = scalar_select %p324, %s321, 0
      %s326 = smul.addr %s325, 4
      %s327 = smul.addr %s323, 4
      %s328 = sadd.s32 %s326, %s327
      %s329 = smul.addr %s328, 4
      %s330 = scalar_lea.vmem %s1, %s329
      %s331 = ssub.s32 %s22, 1
      %p332 = scmp.gt.s32.totalorder %s331, 0
      %s333 = scalar_select %p332, %s331, 0
      %p334 = scmp.lt.s32.totalorder %s21, 1
      %s335 = scalar_select %p334, %s21, 1
      %p336 = scmp.lt.s32.totalorder %s22, 0
      %s337 = scalar_select %p336, %s22, 0
      %s338 = smul.addr %s337, 4
      %s339 = smul.addr %s335, 4
      %s340 = sadd.s32 %s338, %s339
      %s341 = smul.addr %s340, 4
      %s342 = scalar_lea.vmem %s6, %s341
      %v343 = vld [vmem:[%s318] sm:$0xff]
      %v344 = vld [vmem:[%s318 + $0x8] sm:$0xff]
      %v345 = vld [vmem:[%s2] sm:$0xff]
      %v346 = vld [vmem:[%s2 + $0x8] sm:$0xff]
      %v347 = vld [vmem:[%s2 + $0x10] sm:$0xff]
      %v348 = vld [vmem:[%s2 + $0x18] sm:$0xff]
      %v349 = vld [vmem:[%s2 + $0x20] sm:$0xff]
      %v350 = vld [vmem:[%s2 + $0x28] sm:$0xff]
      %v351 = vld [vmem:[%s2 + $0x30] sm:$0xff]
      %v352 = vld [vmem:[%s2 + $0x38] sm:$0xff]
      %v353 = vld [vmem:[%s2 + $0x40] sm:$0xff]
      %v354 = vld [vmem:[%s2 + $0x48] sm:$0xff]
      %v355 = vld [vmem:[%s2 + $0x50] sm:$0xff]
      %v356 = vld [vmem:[%s2 + $0x58] sm:$0xff]
      %v357 = vld [vmem:[%s2 + $0x60] sm:$0xff]
      %v358 = vld [vmem:[%s2 + $0x68] sm:$0xff]
      %v359 = vld [vmem:[%s2 + $0x70] sm:$0xff]
      %v360 = vld [vmem:[%s2 + $0x78] sm:$0xff]
      %v361 = vld [vmem:[%s2 + $0x80] sm:$0xff]
      %v362 = vld [vmem:[%s2 + $0x88] sm:$0xff]
      %v363 = vld [vmem:[%s2 + $0x90] sm:$0xff]
      %v364 = vld [vmem:[%s2 + $0x98] sm:$0xff]
      %v365 = vld [vmem:[%s2 + $0xa0] sm:$0xff]
      %v366 = vld [vmem:[%s2 + $0xa8] sm:$0xff]
      %v367 = vld [vmem:[%s2 + $0xb0] sm:$0xff]
      %v368 = vld [vmem:[%s2 + $0xb8] sm:$0xff]
      %v369 = vld [vmem:[%s2 + $0xc0] sm:$0xff]
      %v370 = vld [vmem:[%s2 + $0xc8] sm:$0xff]
      %v371 = vld [vmem:[%s2 + $0xd0] sm:$0xff]
      %v372 = vld [vmem:[%s2 + $0xd8] sm:$0xff]
      %v373 = vld [vmem:[%s2 + $0xe0] sm:$0xff]
      %v374 = vld [vmem:[%s2 + $0xe8] sm:$0xff]
      %v375 = vld [vmem:[%s2 + $0xf0] sm:$0xff]
      %v376 = vld [vmem:[%s2 + $0xf8] sm:$0xff]
      %v377 = vld [vmem:[%s2 + $0x100] sm:$0xff]
      %v378 = vld [vmem:[%s2 + $0x108] sm:$0xff]
      %v379 = vld [vmem:[%s2 + $0x110] sm:$0xff]
      %v380 = vld [vmem:[%s2 + $0x118] sm:$0xff]
      %v381 = vld [vmem:[%s2 + $0x120] sm:$0xff]
      %v382 = vld [vmem:[%s2 + $0x128] sm:$0xff]
      %v383 = vld [vmem:[%s2 + $0x130] sm:$0xff]
      %v384 = vld [vmem:[%s2 + $0x138] sm:$0xff]
      %v385 = vld [vmem:[%s2 + $0x140] sm:$0xff]
      %v386 = vld [vmem:[%s2 + $0x148] sm:$0xff]
      %v387 = vld [vmem:[%s2 + $0x150] sm:$0xff]
      %v388 = vld [vmem:[%s2 + $0x158] sm:$0xff]
      %v389 = vld [vmem:[%s2 + $0x160] sm:$0xff]
      %v390 = vld [vmem:[%s2 + $0x168] sm:$0xff]
      %v391 = vld [vmem:[%s2 + $0x170] sm:$0xff]
      %v392 = vld [vmem:[%s2 + $0x178] sm:$0xff]
      %v393 = vld [vmem:[%s2 + $0x180] sm:$0xff]
      %v394 = vld [vmem:[%s2 + $0x188] sm:$0xff]
      %v395 = vld [vmem:[%s2 + $0x190] sm:$0xff]
      %v396 = vld [vmem:[%s2 + $0x198] sm:$0xff]
      %v397 = vld [vmem:[%s2 + $0x1a0] sm:$0xff]
      %v398 = vld [vmem:[%s2 + $0x1a8] sm:$0xff]
      %v399 = vld [vmem:[%s2 + $0x1b0] sm:$0xff]
      %v400 = vld [vmem:[%s2 + $0x1b8] sm:$0xff]
      %v401 = vld [vmem:[%s2 + $0x1c0] sm:$0xff]
      %v402 = vld [vmem:[%s2 + $0x1c8] sm:$0xff]
      %v403 = vld [vmem:[%s2 + $0x1d0] sm:$0xff]
      %v404 = vld [vmem:[%s2 + $0x1d8] sm:$0xff]
      %v405 = vld [vmem:[%s2 + $0x1e0] sm:$0xff]
      %v406 = vld [vmem:[%s2 + $0x1e8] sm:$0xff]
      %v407 = vld [vmem:[%s2 + $0x1f0] sm:$0xff]
      %v408 = vld [vmem:[%s2 + $0x1f8] sm:$0xff]
      %v409 = vld [vmem:[%s2 + $0x200] sm:$0xff]
      %v410 = vld [vmem:[%s2 + $0x208] sm:$0xff]
      %v411 = vld [vmem:[%s2 + $0x210] sm:$0xff]
      %v412 = vld [vmem:[%s2 + $0x218] sm:$0xff]
      %v413 = vld [vmem:[%s2 + $0x220] sm:$0xff]
      %v414 = vld [vmem:[%s2 + $0x228] sm:$0xff]
      %v415 = vld [vmem:[%s2 + $0x230] sm:$0xff]
      %v416 = vld [vmem:[%s2 + $0x238] sm:$0xff]
      %v417 = vld [vmem:[%s2 + $0x240] sm:$0xff]
      %v418 = vld [vmem:[%s2 + $0x248] sm:$0xff]
      %v419 = vld [vmem:[%s2 + $0x250] sm:$0xff]
      %v420 = vld [vmem:[%s2 + $0x258] sm:$0xff]
      %v421 = vld [vmem:[%s2 + $0x260] sm:$0xff]
      %v422 = vld [vmem:[%s2 + $0x268] sm:$0xff]
      %v423 = vld [vmem:[%s2 + $0x270] sm:$0xff]
      %v424 = vld [vmem:[%s2 + $0x278] sm:$0xff]
      %v425 = vld [vmem:[%s2 + $0x280] sm:$0xff]
      %v426 = vld [vmem:[%s2 + $0x288] sm:$0xff]
      %v427 = vld [vmem:[%s2 + $0x290] sm:$0xff]
      %v428 = vld [vmem:[%s2 + $0x298] sm:$0xff]
      %v429 = vld [vmem:[%s2 + $0x2a0] sm:$0xff]
      %v430 = vld [vmem:[%s2 + $0x2a8] sm:$0xff]
      %v431 = vld [vmem:[%s2 + $0x2b0] sm:$0xff]
      %v432 = vld [vmem:[%s2 + $0x2b8] sm:$0xff]
      %v433 = vld [vmem:[%s2 + $0x2c0] sm:$0xff]
      %v434 = vld [vmem:[%s2 + $0x2c8] sm:$0xff]
      %v435 = vld [vmem:[%s2 + $0x2d0] sm:$0xff]
      %v436 = vld [vmem:[%s2 + $0x2d8] sm:$0xff]
      %v437 = vld [vmem:[%s2 + $0x2e0] sm:$0xff]
      %v438 = vld [vmem:[%s2 + $0x2e8] sm:$0xff]
      %v439 = vld [vmem:[%s2 + $0x2f0] sm:$0xff]
      %v440 = vld [vmem:[%s2 + $0x2f8] sm:$0xff]
      %v441 = vld [vmem:[%s2 + $0x300] sm:$0xff]
      %v442 = vld [vmem:[%s2 + $0x308] sm:$0xff]
      %v443 = vld [vmem:[%s2 + $0x310] sm:$0xff]
      %v444 = vld [vmem:[%s2 + $0x318] sm:$0xff]
      %v445 = vld [vmem:[%s2 + $0x320] sm:$0xff]
      %v446 = vld [vmem:[%s2 + $0x328] sm:$0xff]
      %v447 = vld [vmem:[%s2 + $0x330] sm:$0xff]
      %v448 = vld [vmem:[%s2 + $0x338] sm:$0xff]
      %v449 = vld [vmem:[%s2 + $0x340] sm:$0xff]
      %v450 = vld [vmem:[%s2 + $0x348] sm:$0xff]
      %v451 = vld [vmem:[%s2 + $0x350] sm:$0xff]
      %v452 = vld [vmem:[%s2 + $0x358] sm:$0xff]
      %v453 = vld [vmem:[%s2 + $0x360] sm:$0xff]
      %v454 = vld [vmem:[%s2 + $0x368] sm:$0xff]
      %v455 = vld [vmem:[%s2 + $0x370] sm:$0xff]
      %v456 = vld [vmem:[%s2 + $0x378] sm:$0xff]
      %v457 = vld [vmem:[%s2 + $0x380] sm:$0xff]
      %v458 = vld [vmem:[%s2 + $0x388] sm:$0xff]
      %v459 = vld [vmem:[%s2 + $0x390] sm:$0xff]
      %v460 = vld [vmem:[%s2 + $0x398] sm:$0xff]
      %v461 = vld [vmem:[%s2 + $0x3a0] sm:$0xff]
      %v462 = vld [vmem:[%s2 + $0x3a8] sm:$0xff]
      %v463 = vld [vmem:[%s2 + $0x3b0] sm:$0xff]
      %v464 = vld [vmem:[%s2 + $0x3b8] sm:$0xff]
      %v465 = vld [vmem:[%s2 + $0x3c0] sm:$0xff]
      %v466 = vld [vmem:[%s2 + $0x3c8] sm:$0xff]
      %v467 = vld [vmem:[%s2 + $0x3d0] sm:$0xff]
      %v468 = vld [vmem:[%s2 + $0x3d8] sm:$0xff]
      %v469 = vld [vmem:[%s2 + $0x3e0] sm:$0xff]
      %v470 = vld [vmem:[%s2 + $0x3e8] sm:$0xff]
      %v471 = vld [vmem:[%s2 + $0x3f0] sm:$0xff]
      %v472 = vld [vmem:[%s2 + $0x3f8] sm:$0xff]
      %v473 = vunpack.c.l.bf16 %v344
      %v474 = vunpack.c.h.bf16 %v344
      %v475 = vrot.slane %v473, 7
      %v476 = vrot.slane %v474, 7
      %v477 = vld [vmem:[%s330 + $0x8] sm:$0x88]
      %v478 = vunpack.c.l.bf16 %v477
      %v479 = vunpack.c.h.bf16 %v477
      %p480 = scmp.gt.s32.totalorder %s22, 0
      %s481 = scalar_select %p480, 1, 0
      %v482 = vstv %s481
      %vm483 = vcmp.eq.s32.totalorder %v482, 1
      %v484 = vsel %vm483, %v478, 0.0
      %v485 = vsel %vm483, %v479, 0.0
      %v486 = vlaneseq
      %v487 = vshrl.u32 %v486, 7
      %vm488 = vcmp.eq.s32.totalorder %v487, 0
      %v489 = vlaneseq
      %v490 = vshrl.u32 %v489, 7
      %v491 = vsub.s32 7, %v490
      %v492 = vrot.slane %v484, %v491
      %v493 = vlaneseq
      %v494 = vshrl.u32 %v493, 7
      %v495 = vsub.s32 7, %v494
      %v496 = vrot.slane %v485, %v495
      %v497 = vsel %vm488, %v492, %v475
      %v498 = vsel %vm488, %v496, %v476
      %v499 = vpack.c.bf16 %v497, %v497
      %v500 = vpack.c.bf16 %v498, %v498
      %v501 = vld [vmem:[%s3] sm:$0xff]
      %v502 = vld [vmem:[%s3 + $0x8] sm:$0xff]
      %v503 = vld [vmem:[%s3 + $0x10] sm:$0xff]
      %v504 = vld [vmem:[%s3 + $0x18] sm:$0xff]
      %v505 = vld [vmem:[%s3 + $0x20] sm:$0xff]
      %v506 = vld [vmem:[%s3 + $0x28] sm:$0xff]
      %v507 = vld [vmem:[%s3 + $0x30] sm:$0xff]
      %v508 = vld [vmem:[%s3 + $0x38] sm:$0xff]
      %v509 = vld [vmem:[%s3 + $0x40] sm:$0xff]
      %v510 = vld [vmem:[%s3 + $0x48] sm:$0xff]
      %v511 = vld [vmem:[%s3 + $0x50] sm:$0xff]
      %v512 = vld [vmem:[%s3 + $0x58] sm:$0xff]
      %v513 = vld [vmem:[%s3 + $0x60] sm:$0xff]
      %v514 = vld [vmem:[%s3 + $0x68] sm:$0xff]
      %v515 = vld [vmem:[%s3 + $0x70] sm:$0xff]
      %v516 = vld [vmem:[%s3 + $0x78] sm:$0xff]
      %v517 = vld [vmem:[%s3 + $0x80] sm:$0xff]
      %v518 = vld [vmem:[%s3 + $0x88] sm:$0xff]
      %v519 = vld [vmem:[%s3 + $0x90] sm:$0xff]
      %v520 = vld [vmem:[%s3 + $0x98] sm:$0xff]
      %v521 = vld [vmem:[%s3 + $0xa0] sm:$0xff]
      %v522 = vld [vmem:[%s3 + $0xa8] sm:$0xff]
      %v523 = vld [vmem:[%s3 + $0xb0] sm:$0xff]
      %v524 = vld [vmem:[%s3 + $0xb8] sm:$0xff]
      %v525 = vld [vmem:[%s3 + $0xc0] sm:$0xff]
      %v526 = vld [vmem:[%s3 + $0xc8] sm:$0xff]
      %v527 = vld [vmem:[%s3 + $0xd0] sm:$0xff]
      %v528 = vld [vmem:[%s3 + $0xd8] sm:$0xff]
      %v529 = vld [vmem:[%s3 + $0xe0] sm:$0xff]
      %v530 = vld [vmem:[%s3 + $0xe8] sm:$0xff]
      %v531 = vld [vmem:[%s3 + $0xf0] sm:$0xff]
      %v532 = vld [vmem:[%s3 + $0xf8] sm:$0xff]
      %v533 = vld [vmem:[%s3 + $0x100] sm:$0xff]
      %v534 = vld [vmem:[%s3 + $0x108] sm:$0xff]
      %v535 = vld [vmem:[%s3 + $0x110] sm:$0xff]
      %v536 = vld [vmem:[%s3 + $0x118] sm:$0xff]
      %v537 = vld [vmem:[%s3 + $0x120] sm:$0xff]
      %v538 = vld [vmem:[%s3 + $0x128] sm:$0xff]
      %v539 = vld [vmem:[%s3 + $0x130] sm:$0xff]
      %v540 = vld [vmem:[%s3 + $0x138] sm:$0xff]
      %v541 = vld [vmem:[%s3 + $0x140] sm:$0xff]
      %v542 = vld [vmem:[%s3 + $0x148] sm:$0xff]
      %v543 = vld [vmem:[%s3 + $0x150] sm:$0xff]
      %v544 = vld [vmem:[%s3 + $0x158] sm:$0xff]
      %v545 = vld [vmem:[%s3 + $0x160] sm:$0xff]
      %v546 = vld [vmem:[%s3 + $0x168] sm:$0xff]
      %v547 = vld [vmem:[%s3 + $0x170] sm:$0xff]
      %v548 = vld [vmem:[%s3 + $0x178] sm:$0xff]
      %v549 = vld [vmem:[%s3 + $0x180] sm:$0xff]
      %v550 = vld [vmem:[%s3 + $0x188] sm:$0xff]
      %v551 = vld [vmem:[%s3 + $0x190] sm:$0xff]
      %v552 = vld [vmem:[%s3 + $0x198] sm:$0xff]
      %v553 = vld [vmem:[%s3 + $0x1a0] sm:$0xff]
      %v554 = vld [vmem:[%s3 + $0x1a8] sm:$0xff]
      %v555 = vld [vmem:[%s3 + $0x1b0] sm:$0xff]
      %v556 = vld [vmem:[%s3 + $0x1b8] sm:$0xff]
      %v557 = vld [vmem:[%s3 + $0x1c0] sm:$0xff]
      %v558 = vld [vmem:[%s3 + $0x1c8] sm:$0xff]
      %v559 = vld [vmem:[%s3 + $0x1d0] sm:$0xff]
      %v560 = vld [vmem:[%s3 + $0x1d8] sm:$0xff]
      %v561 = vld [vmem:[%s3 + $0x1e0] sm:$0xff]
      %v562 = vld [vmem:[%s3 + $0x1e8] sm:$0xff]
      %v563 = vld [vmem:[%s3 + $0x1f0] sm:$0xff]
      %v564 = vld [vmem:[%s3 + $0x1f8] sm:$0xff]
      %v629 = vunpack.c.l.b16 %v501
      %v630 = vunpack.c.h.b16 %v501
      %v631 = vunpack.c.l.b16 %v502
      %v632 = vunpack.c.h.b16 %v502
      %v633 = vunpack.c.l.b16 %v503
      %v634 = vunpack.c.h.b16 %v503
      %v635 = vunpack.c.l.b16 %v504
      %v636 = vunpack.c.h.b16 %v504
      %v637 = vunpack.c.l.b16 %v505
      %v638 = vunpack.c.h.b16 %v505
      %v639 = vunpack.c.l.b16 %v506
      %v640 = vunpack.c.h.b16 %v506
      %v641 = vunpack.c.l.b16 %v507
      %v642 = vunpack.c.h.b16 %v507
      %v643 = vunpack.c.l.b16 %v508
      %v644 = vunpack.c.h.b16 %v508
      %v645 = vunpack.c.l.b16 %v509
      %v646 = vunpack.c.h.b16 %v509
      %v647 = vunpack.c.l.b16 %v510
      %v648 = vunpack.c.h.b16 %v510
      %v649 = vunpack.c.l.b16 %v511
      %v650 = vunpack.c.h.b16 %v511
      %v651 = vunpack.c.l.b16 %v512
      %v652 = vunpack.c.h.b16 %v512
      %v653 = vunpack.c.l.b16 %v513
      %v654 = vunpack.c.h.b16 %v513
      %v655 = vunpack.c.l.b16 %v514
      %v656 = vunpack.c.h.b16 %v514
      %v657 = vunpack.c.l.b16 %v515
      %v658 = vunpack.c.h.b16 %v515
      %v659 = vunpack.c.l.b16 %v516
      %v660 = vunpack.c.h.b16 %v516
      %v661 = vunpack.c.l.b16 %v517
      %v662 = vunpack.c.h.b16 %v517
      %v663 = vunpack.c.l.b16 %v518
      %v664 = vunpack.c.h.b16 %v518
      %v665 = vunpack.c.l.b16 %v519
      %v666 = vunpack.c.h.b16 %v519
      %v667 = vunpack.c.l.b16 %v520
      %v668 = vunpack.c.h.b16 %v520
      %v669 = vunpack.c.l.b16 %v521
      %v670 = vunpack.c.h.b16 %v521
      %v671 = vunpack.c.l.b16 %v522
      %v672 = vunpack.c.h.b16 %v522
      %v673 = vunpack.c.l.b16 %v523
      %v674 = vunpack.c.h.b16 %v523
      %v675 = vunpack.c.l.b16 %v524
      %v676 = vunpack.c.h.b16 %v524
      %v677 = vunpack.c.l.b16 %v525
      %v678 = vunpack.c.h.b16 %v525
      %v679 = vunpack.c.l.b16 %v526
      %v680 = vunpack.c.h.b16 %v526
      %v681 = vunpack.c.l.b16 %v527
      %v682 = vunpack.c.h.b16 %v527
      %v683 = vunpack.c.l.b16 %v528
      %v684 = vunpack.c.h.b16 %v528
      %v685 = vunpack.c.l.b16 %v529
      %v686 = vunpack.c.h.b16 %v529
      %v687 = vunpack.c.l.b16 %v530
      %v688 = vunpack.c.h.b16 %v530
      %v689 = vunpack.c.l.b16 %v531
      %v690 = vunpack.c.h.b16 %v531
      %v691 = vunpack.c.l.b16 %v532
      %v692 = vunpack.c.h.b16 %v532
      %v693 = vunpack.c.l.b16 %v533
      %v694 = vunpack.c.h.b16 %v533
      %v695 = vunpack.c.l.b16 %v534
      %v696 = vunpack.c.h.b16 %v534
      %v697 = vunpack.c.l.b16 %v535
      %v698 = vunpack.c.h.b16 %v535
      %v699 = vunpack.c.l.b16 %v536
      %v700 = vunpack.c.h.b16 %v536
      %v701 = vunpack.c.l.b16 %v537
      %v702 = vunpack.c.h.b16 %v537
      %v703 = vunpack.c.l.b16 %v538
      %v704 = vunpack.c.h.b16 %v538
      %v705 = vunpack.c.l.b16 %v539
      %v706 = vunpack.c.h.b16 %v539
      %v707 = vunpack.c.l.b16 %v540
      %v708 = vunpack.c.h.b16 %v540
      %v709 = vunpack.c.l.b16 %v541
      %v710 = vunpack.c.h.b16 %v541
      %v711 = vunpack.c.l.b16 %v542
      %v712 = vunpack.c.h.b16 %v542
      %v713 = vunpack.c.l.b16 %v543
      %v714 = vunpack.c.h.b16 %v543
      %v715 = vunpack.c.l.b16 %v544
      %v716 = vunpack.c.h.b16 %v544
      %v717 = vunpack.c.l.b16 %v545
      %v718 = vunpack.c.h.b16 %v545
      %v719 = vunpack.c.l.b16 %v546
      %v720 = vunpack.c.h.b16 %v546
      %v721 = vunpack.c.l.b16 %v547
      %v722 = vunpack.c.h.b16 %v547
      %v723 = vunpack.c.l.b16 %v548
      %v724 = vunpack.c.h.b16 %v548
      %v725 = vunpack.c.l.b16 %v549
      %v726 = vunpack.c.h.b16 %v549
      %v727 = vunpack.c.l.b16 %v550
      %v728 = vunpack.c.h.b16 %v550
      %v729 = vunpack.c.l.b16 %v551
      %v730 = vunpack.c.h.b16 %v551
      %v731 = vunpack.c.l.b16 %v552
      %v732 = vunpack.c.h.b16 %v552
      %v733 = vunpack.c.l.b16 %v553
      %v734 = vunpack.c.h.b16 %v553
      %v735 = vunpack.c.l.b16 %v554
      %v736 = vunpack.c.h.b16 %v554
      %v737 = vunpack.c.l.b16 %v555
      %v738 = vunpack.c.h.b16 %v555
      %v739 = vunpack.c.l.b16 %v556
      %v740 = vunpack.c.h.b16 %v556
      %v741 = vunpack.c.l.b16 %v557
      %v742 = vunpack.c.h.b16 %v557
      %v743 = vunpack.c.l.b16 %v558
      %v744 = vunpack.c.h.b16 %v558
      %v745 = vunpack.c.l.b16 %v559
      %v746 = vunpack.c.h.b16 %v559
      %v747 = vunpack.c.l.b16 %v560
      %v748 = vunpack.c.h.b16 %v560
      %v749 = vunpack.c.l.b16 %v561
      %v750 = vunpack.c.h.b16 %v561
      %v751 = vunpack.c.l.b16 %v562
      %v752 = vunpack.c.h.b16 %v562
      %v753 = vunpack.c.l.b16 %v563
      %v754 = vunpack.c.h.b16 %v563
      %v755 = vunpack.c.l.b16 %v564
      %v756 = vunpack.c.h.b16 %v564
      %v757 = vpack.c.b16 %v633, %v629
      %v758 = vpack.c.b16 %v634, %v630
      %v759 = vpack.c.b16 %v635, %v631
      %v760 = vpack.c.b16 %v636, %v632
      %v761 = vpack.c.b16 %v641, %v637
      %v762 = vpack.c.b16 %v642, %v638
      %v763 = vpack.c.b16 %v643, %v639
      %v764 = vpack.c.b16 %v644, %v640
      %v765 = vpack.c.b16 %v649, %v645
      %v766 = vpack.c.b16 %v650, %v646
      %v767 = vpack.c.b16 %v651, %v647
      %v768 = vpack.c.b16 %v652, %v648
      %v769 = vpack.c.b16 %v657, %v653
      %v770 = vpack.c.b16 %v658, %v654
      %v771 = vpack.c.b16 %v659, %v655
      %v772 = vpack.c.b16 %v660, %v656
      %v773 = vpack.c.b16 %v665, %v661
      %v774 = vpack.c.b16 %v666, %v662
      %v775 = vpack.c.b16 %v667, %v663
      %v776 = vpack.c.b16 %v668, %v664
      %v777 = vpack.c.b16 %v673, %v669
      %v778 = vpack.c.b16 %v674, %v670
      %v779 = vpack.c.b16 %v675, %v671
      %v780 = vpack.c.b16 %v676, %v672
      %v781 = vpack.c.b16 %v681, %v677
      %v782 = vpack.c.b16 %v682, %v678
      %v783 = vpack.c.b16 %v683, %v679
      %v784 = vpack.c.b16 %v684, %v680
      %v785 = vpack.c.b16 %v689, %v685
      %v786 = vpack.c.b16 %v690, %v686
      %v787 = vpack.c.b16 %v691, %v687
      %v788 = vpack.c.b16 %v692, %v688
      %v789 = vpack.c.b16 %v697, %v693
      %v790 = vpack.c.b16 %v698, %v694
      %v791 = vpack.c.b16 %v699, %v695
      %v792 = vpack.c.b16 %v700, %v696
      %v793 = vpack.c.b16 %v705, %v701
      %v794 = vpack.c.b16 %v706, %v702
      %v795 = vpack.c.b16 %v707, %v703
      %v796 = vpack.c.b16 %v708, %v704
      %v797 = vpack.c.b16 %v713, %v709
      %v798 = vpack.c.b16 %v714, %v710
      %v799 = vpack.c.b16 %v715, %v711
      %v800 = vpack.c.b16 %v716, %v712
      %v801 = vpack.c.b16 %v721, %v717
      %v802 = vpack.c.b16 %v722, %v718
      %v803 = vpack.c.b16 %v723, %v719
      %v804 = vpack.c.b16 %v724, %v720
      %v805 = vpack.c.b16 %v729, %v725
      %v806 = vpack.c.b16 %v730, %v726
      %v807 = vpack.c.b16 %v731, %v727
      %v808 = vpack.c.b16 %v732, %v728
      %v809 = vpack.c.b16 %v737, %v733
      %v810 = vpack.c.b16 %v738, %v734
      %v811 = vpack.c.b16 %v739, %v735
      %v812 = vpack.c.b16 %v740, %v736
      %v813 = vpack.c.b16 %v745, %v741
      %v814 = vpack.c.b16 %v746, %v742
      %v815 = vpack.c.b16 %v747, %v743
      %v816 = vpack.c.b16 %v748, %v744
      %v817 = vpack.c.b16 %v753, %v749
      %v818 = vpack.c.b16 %v754, %v750
      %v819 = vpack.c.b16 %v755, %v751
      %v820 = vpack.c.b16 %v756, %v752
      %885 = vmatprep.subr.bf16.mxu0 %v758
      %886 = vmatpush1.bf16.msra.mxu0 %v757
      %887 = vmatprep.subr.bf16.mxu0 %v762
      %888 = vmatpush1.bf16.msra.mxu0 %v761
      %889 = vmatprep.subr.bf16.mxu0 %v766
      %890 = vmatpush1.bf16.msra.mxu0 %v765
      %891 = vmatprep.subr.bf16.mxu0 %v770
      %892 = vmatpush1.bf16.msra.mxu0 %v769
      %893 = vmatprep.subr.bf16.mxu0 %v774
      %894 = vmatpush1.bf16.msra.mxu0 %v773
      %895 = vmatprep.subr.bf16.mxu0 %v778
      %896 = vmatpush1.bf16.msra.mxu0 %v777
      %897 = vmatprep.subr.bf16.mxu0 %v782
      %898 = vmatpush1.bf16.msra.mxu0 %v781
      %899 = vmatprep.subr.bf16.mxu0 %v786
      %900 = vmatpush1.bf16.msra.mxu0 %v785
      %901 = vmatprep.subr.bf16.mxu0 %v790
      %902 = vmatpush1.bf16.msra.mxu0 %v789
      %903 = vmatprep.subr.bf16.mxu0 %v794
      %904 = vmatpush1.bf16.msra.mxu0 %v793
      %905 = vmatprep.subr.bf16.mxu0 %v798
      %906 = vmatpush1.bf16.msra.mxu0 %v797
      %907 = vmatprep.subr.bf16.mxu0 %v802
      %908 = vmatpush1.bf16.msra.mxu0 %v801
      %909 = vmatprep.subr.bf16.mxu0 %v806
      %910 = vmatpush1.bf16.msra.mxu0 %v805
      %911 = vmatprep.subr.bf16.mxu0 %v810
      %912 = vmatpush1.bf16.msra.mxu0 %v809
      %913 = vmatprep.subr.bf16.mxu0 %v814
      %914 = vmatpush1.bf16.msra.mxu0 %v813
      %915 = vmatprep.subr.bf16.mxu0 %v818
      %916 = vmatpush1.bf16.msra.mxu0 %v817
      %917 = vmatprep.mubr.bf16.mxu0 %v500
      %918 = vmatmul.mubr.bf16.gmra.mrb[0].mxu0 %v499
      %v919 = vpop.f32.mrb[0].mxu0
      %v920 = vadd.f32 0.0, %v919
      %v921 = vpop.f32.mrb[0].mxu0
      %v922 = vadd.f32 0.0, %v921
      %v923 = vpop.f32.mrb[0].mxu0
      %v924 = vpop.f32.mrb[0].mxu0
      %925 = vdwg.mxu0
      %926 = vmatprep.subr.bf16.mxu0 %v760
      %927 = vmatpush1.bf16.msra.mxu0 %v759
      %928 = vmatprep.subr.bf16.mxu0 %v764
      %929 = vmatpush1.bf16.msra.mxu0 %v763
      %930 = vmatprep.subr.bf16.mxu0 %v768
      %931 = vmatpush1.bf16.msra.mxu0 %v767
      %932 = vmatprep.subr.bf16.mxu0 %v772
      %933 = vmatpush1.bf16.msra.mxu0 %v771
      %934 = vmatprep.subr.bf16.mxu0 %v776
      %935 = vmatpush1.bf16.msra.mxu0 %v775
      %936 = vmatprep.subr.bf16.mxu0 %v780
      %937 = vmatpush1.bf16.msra.mxu0 %v779
      %938 = vmatprep.subr.bf16.mxu0 %v784
      %939 = vmatpush1.bf16.msra.mxu0 %v783
      %940 = vmatprep.subr.bf16.mxu0 %v788
      %941 = vmatpush1.bf16.msra.mxu0 %v787
      %942 = vmatprep.subr.bf16.mxu0 %v792
      %943 = vmatpush1.bf16.msra.mxu0 %v791
      %944 = vmatprep.subr.bf16.mxu0 %v796
      %945 = vmatpush1.bf16.msra.mxu0 %v795
      %946 = vmatprep.subr.bf16.mxu0 %v800
      %947 = vmatpush1.bf16.msra.mxu0 %v799
      %948 = vmatprep.subr.bf16.mxu0 %v804
      %949 = vmatpush1.bf16.msra.mxu0 %v803
      %950 = vmatprep.subr.bf16.mxu0 %v808
      %951 = vmatpush1.bf16.msra.mxu0 %v807
      %952 = vmatprep.subr.bf16.mxu0 %v812
      %953 = vmatpush1.bf16.msra.mxu0 %v811
      %954 = vmatprep.subr.bf16.mxu0 %v816
      %955 = vmatpush1.bf16.msra.mxu0 %v815
      %956 = vmatprep.subr.bf16.mxu0 %v820
      %957 = vmatpush1.bf16.msra.mxu0 %v819
      %958 = vmatprep.mubr.bf16.mxu0 %v500
      %959 = vmatmul.mubr.bf16.gmra.mrb[0].mxu0 %v499
      %v960 = vpop.f32.mrb[0].mxu0
      %v961 = vadd.f32 0.0, %v960
      %v962 = vpop.f32.mrb[0].mxu0
      %v963 = vadd.f32 0.0, %v962
      %v964 = vpop.f32.mrb[0].mxu0
      %v965 = vpop.f32.mrb[0].mxu0
      %966 = vdwg.mxu0
      %v969 = vunpack.c.l.b16 %v343
      %v970 = vunpack.c.h.b16 %v343
      %v971 = vunpack.c.l.b16 %v344
      %v972 = vunpack.c.h.b16 %v344
      %v973 = vpack.c.b16 %v969, %v969
      %v974 = vpack.c.b16 %v970, %v970
      %v975 = vpack.c.b16 %v971, %v971
      %v976 = vpack.c.b16 %v972, %v972
      %v1109 = vunpack.c.l.b16 %v345
      %v1110 = vunpack.c.h.b16 %v345
      %v1111 = vunpack.c.l.b16 %v346
      %v1112 = vunpack.c.h.b16 %v346
      %v1113 = vunpack.c.l.b16 %v347
      %v1114 = vunpack.c.h.b16 %v347
      %v1115 = vunpack.c.l.b16 %v348
      %v1116 = vunpack.c.h.b16 %v348
      %v1117 = vunpack.c.l.b16 %v349
      %v1118 = vunpack.c.h.b16 %v349
      %v1119 = vunpack.c.l.b16 %v350
      %v1120 = vunpack.c.h.b16 %v350
      %v1121 = vunpack.c.l.b16 %v351
      %v1122 = vunpack.c.h.b16 %v351
      %v1123 = vunpack.c.l.b16 %v352
      %v1124 = vunpack.c.h.b16 %v352
      %v1125 = vunpack.c.l.b16 %v353
      %v1126 = vunpack.c.h.b16 %v353
      %v1127 = vunpack.c.l.b16 %v354
      %v1128 = vunpack.c.h.b16 %v354
      %v1129 = vunpack.c.l.b16 %v355
      %v1130 = vunpack.c.h.b16 %v355
      %v1131 = vunpack.c.l.b16 %v356
      %v1132 = vunpack.c.h.b16 %v356
      %v1133 = vunpack.c.l.b16 %v357
      %v1134 = vunpack.c.h.b16 %v357
      %v1135 = vunpack.c.l.b16 %v358
      %v1136 = vunpack.c.h.b16 %v358
      %v1137 = vunpack.c.l.b16 %v359
      %v1138 = vunpack.c.h.b16 %v359
      %v1139 = vunpack.c.l.b16 %v360
      %v1140 = vunpack.c.h.b16 %v360
      %v1141 = vunpack.c.l.b16 %v361
      %v1142 = vunpack.c.h.b16 %v361
      %v1143 = vunpack.c.l.b16 %v362
      %v1144 = vunpack.c.h.b16 %v362
      %v1145 = vunpack.c.l.b16 %v363
      %v1146 = vunpack.c.h.b16 %v363
      %v1147 = vunpack.c.l.b16 %v364
      %v1148 = vunpack.c.h.b16 %v364
      %v1149 = vunpack.c.l.b16 %v365
      %v1150 = vunpack.c.h.b16 %v365
      %v1151 = vunpack.c.l.b16 %v366
      %v1152 = vunpack.c.h.b16 %v366
      %v1153 = vunpack.c.l.b16 %v367
      %v1154 = vunpack.c.h.b16 %v367
      %v1155 = vunpack.c.l.b16 %v368
      %v1156 = vunpack.c.h.b16 %v368
      %v1157 = vunpack.c.l.b16 %v369
      %v1158 = vunpack.c.h.b16 %v369
      %v1159 = vunpack.c.l.b16 %v370
      %v1160 = vunpack.c.h.b16 %v370
      %v1161 = vunpack.c.l.b16 %v371
      %v1162 = vunpack.c.h.b16 %v371
      %v1163 = vunpack.c.l.b16 %v372
      %v1164 = vunpack.c.h.b16 %v372
      %v1165 = vunpack.c.l.b16 %v373
      %v1166 = vunpack.c.h.b16 %v373
      %v1167 = vunpack.c.l.b16 %v374
      %v1168 = vunpack.c.h.b16 %v374
      %v1169 = vunpack.c.l.b16 %v375
      %v1170 = vunpack.c.h.b16 %v375
      %v1171 = vunpack.c.l.b16 %v376
      %v1172 = vunpack.c.h.b16 %v376
      %v1173 = vunpack.c.l.b16 %v377
      %v1174 = vunpack.c.h.b16 %v377
      %v1175 = vunpack.c.l.b16 %v378
      %v1176 = vunpack.c.h.b16 %v378
      %v1177 = vunpack.c.l.b16 %v379
      %v1178 = vunpack.c.h.b16 %v379
      %v1179 = vunpack.c.l.b16 %v380
      %v1180 = vunpack.c.h.b16 %v380
      %v1181 = vunpack.c.l.b16 %v381
      %v1182 = vunpack.c.h.b16 %v381
      %v1183 = vunpack.c.l.b16 %v382
      %v1184 = vunpack.c.h.b16 %v382
      %v1185 = vunpack.c.l.b16 %v383
      %v1186 = vunpack.c.h.b16 %v383
      %v1187 = vunpack.c.l.b16 %v384
      %v1188 = vunpack.c.h.b16 %v384
      %v1189 = vunpack.c.l.b16 %v385
      %v1190 = vunpack.c.h.b16 %v385
      %v1191 = vunpack.c.l.b16 %v386
      %v1192 = vunpack.c.h.b16 %v386
      %v1193 = vunpack.c.l.b16 %v387
      %v1194 = vunpack.c.h.b16 %v387
      %v1195 = vunpack.c.l.b16 %v388
      %v1196 = vunpack.c.h.b16 %v388
      %v1197 = vunpack.c.l.b16 %v389
      %v1198 = vunpack.c.h.b16 %v389
      %v1199 = vunpack.c.l.b16 %v390
      %v1200 = vunpack.c.h.b16 %v390
      %v1201 = vunpack.c.l.b16 %v391
      %v1202 = vunpack.c.h.b16 %v391
      %v1203 = vunpack.c.l.b16 %v392
      %v1204 = vunpack.c.h.b16 %v392
      %v1205 = vunpack.c.l.b16 %v393
      %v1206 = vunpack.c.h.b16 %v393
      %v1207 = vunpack.c.l.b16 %v394
      %v1208 = vunpack.c.h.b16 %v394
      %v1209 = vunpack.c.l.b16 %v395
      %v1210 = vunpack.c.h.b16 %v395
      %v1211 = vunpack.c.l.b16 %v396
      %v1212 = vunpack.c.h.b16 %v396
      %v1213 = vunpack.c.l.b16 %v397
      %v1214 = vunpack.c.h.b16 %v397
      %v1215 = vunpack.c.l.b16 %v398
      %v1216 = vunpack.c.h.b16 %v398
      %v1217 = vunpack.c.l.b16 %v399
      %v1218 = vunpack.c.h.b16 %v399
      %v1219 = vunpack.c.l.b16 %v400
      %v1220 = vunpack.c.h.b16 %v400
      %v1221 = vunpack.c.l.b16 %v401
      %v1222 = vunpack.c.h.b16 %v401
      %v1223 = vunpack.c.l.b16 %v402
      %v1224 = vunpack.c.h.b16 %v402
      %v1225 = vunpack.c.l.b16 %v403
      %v1226 = vunpack.c.h.b16 %v403
      %v1227 = vunpack.c.l.b16 %v404
      %v1228 = vunpack.c.h.b16 %v404
      %v1229 = vunpack.c.l.b16 %v405
      %v1230 = vunpack.c.h.b16 %v405
      %v1231 = vunpack.c.l.b16 %v406
      %v1232 = vunpack.c.h.b16 %v406
      %v1233 = vunpack.c.l.b16 %v407
      %v1234 = vunpack.c.h.b16 %v407
      %v1235 = vunpack.c.l.b16 %v408
      %v1236 = vunpack.c.h.b16 %v408
      %v1237 = vunpack.c.l.b16 %v409
      %v1238 = vunpack.c.h.b16 %v409
      %v1239 = vunpack.c.l.b16 %v410
      %v1240 = vunpack.c.h.b16 %v410
      %v1241 = vunpack.c.l.b16 %v411
      %v1242 = vunpack.c.h.b16 %v411
      %v1243 = vunpack.c.l.b16 %v412
      %v1244 = vunpack.c.h.b16 %v412
      %v1245 = vunpack.c.l.b16 %v413
      %v1246 = vunpack.c.h.b16 %v413
      %v1247 = vunpack.c.l.b16 %v414
      %v1248 = vunpack.c.h.b16 %v414
      %v1249 = vunpack.c.l.b16 %v415
      %v1250 = vunpack.c.h.b16 %v415
      %v1251 = vunpack.c.l.b16 %v416
      %v1252 = vunpack.c.h.b16 %v416
      %v1253 = vunpack.c.l.b16 %v417
      %v1254 = vunpack.c.h.b16 %v417
      %v1255 = vunpack.c.l.b16 %v418
      %v1256 = vunpack.c.h.b16 %v418
      %v1257 = vunpack.c.l.b16 %v419
      %v1258 = vunpack.c.h.b16 %v419
      %v1259 = vunpack.c.l.b16 %v420
      %v1260 = vunpack.c.h.b16 %v420
      %v1261 = vunpack.c.l.b16 %v421
      %v1262 = vunpack.c.h.b16 %v421
      %v1263 = vunpack.c.l.b16 %v422
      %v1264 = vunpack.c.h.b16 %v422
      %v1265 = vunpack.c.l.b16 %v423
      %v1266 = vunpack.c.h.b16 %v423
      %v1267 = vunpack.c.l.b16 %v424
      %v1268 = vunpack.c.h.b16 %v424
      %v1269 = vunpack.c.l.b16 %v425
      %v1270 = vunpack.c.h.b16 %v425
      %v1271 = vunpack.c.l.b16 %v426
      %v1272 = vunpack.c.h.b16 %v426
      %v1273 = vunpack.c.l.b16 %v427
      %v1274 = vunpack.c.h.b16 %v427
      %v1275 = vunpack.c.l.b16 %v428
      %v1276 = vunpack.c.h.b16 %v428
      %v1277 = vunpack.c.l.b16 %v429
      %v1278 = vunpack.c.h.b16 %v429
      %v1279 = vunpack.c.l.b16 %v430
      %v1280 = vunpack.c.h.b16 %v430
      %v1281 = vunpack.c.l.b16 %v431
      %v1282 = vunpack.c.h.b16 %v431
      %v1283 = vunpack.c.l.b16 %v432
      %v1284 = vunpack.c.h.b16 %v432
      %v1285 = vunpack.c.l.b16 %v433
      %v1286 = vunpack.c.h.b16 %v433
      %v1287 = vunpack.c.l.b16 %v434
      %v1288 = vunpack.c.h.b16 %v434
      %v1289 = vunpack.c.l.b16 %v435
      %v1290 = vunpack.c.h.b16 %v435
      %v1291 = vunpack.c.l.b16 %v436
      %v1292 = vunpack.c.h.b16 %v436
      %v1293 = vunpack.c.l.b16 %v437
      %v1294 = vunpack.c.h.b16 %v437
      %v1295 = vunpack.c.l.b16 %v438
      %v1296 = vunpack.c.h.b16 %v438
      %v1297 = vunpack.c.l.b16 %v439
      %v1298 = vunpack.c.h.b16 %v439
      %v1299 = vunpack.c.l.b16 %v440
      %v1300 = vunpack.c.h.b16 %v440
      %v1301 = vunpack.c.l.b16 %v441
      %v1302 = vunpack.c.h.b16 %v441
      %v1303 = vunpack.c.l.b16 %v442
      %v1304 = vunpack.c.h.b16 %v442
      %v1305 = vunpack.c.l.b16 %v443
      %v1306 = vunpack.c.h.b16 %v443
      %v1307 = vunpack.c.l.b16 %v444
      %v1308 = vunpack.c.h.b16 %v444
      %v1309 = vunpack.c.l.b16 %v445
      %v1310 = vunpack.c.h.b16 %v445
      %v1311 = vunpack.c.l.b16 %v446
      %v1312 = vunpack.c.h.b16 %v446
      %v1313 = vunpack.c.l.b16 %v447
      %v1314 = vunpack.c.h.b16 %v447
      %v1315 = vunpack.c.l.b16 %v448
      %v1316 = vunpack.c.h.b16 %v448
      %v1317 = vunpack.c.l.b16 %v449
      %v1318 = vunpack.c.h.b16 %v449
      %v1319 = vunpack.c.l.b16 %v450
      %v1320 = vunpack.c.h.b16 %v450
      %v1321 = vunpack.c.l.b16 %v451
      %v1322 = vunpack.c.h.b16 %v451
      %v1323 = vunpack.c.l.b16 %v452
      %v1324 = vunpack.c.h.b16 %v452
      %v1325 = vunpack.c.l.b16 %v453
      %v1326 = vunpack.c.h.b16 %v453
      %v1327 = vunpack.c.l.b16 %v454
      %v1328 = vunpack.c.h.b16 %v454
      %v1329 = vunpack.c.l.b16 %v455
      %v1330 = vunpack.c.h.b16 %v455
      %v1331 = vunpack.c.l.b16 %v456
      %v1332 = vunpack.c.h.b16 %v456
      %v1333 = vunpack.c.l.b16 %v457
      %v1334 = vunpack.c.h.b16 %v457
      %v1335 = vunpack.c.l.b16 %v458
      %v1336 = vunpack.c.h.b16 %v458
      %v1337 = vunpack.c.l.b16 %v459
      %v1338 = vunpack.c.h.b16 %v459
      %v1339 = vunpack.c.l.b16 %v460
      %v1340 = vunpack.c.h.b16 %v460
      %v1341 = vunpack.c.l.b16 %v461
      %v1342 = vunpack.c.h.b16 %v461
      %v1343 = vunpack.c.l.b16 %v462
      %v1344 = vunpack.c.h.b16 %v462
      %v1345 = vunpack.c.l.b16 %v463
      %v1346 = vunpack.c.h.b16 %v463
      %v1347 = vunpack.c.l.b16 %v464
      %v1348 = vunpack.c.h.b16 %v464
      %v1349 = vunpack.c.l.b16 %v465
      %v1350 = vunpack.c.h.b16 %v465
      %v1351 = vunpack.c.l.b16 %v466
      %v1352 = vunpack.c.h.b16 %v466
      %v1353 = vunpack.c.l.b16 %v467
      %v1354 = vunpack.c.h.b16 %v467
      %v1355 = vunpack.c.l.b16 %v468
      %v1356 = vunpack.c.h.b16 %v468
      %v1357 = vunpack.c.l.b16 %v469
      %v1358 = vunpack.c.h.b16 %v469
      %v1359 = vunpack.c.l.b16 %v470
      %v1360 = vunpack.c.h.b16 %v470
      %v1361 = vunpack.c.l.b16 %v471
      %v1362 = vunpack.c.h.b16 %v471
      %v1363 = vunpack.c.l.b16 %v472
      %v1364 = vunpack.c.h.b16 %v472
      %v1365 = vpack.c.b16 %v1113, %v1109
      %v1366 = vpack.c.b16 %v1114, %v1110
      %v1367 = vpack.c.b16 %v1115, %v1111
      %v1368 = vpack.c.b16 %v1116, %v1112
      %v1369 = vpack.c.b16 %v1121, %v1117
      %v1370 = vpack.c.b16 %v1122, %v1118
      %v1371 = vpack.c.b16 %v1123, %v1119
      %v1372 = vpack.c.b16 %v1124, %v1120
      %v1373 = vpack.c.b16 %v1129, %v1125
      %v1374 = vpack.c.b16 %v1130, %v1126
      %v1375 = vpack.c.b16 %v1131, %v1127
      %v1376 = vpack.c.b16 %v1132, %v1128
      %v1377 = vpack.c.b16 %v1137, %v1133
      %v1378 = vpack.c.b16 %v1138, %v1134
      %v1379 = vpack.c.b16 %v1139, %v1135
      %v1380 = vpack.c.b16 %v1140, %v1136
      %v1381 = vpack.c.b16 %v1145, %v1141
      %v1382 = vpack.c.b16 %v1146, %v1142
      %v1383 = vpack.c.b16 %v1147, %v1143
      %v1384 = vpack.c.b16 %v1148, %v1144
      %v1385 = vpack.c.b16 %v1153, %v1149
      %v1386 = vpack.c.b16 %v1154, %v1150
      %v1387 = vpack.c.b16 %v1155, %v1151
      %v1388 = vpack.c.b16 %v1156, %v1152
      %v1389 = vpack.c.b16 %v1161, %v1157
      %v1390 = vpack.c.b16 %v1162, %v1158
      %v1391 = vpack.c.b16 %v1163, %v1159
      %v1392 = vpack.c.b16 %v1164, %v1160
      %v1393 = vpack.c.b16 %v1169, %v1165
      %v1394 = vpack.c.b16 %v1170, %v1166
      %v1395 = vpack.c.b16 %v1171, %v1167
      %v1396 = vpack.c.b16 %v1172, %v1168
      %v1397 = vpack.c.b16 %v1177, %v1173
      %v1398 = vpack.c.b16 %v1178, %v1174
      %v1399 = vpack.c.b16 %v1179, %v1175
      %v1400 = vpack.c.b16 %v1180, %v1176
      %v1401 = vpack.c.b16 %v1185, %v1181
      %v1402 = vpack.c.b16 %v1186, %v1182
      %v1403 = vpack.c.b16 %v1187, %v1183
      %v1404 = vpack.c.b16 %v1188, %v1184
      %v1405 = vpack.c.b16 %v1193, %v1189
      %v1406 = vpack.c.b16 %v1194, %v1190
      %v1407 = vpack.c.b16 %v1195, %v1191
      %v1408 = vpack.c.b16 %v1196, %v1192
      %v1409 = vpack.c.b16 %v1201, %v1197
      %v1410 = vpack.c.b16 %v1202, %v1198
      %v1411 = vpack.c.b16 %v1203, %v1199
      %v1412 = vpack.c.b16 %v1204, %v1200
      %v1413 = vpack.c.b16 %v1209, %v1205
      %v1414 = vpack.c.b16 %v1210, %v1206
      %v1415 = vpack.c.b16 %v1211, %v1207
      %v1416 = vpack.c.b16 %v1212, %v1208
      %v1417 = vpack.c.b16 %v1217, %v1213
      %v1418 = vpack.c.b16 %v1218, %v1214
      %v1419 = vpack.c.b16 %v1219, %v1215
      %v1420 = vpack.c.b16 %v1220, %v1216
      %v1421 = vpack.c.b16 %v1225, %v1221
      %v1422 = vpack.c.b16 %v1226, %v1222
      %v1423 = vpack.c.b16 %v1227, %v1223
      %v1424 = vpack.c.b16 %v1228, %v1224
      %v1425 = vpack.c.b16 %v1233, %v1229
      %v1426 = vpack.c.b16 %v1234, %v1230
      %v1427 = vpack.c.b16 %v1235, %v1231
      %v1428 = vpack.c.b16 %v1236, %v1232
      %v1429 = vpack.c.b16 %v1241, %v1237
      %v1430 = vpack.c.b16 %v1242, %v1238
      %v1431 = vpack.c.b16 %v1243, %v1239
      %v1432 = vpack.c.b16 %v1244, %v1240
      %v1433 = vpack.c.b16 %v1249, %v1245
      %v1434 = vpack.c.b16 %v1250, %v1246
      %v1435 = vpack.c.b16 %v1251, %v1247
      %v1436 = vpack.c.b16 %v1252, %v1248
      %v1437 = vpack.c.b16 %v1257, %v1253
      %v1438 = vpack.c.b16 %v1258, %v1254
      %v1439 = vpack.c.b16 %v1259, %v1255
      %v1440 = vpack.c.b16 %v1260, %v1256
      %v1441 = vpack.c.b16 %v1265, %v1261
      %v1442 = vpack.c.b16 %v1266, %v1262
      %v1443 = vpack.c.b16 %v1267, %v1263
      %v1444 = vpack.c.b16 %v1268, %v1264
      %v1445 = vpack.c.b16 %v1273, %v1269
      %v1446 = vpack.c.b16 %v1274, %v1270
      %v1447 = vpack.c.b16 %v1275, %v1271
      %v1448 = vpack.c.b16 %v1276, %v1272
      %v1449 = vpack.c.b16 %v1281, %v1277
      %v1450 = vpack.c.b16 %v1282, %v1278
      %v1451 = vpack.c.b16 %v1283, %v1279
      %v1452 = vpack.c.b16 %v1284, %v1280
      %v1453 = vpack.c.b16 %v1289, %v1285
      %v1454 = vpack.c.b16 %v1290, %v1286
      %v1455 = vpack.c.b16 %v1291, %v1287
      %v1456 = vpack.c.b16 %v1292, %v1288
      %v1457 = vpack.c.b16 %v1297, %v1293
      %v1458 = vpack.c.b16 %v1298, %v1294
      %v1459 = vpack.c.b16 %v1299, %v1295
      %v1460 = vpack.c.b16 %v1300, %v1296
      %v1461 = vpack.c.b16 %v1305, %v1301
      %v1462 = vpack.c.b16 %v1306, %v1302
      %v1463 = vpack.c.b16 %v1307, %v1303
      %v1464 = vpack.c.b16 %v1308, %v1304
      %v1465 = vpack.c.b16 %v1313, %v1309
      %v1466 = vpack.c.b16 %v1314, %v1310
      %v1467 = vpack.c.b16 %v1315, %v1311
      %v1468 = vpack.c.b16 %v1316, %v1312
      %v1469 = vpack.c.b16 %v1321, %v1317
      %v1470 = vpack.c.b16 %v1322, %v1318
      %v1471 = vpack.c.b16 %v1323, %v1319
      %v1472 = vpack.c.b16 %v1324, %v1320
      %v1473 = vpack.c.b16 %v1329, %v1325
      %v1474 = vpack.c.b16 %v1330, %v1326
      %v1475 = vpack.c.b16 %v1331, %v1327
      %v1476 = vpack.c.b16 %v1332, %v1328
      %v1477 = vpack.c.b16 %v1337, %v1333
      %v1478 = vpack.c.b16 %v1338, %v1334
      %v1479 = vpack.c.b16 %v1339, %v1335
      %v1480 = vpack.c.b16 %v1340, %v1336
      %v1481 = vpack.c.b16 %v1345, %v1341
      %v1482 = vpack.c.b16 %v1346, %v1342
      %v1483 = vpack.c.b16 %v1347, %v1343
      %v1484 = vpack.c.b16 %v1348, %v1344
      %v1485 = vpack.c.b16 %v1353, %v1349
      %v1486 = vpack.c.b16 %v1354, %v1350
      %v1487 = vpack.c.b16 %v1355, %v1351
      %v1488 = vpack.c.b16 %v1356, %v1352
      %v1489 = vpack.c.b16 %v1361, %v1357
      %v1490 = vpack.c.b16 %v1362, %v1358
      %v1491 = vpack.c.b16 %v1363, %v1359
      %v1492 = vpack.c.b16 %v1364, %v1360
      %1621 = vmatprep.subr.bf16.mxu0 %v1366
      %1622 = vmatpush1.bf16.msra.mxu0 %v1365
      %1623 = vmatprep.subr.bf16.mxu0 %v1370
      %1624 = vmatpush1.bf16.msra.mxu0 %v1369
      %1625 = vmatprep.subr.bf16.mxu0 %v1374
      %1626 = vmatpush1.bf16.msra.mxu0 %v1373
      %1627 = vmatprep.subr.bf16.mxu0 %v1378
      %1628 = vmatpush1.bf16.msra.mxu0 %v1377
      %1629 = vmatprep.subr.bf16.mxu0 %v1382
      %1630 = vmatpush1.bf16.msra.mxu0 %v1381
      %1631 = vmatprep.subr.bf16.mxu0 %v1386
      %1632 = vmatpush1.bf16.msra.mxu0 %v1385
      %1633 = vmatprep.subr.bf16.mxu0 %v1390
      %1634 = vmatpush1.bf16.msra.mxu0 %v1389
      %1635 = vmatprep.subr.bf16.mxu0 %v1394
      %1636 = vmatpush1.bf16.msra.mxu0 %v1393
      %1637 = vmatprep.subr.bf16.mxu0 %v1398
      %1638 = vmatpush1.bf16.msra.mxu0 %v1397
      %1639 = vmatprep.subr.bf16.mxu0 %v1402
      %1640 = vmatpush1.bf16.msra.mxu0 %v1401
      %1641 = vmatprep.subr.bf16.mxu0 %v1406
      %1642 = vmatpush1.bf16.msra.mxu0 %v1405
      %1643 = vmatprep.subr.bf16.mxu0 %v1410
      %1644 = vmatpush1.bf16.msra.mxu0 %v1409
      %1645 = vmatprep.subr.bf16.mxu0 %v1414
      %1646 = vmatpush1.bf16.msra.mxu0 %v1413
      %1647 = vmatprep.subr.bf16.mxu0 %v1418
      %1648 = vmatpush1.bf16.msra.mxu0 %v1417
      %1649 = vmatprep.subr.bf16.mxu0 %v1422
      %1650 = vmatpush1.bf16.msra.mxu0 %v1421
      %1651 = vmatprep.subr.bf16.mxu0 %v1426
      %1652 = vmatpush1.bf16.msra.mxu0 %v1425
      %1653 = vmatprep.mubr.bf16.mxu0 %v974
      %1654 = vmatmul.mubr.bf16.gmra.mrb[0].mxu0 %v973
      %v1655 = vpop.f32.mrb[0].mxu0
      %v1656 = vadd.f32 %v920, %v1655
      %v1657 = vpop.f32.mrb[0].mxu0
      %v1658 = vadd.f32 %v922, %v1657
      %v1659 = vpop.f32.mrb[0].mxu0
      %v1660 = vpop.f32.mrb[0].mxu0
      %1661 = vdwg.mxu0
      %1662 = vmatprep.subr.bf16.mxu0 %v1430
      %1663 = vmatpush1.bf16.msra.mxu0 %v1429
      %1664 = vmatprep.subr.bf16.mxu0 %v1434
      %1665 = vmatpush1.bf16.msra.mxu0 %v1433
      %1666 = vmatprep.subr.bf16.mxu0 %v1438
      %1667 = vmatpush1.bf16.msra.mxu0 %v1437
      %1668 = vmatprep.subr.bf16.mxu0 %v1442
      %1669 = vmatpush1.bf16.msra.mxu0 %v1441
      %1670 = vmatprep.subr.bf16.mxu0 %v1446
      %1671 = vmatpush1.bf16.msra.mxu0 %v1445
      %1672 = vmatprep.subr.bf16.mxu0 %v1450
      %1673 = vmatpush1.bf16.msra.mxu0 %v1449
      %1674 = vmatprep.subr.bf16.mxu0 %v1454
      %1675 = vmatpush1.bf16.msra.mxu0 %v1453
      %1676 = vmatprep.subr.bf16.mxu0 %v1458
      %1677 = vmatpush1.bf16.msra.mxu0 %v1457
      %1678 = vmatprep.subr.bf16.mxu0 %v1462
      %1679 = vmatpush1.bf16.msra.mxu0 %v1461
      %1680 = vmatprep.subr.bf16.mxu0 %v1466
      %1681 = vmatpush1.bf16.msra.mxu0 %v1465
      %1682 = vmatprep.subr.bf16.mxu0 %v1470
      %1683 = vmatpush1.bf16.msra.mxu0 %v1469
      %1684 = vmatprep.subr.bf16.mxu0 %v1474
      %1685 = vmatpush1.bf16.msra.mxu0 %v1473
      %1686 = vmatprep.subr.bf16.mxu0 %v1478
      %1687 = vmatpush1.bf16.msra.mxu0 %v1477
      %1688 = vmatprep.subr.bf16.mxu0 %v1482
      %1689 = vmatpush1.bf16.msra.mxu0 %v1481
      %1690 = vmatprep.subr.bf16.mxu0 %v1486
      %1691 = vmatpush1.bf16.msra.mxu0 %v1485
      %1692 = vmatprep.subr.bf16.mxu0 %v1490
      %1693 = vmatpush1.bf16.msra.mxu0 %v1489
      %1694 = vmatprep.mubr.bf16.mxu0 %v976
      %1695 = vmatmul.mubr.bf16.gmra.mrb[0].mxu0 %v975
      %v1696 = vpop.f32.mrb[0].mxu0
      %v1697 = vadd.f32 %v1656, %v1696
      %v1698 = vpop.f32.mrb[0].mxu0
      %v1699 = vadd.f32 %v1658, %v1698
      %v1700 = vpop.f32.mrb[0].mxu0
      %v1701 = vpop.f32.mrb[0].mxu0
      %1702 = vdwg.mxu0
      %1703 = vmatprep.subr.bf16.mxu0 %v1368
      %1704 = vmatpush1.bf16.msra.mxu0 %v1367
      %1705 = vmatprep.subr.bf16.mxu0 %v1372
      %1706 = vmatpush1.bf16.msra.mxu0 %v1371
      %1707 = vmatprep.subr.bf16.mxu0 %v1376
      %1708 = vmatpush1.bf16.msra.mxu0 %v1375
      %1709 = vmatprep.subr.bf16.mxu0 %v1380
      %1710 = vmatpush1.bf16.msra.mxu0 %v1379
      %1711 = vmatprep.subr.bf16.mxu0 %v1384
      %1712 = vmatpush1.bf16.msra.mxu0 %v1383
      %1713 = vmatprep.subr.bf16.mxu0 %v1388
      %1714 = vmatpush1.bf16.msra.mxu0 %v1387
      %1715 = vmatprep.subr.bf16.mxu0 %v1392
      %1716 = vmatpush1.bf16.msra.mxu0 %v1391
      %1717 = vmatprep.subr.bf16.mxu0 %v1396
      %1718 = vmatpush1.bf16.msra.mxu0 %v1395
      %1719 = vmatprep.subr.bf16.mxu0 %v1400
      %1720 = vmatpush1.bf16.msra.mxu0 %v1399
      %1721 = vmatprep.subr.bf16.mxu0 %v1404
      %1722 = vmatpush1.bf16.msra.mxu0 %v1403
      %1723 = vmatprep.subr.bf16.mxu0 %v1408
      %1724 = vmatpush1.bf16.msra.mxu0 %v1407
      %1725 = vmatprep.subr.bf16.mxu0 %v1412
      %1726 = vmatpush1.bf16.msra.mxu0 %v1411
      %1727 = vmatprep.subr.bf16.mxu0 %v1416
      %1728 = vmatpush1.bf16.msra.mxu0 %v1415
      %1729 = vmatprep.subr.bf16.mxu0 %v1420
      %1730 = vmatpush1.bf16.msra.mxu0 %v1419
      %1731 = vmatprep.subr.bf16.mxu0 %v1424
      %1732 = vmatpush1.bf16.msra.mxu0 %v1423
      %1733 = vmatprep.subr.bf16.mxu0 %v1428
      %1734 = vmatpush1.bf16.msra.mxu0 %v1427
      %1735 = vmatprep.mubr.bf16.mxu0 %v974
      %1736 = vmatmul.mubr.bf16.gmra.mrb[0].mxu0 %v973
      %v1737 = vpop.f32.mrb[0].mxu0
      %v1738 = vadd.f32 %v961, %v1737
      %v1739 = vpop.f32.mrb[0].mxu0
      %v1740 = vadd.f32 %v963, %v1739
      %v1741 = vpop.f32.mrb[0].mxu0
      %v1742 = vpop.f32.mrb[0].mxu0
      %1743 = vdwg.mxu0
      %1744 = vmatprep.subr.bf16.mxu0 %v1432
      %1745 = vmatpush1.bf16.msra.mxu0 %v1431
      %1746 = vmatprep.subr.bf16.mxu0 %v1436
      %1747 = vmatpush1.bf16.msra.mxu0 %v1435
      %1748 = vmatprep.subr.bf16.mxu0 %v1440
      %1749 = vmatpush1.bf16.msra.mxu0 %v1439
      %1750 = vmatprep.subr.bf16.mxu0 %v1444
      %1751 = vmatpush1.bf16.msra.mxu0 %v1443
      %1752 = vmatprep.subr.bf16.mxu0 %v1448
      %1753 = vmatpush1.bf16.msra.mxu0 %v1447
      %1754 = vmatprep.subr.bf16.mxu0 %v1452
      %1755 = vmatpush1.bf16.msra.mxu0 %v1451
      %1756 = vmatprep.subr.bf16.mxu0 %v1456
      %1757 = vmatpush1.bf16.msra.mxu0 %v1455
      %1758 = vmatprep.subr.bf16.mxu0 %v1460
      %1759 = vmatpush1.bf16.msra.mxu0 %v1459
      %1760 = vmatprep.subr.bf16.mxu0 %v1464
      %1761 = vmatpush1.bf16.msra.mxu0 %v1463
      %1762 = vmatprep.subr.bf16.mxu0 %v1468
      %1763 = vmatpush1.bf16.msra.mxu0 %v1467
      %1764 = vmatprep.subr.bf16.mxu0 %v1472
      %1765 = vmatpush1.bf16.msra.mxu0 %v1471
      %1766 = vmatprep.subr.bf16.mxu0 %v1476
      %1767 = vmatpush1.bf16.msra.mxu0 %v1475
      %1768 = vmatprep.subr.bf16.mxu0 %v1480
      %1769 = vmatpush1.bf16.msra.mxu0 %v1479
      %1770 = vmatprep.subr.bf16.mxu0 %v1484
      %1771 = vmatpush1.bf16.msra.mxu0 %v1483
      %1772 = vmatprep.subr.bf16.mxu0 %v1488
      %1773 = vmatpush1.bf16.msra.mxu0 %v1487
      %1774 = vmatprep.subr.bf16.mxu0 %v1492
      %1775 = vmatpush1.bf16.msra.mxu0 %v1491
      %1776 = vmatprep.mubr.bf16.mxu0 %v976
      %1777 = vmatmul.mubr.bf16.gmra.mrb[0].mxu0 %v975
      %v1778 = vpop.f32.mrb[0].mxu0
      %v1779 = vadd.f32 %v1738, %v1778
      %v1780 = vpop.f32.mrb[0].mxu0
      %v1781 = vadd.f32 %v1740, %v1780
      %v1782 = vpop.f32.mrb[0].mxu0
      %v1783 = vpop.f32.mrb[0].mxu0
      %1784 = vdwg.mxu0
      %v1785 = vld [vmem:[%s4] sm:$0xf]
      %v1787 = vlaneseq
      %v1788 = vshrl.u32 %v1787, 7
      %v1789 = vsub.s32 0, %v1788
      %v1790 = vrot.slane %v1785, %v1789
      %v1791 = vlaneseq
      %v1792 = vshrl.u32 %v1791, 7
      %v1793 = vsub.s32 1, %v1792
      %v1794 = vrot.slane %v1785, %v1793
      %v1795 = vlaneseq
      %v1796 = vshrl.u32 %v1795, 7
      %v1797 = vsub.s32 2, %v1796
      %v1798 = vrot.slane %v1785, %v1797
      %v1799 = vlaneseq
      %v1800 = vshrl.u32 %v1799, 7
      %v1801 = vsub.s32 3, %v1800
      %v1802 = vrot.slane %v1785, %v1801
      %v1807 = vmul.f32 %v1697, %v1790
      %v1808 = vmul.f32 %v1699, %v1794
      %v1809 = vmul.f32 %v1779, %v1798
      %v1810 = vmul.f32 %v1781, %v1802
      %v1811 = vld [vmem:[%s5] sm:$0xf]
      %v1813 = vlaneseq
      %v1814 = vshrl.u32 %v1813, 7
      %v1815 = vsub.s32 0, %v1814
      %v1816 = vrot.slane %v1811, %v1815
      %v1817 = vlaneseq
      %v1818 = vshrl.u32 %v1817, 7
      %v1819 = vsub.s32 1, %v1818
      %v1820 = vrot.slane %v1811, %v1819
      %v1821 = vlaneseq
      %v1822 = vshrl.u32 %v1821, 7
      %v1823 = vsub.s32 2, %v1822
      %v1824 = vrot.slane %v1811, %v1823
      %v1825 = vlaneseq
      %v1826 = vshrl.u32 %v1825, 7
      %v1827 = vsub.s32 3, %v1826
      %v1828 = vrot.slane %v1811, %v1827
      %v1833 = vadd.f32 %v1807, %v1816
      %v1834 = vadd.f32 %v1808, %v1820
      %v1835 = vadd.f32 %v1809, %v1824
      %v1836 = vadd.f32 %v1810, %v1828
      %s1837 = smul.u32 %s22, 8
      %v1838 = vstv %s1837
      %v1839 = vadd.s32 %v1838, %v487
      %vm1840 = vcmp.lt.s32.totalorder %v1839, 2
      %v1841 = vsel %vm1840, 1, 0
      %vm1842 = vcmp.eq.s32.totalorder %v1841, 1
      %v1843 = vsel %vm1842, %v1833, 0.0
      %v1844 = vsel %vm1842, %v1834, 0.0
      %v1845 = vsel %vm1842, %v1835, 0.0
      %v1846 = vsel %vm1842, %v1836, 0.0
      %v1847 = vpack.c.bf16 %v1843, %v1843
      %v1848 = vpack.c.bf16 %v1844, %v1844
      %v1849 = vpack.c.bf16 %v1845, %v1845
      %v1850 = vpack.c.bf16 %v1846, %v1846
      %v1855 = vunpack.c.l.b16 %v1847
      %v1856 = vunpack.c.l.b16 %v1848
      %v1857 = vunpack.c.l.b16 %v1849
      %v1858 = vunpack.c.l.b16 %v1850
      %v1859 = vpack.c.b16 %v1856, %v1855
      %v1860 = vpack.c.b16 %v1858, %v1857
      %1863 = vst [vmem:[%s342] sm:$0xff] %v1859
      %1864 = vst [vmem:[%s342 + $0x8] sm:$0xff] %v1860
      %p1865 = scmp.lt.s32.totalorder %s21, 1
      %s1866 = scalar_select %p1865, %s21, 1
      %p1867 = scmp.lt.s32.totalorder %s22, 0
      %s1868 = scalar_select %p1867, %s22, 0
      %s1869 = smul.addr %s1868, 4
      %s1870 = smul.addr %s1866, 4
      %s1871 = sadd.s32 %s1869, %s1870
      %s1872 = smul.addr %s1871, 4
      %s1873 = scalar_lea.vmem %s6, %s1872
      // Predicated region
      $region45: #{graph_encoder_forward.7} parent=43 // pred_check
        %p1874 = pneg %p195
      $region46: #{graph_encoder_forward.7} parent=43 // pred_check_branch
        %1876 = sbr.rel (%p1874) target = $region48
      $region47: #{graph_encoder_forward.7} parent=43 // pred_region
        _
      $region48: #{graph_encoder_forward.7} parent=43 // pred_fallthru
        _
    $region44: #{graph_encoder_forward.7} parent=5 // pred_fallthru
      _
    %p1877 = scmp.le.s32.totalorder 2, %s12
    // Predicated region
    $region49: #{graph_encoder_forward.7} parent=5 // pred_check
      %p1878 = pneg %p1877
    $region50: #{graph_encoder_forward.7} parent=5 // pred_check_branch
      %1880 = sbr.rel (%p1878) target = $region52
    $region51: #{graph_encoder_forward.7} parent=5 // pred_region
      %s1881 = ssub.s32 %s12, 2
      // Predicated region
      $region53: #{graph_encoder_forward.7} parent=51 // pred_check
        %p1882 = pneg %p201
      $region54: #{graph_encoder_forward.7} parent=51 // pred_check_branch
        %1884 = sbr.rel (%p1882) target = $region56
      $region55: #{graph_encoder_forward.7} parent=51 // pred_region
        %p1885 = scmp.lt.s32.totalorder %s23, 1
        %s1886 = scalar_select %p1885, %s23, 1
        %p1887 = scmp.lt.s32.totalorder %s24, 0
        %s1888 = scalar_select %p1887, %s24, 0
        %s1889 = smul.addr %s1888, 4
        %s1890 = smul.addr %s1886, 4
        %s1891 = sadd.s32 %s1889, %s1890
        %s1892 = smul.addr %s1891, 4
        %s1893 = scalar_lea.vmem %s6, %s1892
      $region56: #{graph_encoder_forward.7} parent=51 // pred_fallthru
        _
    $region52: #{graph_encoder_forward.7} parent=5 // pred_fallthru
      _
  $region6: #{graph_encoder_forward.7} parent=0 // loop_footer
    %s16 = sadd.s32 1, %s12
  $region7: #{graph_encoder_forward.7} parent=0 // loop_footer_branch
    %11 = sbr.rel target = $region3
  $region8: #{graph_encoder_forward.7} parent=0 // loop_exit
    _

// kernel: graph_encoder_forward.9
$region0: #{graph_encoder_forward.9}
  #allocation0 [shape = 'u32[]', space=smem, size = 0x4, offset = 0x4, fixed_abs, tag = 'smem constant byte address 0x4 - core index']
  #allocation1 [shape = 'u32[144,128]{1,0:T(1,128)}', space=vmem, size = 0x12000, scoped, tag = 'internal scratch']
  %s0 = inlined_call_operand.vmem [shape: f32[2,512], index: 0, kind: input, shape index: {}]
  %s1 = inlined_call_operand.vmem [shape: f32[512,1024], index: 1, kind: input, shape index: {}]
  %s2 = inlined_call_operand.vmem [shape: f32[1,1024], index: 2, kind: input, shape index: {}]
  %s3 = inlined_call_operand.hbm [shape: f32[2,1024], index: 3, kind: output, shape index: {}]
  %s4 = sld [smem:[#allocation0]]
  $region22: #{graph_encoder_forward.9} parent=0
    _
  %s6 = ssub.s32 1, %s4
  %s7 = scalar_select 0, %s6, %s4
  $region1: #{graph_encoder_forward.9} parent=0
    #allocation2 [shape = 'u8[8192]{0}', space=vmem, size = 0x2000, scoped, tag = 'output window, operand 0, single buffered']
    #allocation3 [shape = 's32[1]{0}', space=sflag, size = 0x4, scoped, tag = 'scoped memory for graph_encoder_forward.9']
    %8 = vsyncpa [#allocation3], 0
    // Predicated region
    $region2: #{graph_encoder_forward.9} parent=1 // pred_check
      _
    $region3: #{graph_encoder_forward.9} parent=1 // pred_check_branch
      %10 = sbr.rel (0) target = $region5
    $region4: #{graph_encoder_forward.9} parent=1 // pred_region
      _
    $region5: #{graph_encoder_forward.9} parent=1 // pred_fallthru
      _
    // Predicated region
    $region6: #{graph_encoder_forward.9} parent=1 // pred_check
      _
    $region7: #{graph_encoder_forward.9} parent=1 // pred_check_branch
      %12 = sbr.rel (0) target = $region9
    $region8: #{graph_encoder_forward.9} parent=1 // pred_region
      _
    $region9: #{graph_encoder_forward.9} parent=1 // pred_fallthru
      _
    // Predicated region
    $region10: #{graph_encoder_forward.9} parent=1 // pred_check
      _
    $region11: #{graph_encoder_forward.9} parent=1 // pred_check_branch
      %14 = sbr.rel (0) target = $region13
    $region12: #{graph_encoder_forward.9} parent=1 // pred_region
      _
    $region13: #{graph_encoder_forward.9} parent=1 // pred_fallthru
      _
    %v15 = vld [vmem:[%s0] sm:$0xff]
    %v16 = vld [vmem:[%s1] sm:$0xff]
    %v17 = vld [vmem:[%s1 + $0x8] sm:$0xff]
    %v18 = vld [vmem:[%s1 + $0x10] sm:$0xff]
    %v19 = vld [vmem:[%s1 + $0x18] sm:$0xff]
    %v20 = vld [vmem:[%s1 + $0x20] sm:$0xff]
    %v21 = vld [vmem:[%s1 + $0x28] sm:$0xff]
    %v22 = vld [vmem:[%s1 + $0x30] sm:$0xff]
    %v23 = vld [vmem:[%s1 + $0x38] sm:$0xff]
    %v24 = vld [vmem:[%s1 + $0x40] sm:$0xff]
    %v25 = vld [vmem:[%s1 + $0x48] sm:$0xff]
    %v26 = vld [vmem:[%s1 + $0x50] sm:$0xff]
    %v27 = vld [vmem:[%s1 + $0x58] sm:$0xff]
    %v28 = vld [vmem:[%s1 + $0x60] sm:$0xff]
    %v29 = vld [vmem:[%s1 + $0x68] sm:$0xff]
    %v30 = vld [vmem:[%s1 + $0x70] sm:$0xff]
    %v31 = vld [vmem:[%s1 + $0x78] sm:$0xff]
    %v32 = vld [vmem:[%s1 + $0x80] sm:$0xff]
    %v33 = vld [vmem:[%s1 + $0x88] sm:$0xff]
    %v34 = vld [vmem:[%s1 + $0x90] sm:$0xff]
    %v35 = vld [vmem:[%s1 + $0x98] sm:$0xff]
    %v36 = vld [vmem:[%s1 + $0xa0] sm:$0xff]
    %v37 = vld [vmem:[%s1 + $0xa8] sm:$0xff]
    %v38 = vld [vmem:[%s1 + $0xb0] sm:$0xff]
    %v39 = vld [vmem:[%s1 + $0xb8] sm:$0xff]
    %v40 = vld [vmem:[%s1 + $0xc0] sm:$0xff]
    %v41 = vld [vmem:[%s1 + $0xc8] sm:$0xff]
    %v42 = vld [vmem:[%s1 + $0xd0] sm:$0xff]
    %v43 = vld [vmem:[%s1 + $0xd8] sm:$0xff]
    %v44 = vld [vmem:[%s1 + $0xe0] sm:$0xff]
    %v45 = vld [vmem:[%s1 + $0xe8] sm:$0xff]
    %v46 = vld [vmem:[%s1 + $0xf0] sm:$0xff]
    %v47 = vld [vmem:[%s1 + $0xf8] sm:$0xff]
    %v48 = vld [vmem:[%s1 + $0x100] sm:$0xff]
    %v49 = vld [vmem:[%s1 + $0x108] sm:$0xff]
    %v50 = vld [vmem:[%s1 + $0x110] sm:$0xff]
    %v51 = vld [vmem:[%s1 + $0x118] sm:$0xff]
    %v52 = vld [vmem:[%s1 + $0x120] sm:$0xff]
    %v53 = vld [vmem:[%s1 + $0x128] sm:$0xff]
    %v54 = vld [vmem:[%s1 + $0x130] sm:$0xff]
    %v55 = vld [vmem:[%s1 + $0x138] sm:$0xff]
    %v56 = vld [vmem:[%s1 + $0x140] sm:$0xff]
    %v57 = vld [vmem:[%s1 + $0x148] sm:$0xff]
    %v58 = vld [vmem:[%s1 + $0x150] sm:$0xff]
    %v59 = vld [vmem:[%s1 + $0x158] sm:$0xff]
    %v60 = vld [vmem:[%s1 + $0x160] sm:$0xff]
    %v61 = vld [vmem:[%s1 + $0x168] sm:$0xff]
    %v62 = vld [vmem:[%s1 + $0x170] sm:$0xff]
    %v63 = vld [vmem:[%s1 + $0x178] sm:$0xff]
    %v64 = vld [vmem:[%s1 + $0x180] sm:$0xff]
    %v65 = vld [vmem:[%s1 + $0x188] sm:$0xff]
    %v66 = vld [vmem:[%s1 + $0x190] sm:$0xff]
    %v67 = vld [vmem:[%s1 + $0x198] sm:$0xff]
    %v68 = vld [vmem:[%s1 + $0x1a0] sm:$0xff]
    %v69 = vld [vmem:[%s1 + $0x1a8] sm:$0xff]
    %v70 = vld [vmem:[%s1 + $0x1b0] sm:$0xff]
    %v71 = vld [vmem:[%s1 + $0x1b8] sm:$0xff]
    %v72 = vld [vmem:[%s1 + $0x1c0] sm:$0xff]
    %v73 = vld [vmem:[%s1 + $0x1c8] sm:$0xff]
    %v74 = vld [vmem:[%s1 + $0x1d0] sm:$0xff]
    %v75 = vld [vmem:[%s1 + $0x1d8] sm:$0xff]
    %v76 = vld [vmem:[%s1 + $0x1e0] sm:$0xff]
    %v77 = vld [vmem:[%s1 + $0x1e8] sm:$0xff]
    %v78 = vld [vmem:[%s1 + $0x1f0] sm:$0xff]
    %v79 = vld [vmem:[%s1 + $0x1f8] sm:$0xff]
    %v80 = vld [vmem:[%s1 + $0x200] sm:$0xff]
    %v81 = vld [vmem:[%s1 + $0x208] sm:$0xff]
    %v82 = vld [vmem:[%s1 + $0x210] sm:$0xff]
    %v83 = vld [vmem:[%s1 + $0x218] sm:$0xff]
    %v84 = vld [vmem:[%s1 + $0x220] sm:$0xff]
    %v85 = vld [vmem:[%s1 + $0x228] sm:$0xff]
    %v86 = vld [vmem:[%s1 + $0x230] sm:$0xff]
    %v87 = vld [vmem:[%s1 + $0x238] sm:$0xff]
    %v88 = vld [vmem:[%s1 + $0x240] sm:$0xff]
    %v89 = vld [vmem:[%s1 + $0x248] sm:$0xff]
    %v90 = vld [vmem:[%s1 + $0x250] sm:$0xff]
    %v91 = vld [vmem:[%s1 + $0x258] sm:$0xff]
    %v92 = vld [vmem:[%s1 + $0x260] sm:$0xff]
    %v93 = vld [vmem:[%s1 + $0x268] sm:$0xff]
    %v94 = vld [vmem:[%s1 + $0x270] sm:$0xff]
    %v95 = vld [vmem:[%s1 + $0x278] sm:$0xff]
    %v96 = vld [vmem:[%s1 + $0x280] sm:$0xff]
    %v97 = vld [vmem:[%s1 + $0x288] sm:$0xff]
    %v98 = vld [vmem:[%s1 + $0x290] sm:$0xff]
    %v99 = vld [vmem:[%s1 + $0x298] sm:$0xff]
    %v100 = vld [vmem:[%s1 + $0x2a0] sm:$0xff]
    %v101 = vld [vmem:[%s1 + $0x2a8] sm:$0xff]
    %v102 = vld [vmem:[%s1 + $0x2b0] sm:$0xff]
    %v103 = vld [vmem:[%s1 + $0x2b8] sm:$0xff]
    %v104 = vld [vmem:[%s1 + $0x2c0] sm:$0xff]
    %v105 = vld [vmem:[%s1 + $0x2c8] sm:$0xff]
    %v106 = vld [vmem:[%s1 + $0x2d0] sm:$0xff]
    %v107 = vld [vmem:[%s1 + $0x2d8] sm:$0xff]
    %v108 = vld [vmem:[%s1 + $0x2e0] sm:$0xff]
    %v109 = vld [vmem:[%s1 + $0x2e8] sm:$0xff]
    %v110 = vld [vmem:[%s1 + $0x2f0] sm:$0xff]
    %v111 = vld [vmem:[%s1 + $0x2f8] sm:$0xff]
    %v112 = vld [vmem:[%s1 + $0x300] sm:$0xff]
    %v113 = vld [vmem:[%s1 + $0x308] sm:$0xff]
    %v114 = vld [vmem:[%s1 + $0x310] sm:$0xff]
    %v115 = vld [vmem:[%s1 + $0x318] sm:$0xff]
    %v116 = vld [vmem:[%s1 + $0x320] sm:$0xff]
    %v117 = vld [vmem:[%s1 + $0x328] sm:$0xff]
    %v118 = vld [vmem:[%s1 + $0x330] sm:$0xff]
    %v119 = vld [vmem:[%s1 + $0x338] sm:$0xff]
    %v120 = vld [vmem:[%s1 + $0x340] sm:$0xff]
    %v121 = vld [vmem:[%s1 + $0x348] sm:$0xff]
    %v122 = vld [vmem:[%s1 + $0x350] sm:$0xff]
    %v123 = vld [vmem:[%s1 + $0x358] sm:$0xff]
    %v124 = vld [vmem:[%s1 + $0x360] sm:$0xff]
    %v125 = vld [vmem:[%s1 + $0x368] sm:$0xff]
    %v126 = vld [vmem:[%s1 + $0x370] sm:$0xff]
    %v127 = vld [vmem:[%s1 + $0x378] sm:$0xff]
    %v128 = vld [vmem:[%s1 + $0x380] sm:$0xff]
    %v129 = vld [vmem:[%s1 + $0x388] sm:$0xff]
    %v130 = vld [vmem:[%s1 + $0x390] sm:$0xff]
    %v131 = vld [vmem:[%s1 + $0x398] sm:$0xff]
    %v132 = vld [vmem:[%s1 + $0x3a0] sm:$0xff]
    %v133 = vld [vmem:[%s1 + $0x3a8] sm:$0xff]
    %v134 = vld [vmem:[%s1 + $0x3b0] sm:$0xff]
    %v135 = vld [vmem:[%s1 + $0x3b8] sm:$0xff]
    %v136 = vld [vmem:[%s1 + $0x3c0] sm:$0xff]
    %v137 = vld [vmem:[%s1 + $0x3c8] sm:$0xff]
    %v138 = vld [vmem:[%s1 + $0x3d0] sm:$0xff]
    %v139 = vld [vmem:[%s1 + $0x3d8] sm:$0xff]
    %v140 = vld [vmem:[%s1 + $0x3e0] sm:$0xff]
    %v141 = vld [vmem:[%s1 + $0x3e8] sm:$0xff]
    %v142 = vld [vmem:[%s1 + $0x3f0] sm:$0xff]
    %v143 = vld [vmem:[%s1 + $0x3f8] sm:$0xff]
    %v144 = vld [vmem:[%s1 + $0x400] sm:$0xff]
    %v145 = vld [vmem:[%s1 + $0x408] sm:$0xff]
    %v146 = vld [vmem:[%s1 + $0x410] sm:$0xff]
    %v147 = vld [vmem:[%s1 + $0x418] sm:$0xff]
    %v148 = vld [vmem:[%s1 + $0x420] sm:$0xff]
    %v149 = vld [vmem:[%s1 + $0x428] sm:$0xff]
    %v150 = vld [vmem:[%s1 + $0x430] sm:$0xff]
    %v151 = vld [vmem:[%s1 + $0x438] sm:$0xff]
    %v152 = vld [vmem:[%s1 + $0x440] sm:$0xff]
    %v153 = vld [vmem:[%s1 + $0x448] sm:$0xff]
    %v154 = vld [vmem:[%s1 + $0x450] sm:$0xff]
    %v155 = vld [vmem:[%s1 + $0x458] sm:$0xff]
    %v156 = vld [vmem:[%s1 + $0x460] sm:$0xff]
    %v157 = vld [vmem:[%s1 + $0x468] sm:$0xff]
    %v158 = vld [vmem:[%s1 + $0x470] sm:$0xff]
    %v159 = vld [vmem:[%s1 + $0x478] sm:$0xff]
    %v160 = vld [vmem:[%s1 + $0x480] sm:$0xff]
    %v161 = vld [vmem:[%s1 + $0x488] sm:$0xff]
    %v162 = vld [vmem:[%s1 + $0x490] sm:$0xff]
    %v163 = vld [vmem:[%s1 + $0x498] sm:$0xff]
    %v164 = vld [vmem:[%s1 + $0x4a0] sm:$0xff]
    %v165 = vld [vmem:[%s1 + $0x4a8] sm:$0xff]
    %v166 = vld [vmem:[%s1 + $0x4b0] sm:$0xff]
    %v167 = vld [vmem:[%s1 + $0x4b8] sm:$0xff]
    %v168 = vld [vmem:[%s1 + $0x4c0] sm:$0xff]
    %v169 = vld [vmem:[%s1 + $0x4c8] sm:$0xff]
    %v170 = vld [vmem:[%s1 + $0x4d0] sm:$0xff]
    %v171 = vld [vmem:[%s1 + $0x4d8] sm:$0xff]
    %v172 = vld [vmem:[%s1 + $0x4e0] sm:$0xff]
    %v173 = vld [vmem:[%s1 + $0x4e8] sm:$0xff]
    %v174 = vld [vmem:[%s1 + $0x4f0] sm:$0xff]
    %v175 = vld [vmem:[%s1 + $0x4f8] sm:$0xff]
    %v176 = vld [vmem:[%s1 + $0x500] sm:$0xff]
    %v177 = vld [vmem:[%s1 + $0x508] sm:$0xff]
    %v178 = vld [vmem:[%s1 + $0x510] sm:$0xff]
    %v179 = vld [vmem:[%s1 + $0x518] sm:$0xff]
    %v180 = vld [vmem:[%s1 + $0x520] sm:$0xff]
    %v181 = vld [vmem:[%s1 + $0x528] sm:$0xff]
    %v182 = vld [vmem:[%s1 + $0x530] sm:$0xff]
    %v183 = vld [vmem:[%s1 + $0x538] sm:$0xff]
    %v184 = vld [vmem:[%s1 + $0x540] sm:$0xff]
    %v185 = vld [vmem:[%s1 + $0x548] sm:$0xff]
    %v186 = vld [vmem:[%s1 + $0x550] sm:$0xff]
    %v187 = vld [vmem:[%s1 + $0x558] sm:$0xff]
    %v188 = vld [vmem:[%s1 + $0x560] sm:$0xff]
    %v189 = vld [vmem:[%s1 + $0x568] sm:$0xff]
    %v190 = vld [vmem:[%s1 + $0x570] sm:$0xff]
    %v191 = vld [vmem:[%s1 + $0x578] sm:$0xff]
    %v192 = vld [vmem:[%s1 + $0x580] sm:$0xff]
    %v193 = vld [vmem:[%s1 + $0x588] sm:$0xff]
    %v194 = vld [vmem:[%s1 + $0x590] sm:$0xff]
    %v195 = vld [vmem:[%s1 + $0x598] sm:$0xff]
    %v196 = vld [vmem:[%s1 + $0x5a0] sm:$0xff]
    %v197 = vld [vmem:[%s1 + $0x5a8] sm:$0xff]
    %v198 = vld [vmem:[%s1 + $0x5b0] sm:$0xff]
    %v199 = vld [vmem:[%s1 + $0x5b8] sm:$0xff]
    %v200 = vld [vmem:[%s1 + $0x5c0] sm:$0xff]
    %v201 = vld [vmem:[%s1 + $0x5c8] sm:$0xff]
    %v202 = vld [vmem:[%s1 + $0x5d0] sm:$0xff]
    %v203 = vld [vmem:[%s1 + $0x5d8] sm:$0xff]
    %v204 = vld [vmem:[%s1 + $0x5e0] sm:$0xff]
    %v205 = vld [vmem:[%s1 + $0x5e8] sm:$0xff]
    %v206 = vld [vmem:[%s1 + $0x5f0] sm:$0xff]
    %v207 = vld [vmem:[%s1 + $0x5f8] sm:$0xff]
    %v208 = vld [vmem:[%s1 + $0x600] sm:$0xff]
    %v209 = vld [vmem:[%s1 + $0x608] sm:$0xff]
    %v210 = vld [vmem:[%s1 + $0x610] sm:$0xff]
    %v211 = vld [vmem:[%s1 + $0x618] sm:$0xff]
    %v212 = vld [vmem:[%s1 + $0x620] sm:$0xff]
    %v213 = vld [vmem:[%s1 + $0x628] sm:$0xff]
    %v214 = vld [vmem:[%s1 + $0x630] sm:$0xff]
    %v215 = vld [vmem:[%s1 + $0x638] sm:$0xff]
    %v216 = vld [vmem:[%s1 + $0x640] sm:$0xff]
    %v217 = vld [vmem:[%s1 + $0x648] sm:$0xff]
    %v218 = vld [vmem:[%s1 + $0x650] sm:$0xff]
    %v219 = vld [vmem:[%s1 + $0x658] sm:$0xff]
    %v220 = vld [vmem:[%s1 + $0x660] sm:$0xff]
    %v221 = vld [vmem:[%s1 + $0x668] sm:$0xff]
    %v222 = vld [vmem:[%s1 + $0x670] sm:$0xff]
    %v223 = vld [vmem:[%s1 + $0x678] sm:$0xff]
    %v224 = vld [vmem:[%s1 + $0x680] sm:$0xff]
    %v225 = vld [vmem:[%s1 + $0x688] sm:$0xff]
    %v226 = vld [vmem:[%s1 + $0x690] sm:$0xff]
    %v227 = vld [vmem:[%s1 + $0x698] sm:$0xff]
    %v228 = vld [vmem:[%s1 + $0x6a0] sm:$0xff]
    %v229 = vld [vmem:[%s1 + $0x6a8] sm:$0xff]
    %v230 = vld [vmem:[%s1 + $0x6b0] sm:$0xff]
    %v231 = vld [vmem:[%s1 + $0x6b8] sm:$0xff]
    %v232 = vld [vmem:[%s1 + $0x6c0] sm:$0xff]
    %v233 = vld [vmem:[%s1 + $0x6c8] sm:$0xff]
    %v234 = vld [vmem:[%s1 + $0x6d0] sm:$0xff]
    %v235 = vld [vmem:[%s1 + $0x6d8] sm:$0xff]
    %v236 = vld [vmem:[%s1 + $0x6e0] sm:$0xff]
    %v237 = vld [vmem:[%s1 + $0x6e8] sm:$0xff]
    %v238 = vld [vmem:[%s1 + $0x6f0] sm:$0xff]
    %v239 = vld [vmem:[%s1 + $0x6f8] sm:$0xff]
    %v240 = vld [vmem:[%s1 + $0x700] sm:$0xff]
    %v241 = vld [vmem:[%s1 + $0x708] sm:$0xff]
    %v242 = vld [vmem:[%s1 + $0x710] sm:$0xff]
    %v243 = vld [vmem:[%s1 + $0x718] sm:$0xff]
    %v244 = vld [vmem:[%s1 + $0x720] sm:$0xff]
    %v245 = vld [vmem:[%s1 + $0x728] sm:$0xff]
    %v246 = vld [vmem:[%s1 + $0x730] sm:$0xff]
    %v247 = vld [vmem:[%s1 + $0x738] sm:$0xff]
    %v248 = vld [vmem:[%s1 + $0x740] sm:$0xff]
    %v249 = vld [vmem:[%s1 + $0x748] sm:$0xff]
    %v250 = vld [vmem:[%s1 + $0x750] sm:$0xff]
    %v251 = vld [vmem:[%s1 + $0x758] sm:$0xff]
    %v252 = vld [vmem:[%s1 + $0x760] sm:$0xff]
    %v253 = vld [vmem:[%s1 + $0x768] sm:$0xff]
    %v254 = vld [vmem:[%s1 + $0x770] sm:$0xff]
    %v255 = vld [vmem:[%s1 + $0x778] sm:$0xff]
    %v256 = vld [vmem:[%s1 + $0x780] sm:$0xff]
    %v257 = vld [vmem:[%s1 + $0x788] sm:$0xff]
    %v258 = vld [vmem:[%s1 + $0x790] sm:$0xff]
    %v259 = vld [vmem:[%s1 + $0x798] sm:$0xff]
    %v260 = vld [vmem:[%s1 + $0x7a0] sm:$0xff]
    %v261 = vld [vmem:[%s1 + $0x7a8] sm:$0xff]
    %v262 = vld [vmem:[%s1 + $0x7b0] sm:$0xff]
    %v263 = vld [vmem:[%s1 + $0x7b8] sm:$0xff]
    %v264 = vld [vmem:[%s1 + $0x7c0] sm:$0xff]
    %v265 = vld [vmem:[%s1 + $0x7c8] sm:$0xff]
    %v266 = vld [vmem:[%s1 + $0x7d0] sm:$0xff]
    %v267 = vld [vmem:[%s1 + $0x7d8] sm:$0xff]
    %v268 = vld [vmem:[%s1 + $0x7e0] sm:$0xff]
    %v269 = vld [vmem:[%s1 + $0x7e8] sm:$0xff]
    %v270 = vld [vmem:[%s1 + $0x7f0] sm:$0xff]
    %v271 = vld [vmem:[%s1 + $0x7f8] sm:$0xff]
    %v272 = vld [vmem:[%s1 + $0x800] sm:$0xff]
    %v273 = vld [vmem:[%s1 + $0x808] sm:$0xff]
    %v274 = vld [vmem:[%s1 + $0x810] sm:$0xff]
    %v275 = vld [vmem:[%s1 + $0x818] sm:$0xff]
    %v276 = vld [vmem:[%s1 + $0x820] sm:$0xff]
    %v277 = vld [vmem:[%s1 + $0x828] sm:$0xff]
    %v278 = vld [vmem:[%s1 + $0x830] sm:$0xff]
    %v279 = vld [vmem:[%s1 + $0x838] sm:$0xff]
    %v280 = vld [vmem:[%s1 + $0x840] sm:$0xff]
    %v281 = vld [vmem:[%s1 + $0x848] sm:$0xff]
    %v282 = vld [vmem:[%s1 + $0x850] sm:$0xff]
    %v283 = vld [vmem:[%s1 + $0x858] sm:$0xff]
    %v284 = vld [vmem:[%s1 + $0x860] sm:$0xff]
    %v285 = vld [vmem:[%s1 + $0x868] sm:$0xff]
    %v286 = vld [vmem:[%s1 + $0x870] sm:$0xff]
    %v287 = vld [vmem:[%s1 + $0x878] sm:$0xff]
    %v288 = vld [vmem:[%s1 + $0x880] sm:$0xff]
    %v289 = vld [vmem:[%s1 + $0x888] sm:$0xff]
    %v290 = vld [vmem:[%s1 + $0x890] sm:$0xff]
    %v291 = vld [vmem:[%s1 + $0x898] sm:$0xff]
    %v292 = vld [vmem:[%s1 + $0x8a0] sm:$0xff]
    %v293 = vld [vmem:[%s1 + $0x8a8] sm:$0xff]
    %v294 = vld [vmem:[%s1 + $0x8b0] sm:$0xff]
    %v295 = vld [vmem:[%s1 + $0x8b8] sm:$0xff]
    %v296 = vld [vmem:[%s1 + $0x8c0] sm:$0xff]
    %v297 = vld [vmem:[%s1 + $0x8c8] sm:$0xff]
    %v298 = vld [vmem:[%s1 + $0x8d0] sm:$0xff]
    %v299 = vld [vmem:[%s1 + $0x8d8] sm:$0xff]
    %v300 = vld [vmem:[%s1 + $0x8e0] sm:$0xff]
    %v301 = vld [vmem:[%s1 + $0x8e8] sm:$0xff]
    %v302 = vld [vmem:[%s1 + $0x8f0] sm:$0xff]
    %v303 = vld [vmem:[%s1 + $0x8f8] sm:$0xff]
    %v304 = vld [vmem:[%s1 + $0x900] sm:$0xff]
    %v305 = vld [vmem:[%s1 + $0x908] sm:$0xff]
    %v306 = vld [vmem:[%s1 + $0x910] sm:$0xff]
    %v307 = vld [vmem:[%s1 + $0x918] sm:$0xff]
    %v308 = vld [vmem:[%s1 + $0x920] sm:$0xff]
    %v309 = vld [vmem:[%s1 + $0x928] sm:$0xff]
    %v310 = vld [vmem:[%s1 + $0x930] sm:$0xff]
    %v311 = vld [vmem:[%s1 + $0x938] sm:$0xff]
    %v312 = vld [vmem:[%s1 + $0x940] sm:$0xff]
    %v313 = vld [vmem:[%s1 + $0x948] sm:$0xff]
    %v314 = vld [vmem:[%s1 + $0x950] sm:$0xff]
    %v315 = vld [vmem:[%s1 + $0x958] sm:$0xff]
    %v316 = vld [vmem:[%s1 + $0x960] sm:$0xff]
    %v317 = vld [vmem:[%s1 + $0x968] sm:$0xff]
    %v318 = vld [vmem:[%s1 + $0x970] sm:$0xff]
    %v319 = vld [vmem:[%s1 + $0x978] sm:$0xff]
    %v320 = vld [vmem:[%s1 + $0x980] sm:$0xff]
    %v321 = vld [vmem:[%s1 + $0x988] sm:$0xff]
    %v322 = vld [vmem:[%s1 + $0x990] sm:$0xff]
    %v323 = vld [vmem:[%s1 + $0x998] sm:$0xff]
    %v324 = vld [vmem:[%s1 + $0x9a0] sm:$0xff]
    %v325 = vld [vmem:[%s1 + $0x9a8] sm:$0xff]
    %v326 = vld [vmem:[%s1 + $0x9b0] sm:$0xff]
    %v327 = vld [vmem:[%s1 + $0x9b8] sm:$0xff]
    %v328 = vld [vmem:[%s1 + $0x9c0] sm:$0xff]
    %v329 = vld [vmem:[%s1 + $0x9c8] sm:$0xff]
    %v330 = vld [vmem:[%s1 + $0x9d0] sm:$0xff]
    %v331 = vld [vmem:[%s1 + $0x9d8] sm:$0xff]
    %v332 = vld [vmem:[%s1 + $0x9e0] sm:$0xff]
    %v333 = vld [vmem:[%s1 + $0x9e8] sm:$0xff]
    %v334 = vld [vmem:[%s1 + $0x9f0] sm:$0xff]
    %v335 = vld [vmem:[%s1 + $0x9f8] sm:$0xff]
    %v336 = vld [vmem:[%s1 + $0xa00] sm:$0xff]
    %v337 = vld [vmem:[%s1 + $0xa08] sm:$0xff]
    %v338 = vld [vmem:[%s1 + $0xa10] sm:$0xff]
    %v339 = vld [vmem:[%s1 + $0xa18] sm:$0xff]
    %v340 = vld [vmem:[%s1 + $0xa20] sm:$0xff]
    %v341 = vld [vmem:[%s1 + $0xa28] sm:$0xff]
    %v342 = vld [vmem:[%s1 + $0xa30] sm:$0xff]
    %v343 = vld [vmem:[%s1 + $0xa38] sm:$0xff]
    %v344 = vld [vmem:[%s1 + $0xa40] sm:$0xff]
    %v345 = vld [vmem:[%s1 + $0xa48] sm:$0xff]
    %v346 = vld [vmem:[%s1 + $0xa50] sm:$0xff]
    %v347 = vld [vmem:[%s1 + $0xa58] sm:$0xff]
    %v348 = vld [vmem:[%s1 + $0xa60] sm:$0xff]
    %v349 = vld [vmem:[%s1 + $0xa68] sm:$0xff]
    %v350 = vld [vmem:[%s1 + $0xa70] sm:$0xff]
    %v351 = vld [vmem:[%s1 + $0xa78] sm:$0xff]
    %v352 = vld [vmem:[%s1 + $0xa80] sm:$0xff]
    %v353 = vld [vmem:[%s1 + $0xa88] sm:$0xff]
    %v354 = vld [vmem:[%s1 + $0xa90] sm:$0xff]
    %v355 = vld [vmem:[%s1 + $0xa98] sm:$0xff]
    %v356 = vld [vmem:[%s1 + $0xaa0] sm:$0xff]
    %v357 = vld [vmem:[%s1 + $0xaa8] sm:$0xff]
    %v358 = vld [vmem:[%s1 + $0xab0] sm:$0xff]
    %v359 = vld [vmem:[%s1 + $0xab8] sm:$0xff]
    %v360 = vld [vmem:[%s1 + $0xac0] sm:$0xff]
    %v361 = vld [vmem:[%s1 + $0xac8] sm:$0xff]
    %v362 = vld [vmem:[%s1 + $0xad0] sm:$0xff]
    %v363 = vld [vmem:[%s1 + $0xad8] sm:$0xff]
    %v364 = vld [vmem:[%s1 + $0xae0] sm:$0xff]
    %v365 = vld [vmem:[%s1 + $0xae8] sm:$0xff]
    %v366 = vld [vmem:[%s1 + $0xaf0] sm:$0xff]
    %v367 = vld [vmem:[%s1 + $0xaf8] sm:$0xff]
    %v368 = vld [vmem:[%s1 + $0xb00] sm:$0xff]
    %v369 = vld [vmem:[%s1 + $0xb08] sm:$0xff]
    %v370 = vld [vmem:[%s1 + $0xb10] sm:$0xff]
    %v371 = vld [vmem:[%s1 + $0xb18] sm:$0xff]
    %v372 = vld [vmem:[%s1 + $0xb20] sm:$0xff]
    %v373 = vld [vmem:[%s1 + $0xb28] sm:$0xff]
    %v374 = vld [vmem:[%s1 + $0xb30] sm:$0xff]
    %v375 = vld [vmem:[%s1 + $0xb38] sm:$0xff]
    %v376 = vld [vmem:[%s1 + $0xb40] sm:$0xff]
    %v377 = vld [vmem:[%s1 + $0xb48] sm:$0xff]
    %v378 = vld [vmem:[%s1 + $0xb50] sm:$0xff]
    %v379 = vld [vmem:[%s1 + $0xb58] sm:$0xff]
    %v380 = vld [vmem:[%s1 + $0xb60] sm:$0xff]
    %v381 = vld [vmem:[%s1 + $0xb68] sm:$0xff]
    %v382 = vld [vmem:[%s1 + $0xb70] sm:$0xff]
    %v383 = vld [vmem:[%s1 + $0xb78] sm:$0xff]
    %v384 = vld [vmem:[%s1 + $0xb80] sm:$0xff]
    %v385 = vld [vmem:[%s1 + $0xb88] sm:$0xff]
    %v386 = vld [vmem:[%s1 + $0xb90] sm:$0xff]
    %v387 = vld [vmem:[%s1 + $0xb98] sm:$0xff]
    %v388 = vld [vmem:[%s1 + $0xba0] sm:$0xff]
    %v389 = vld [vmem:[%s1 + $0xba8] sm:$0xff]
    %v390 = vld [vmem:[%s1 + $0xbb0] sm:$0xff]
    %v391 = vld [vmem:[%s1 + $0xbb8] sm:$0xff]
    %v392 = vld [vmem:[%s1 + $0xbc0] sm:$0xff]
    %v393 = vld [vmem:[%s1 + $0xbc8] sm:$0xff]
    %v394 = vld [vmem:[%s1 + $0xbd0] sm:$0xff]
    %v395 = vld [vmem:[%s1 + $0xbd8] sm:$0xff]
    %v396 = vld [vmem:[%s1 + $0xbe0] sm:$0xff]
    %v397 = vld [vmem:[%s1 + $0xbe8] sm:$0xff]
    %v398 = vld [vmem:[%s1 + $0xbf0] sm:$0xff]
    %v399 = vld [vmem:[%s1 + $0xbf8] sm:$0xff]
    %v400 = vld [vmem:[%s1 + $0xc00] sm:$0xff]
    %v401 = vld [vmem:[%s1 + $0xc08] sm:$0xff]
    %v402 = vld [vmem:[%s1 + $0xc10] sm:$0xff]
    %v403 = vld [vmem:[%s1 + $0xc18] sm:$0xff]
    %v404 = vld [vmem:[%s1 + $0xc20] sm:$0xff]
    %v405 = vld [vmem:[%s1 + $0xc28] sm:$0xff]
    %v406 = vld [vmem:[%s1 + $0xc30] sm:$0xff]
    %v407 = vld [vmem:[%s1 + $0xc38] sm:$0xff]
    %v408 = vld [vmem:[%s1 + $0xc40] sm:$0xff]
    %v409 = vld [vmem:[%s1 + $0xc48] sm:$0xff]
    %v410 = vld [vmem:[%s1 + $0xc50] sm:$0xff]
    %v411 = vld [vmem:[%s1 + $0xc58] sm:$0xff]
    %v412 = vld [vmem:[%s1 + $0xc60] sm:$0xff]
    %v413 = vld [vmem:[%s1 + $0xc68] sm:$0xff]
    %v414 = vld [vmem:[%s1 + $0xc70] sm:$0xff]
    %v415 = vld [vmem:[%s1 + $0xc78] sm:$0xff]
    %v416 = vld [vmem:[%s1 + $0xc80] sm:$0xff]
    %v417 = vld [vmem:[%s1 + $0xc88] sm:$0xff]
    %v418 = vld [vmem:[%s1 + $0xc90] sm:$0xff]
    %v419 = vld [vmem:[%s1 + $0xc98] sm:$0xff]
    %v420 = vld [vmem:[%s1 + $0xca0] sm:$0xff]
    %v421 = vld [vmem:[%s1 + $0xca8] sm:$0xff]
    %v422 = vld [vmem:[%s1 + $0xcb0] sm:$0xff]
    %v423 = vld [vmem:[%s1 + $0xcb8] sm:$0xff]
    %v424 = vld [vmem:[%s1 + $0xcc0] sm:$0xff]
    %v425 = vld [vmem:[%s1 + $0xcc8] sm:$0xff]
    %v426 = vld [vmem:[%s1 + $0xcd0] sm:$0xff]
    %v427 = vld [vmem:[%s1 + $0xcd8] sm:$0xff]
    %v428 = vld [vmem:[%s1 + $0xce0] sm:$0xff]
    %v429 = vld [vmem:[%s1 + $0xce8] sm:$0xff]
    %v430 = vld [vmem:[%s1 + $0xcf0] sm:$0xff]
    %v431 = vld [vmem:[%s1 + $0xcf8] sm:$0xff]
    %v432 = vld [vmem:[%s1 + $0xd00] sm:$0xff]
    %v433 = vld [vmem:[%s1 + $0xd08] sm:$0xff]
    %v434 = vld [vmem:[%s1 + $0xd10] sm:$0xff]
    %v435 = vld [vmem:[%s1 + $0xd18] sm:$0xff]
    %v436 = vld [vmem:[%s1 + $0xd20] sm:$0xff]
    %v437 = vld [vmem:[%s1 + $0xd28] sm:$0xff]
    %v438 = vld [vmem:[%s1 + $0xd30] sm:$0xff]
    %v439 = vld [vmem:[%s1 + $0xd38] sm:$0xff]
    %v440 = vld [vmem:[%s1 + $0xd40] sm:$0xff]
    %v441 = vld [vmem:[%s1 + $0xd48] sm:$0xff]
    %v442 = vld [vmem:[%s1 + $0xd50] sm:$0xff]
    %v443 = vld [vmem:[%s1 + $0xd58] sm:$0xff]
    %v444 = vld [vmem:[%s1 + $0xd60] sm:$0xff]
    %v445 = vld [vmem:[%s1 + $0xd68] sm:$0xff]
    %v446 = vld [vmem:[%s1 + $0xd70] sm:$0xff]
    %v447 = vld [vmem:[%s1 + $0xd78] sm:$0xff]
    %v448 = vld [vmem:[%s1 + $0xd80] sm:$0xff]
    %v449 = vld [vmem:[%s1 + $0xd88] sm:$0xff]
    %v450 = vld [vmem:[%s1 + $0xd90] sm:$0xff]
    %v451 = vld [vmem:[%s1 + $0xd98] sm:$0xff]
    %v452 = vld [vmem:[%s1 + $0xda0] sm:$0xff]
    %v453 = vld [vmem:[%s1 + $0xda8] sm:$0xff]
    %v454 = vld [vmem:[%s1 + $0xdb0] sm:$0xff]
    %v455 = vld [vmem:[%s1 + $0xdb8] sm:$0xff]
    %v456 = vld [vmem:[%s1 + $0xdc0] sm:$0xff]
    %v457 = vld [vmem:[%s1 + $0xdc8] sm:$0xff]
    %v458 = vld [vmem:[%s1 + $0xdd0] sm:$0xff]
    %v459 = vld [vmem:[%s1 + $0xdd8] sm:$0xff]
    %v460 = vld [vmem:[%s1 + $0xde0] sm:$0xff]
    %v461 = vld [vmem:[%s1 + $0xde8] sm:$0xff]
    %v462 = vld [vmem:[%s1 + $0xdf0] sm:$0xff]
    %v463 = vld [vmem:[%s1 + $0xdf8] sm:$0xff]
    %v464 = vld [vmem:[%s1 + $0xe00] sm:$0xff]
    %v465 = vld [vmem:[%s1 + $0xe08] sm:$0xff]
    %v466 = vld [vmem:[%s1 + $0xe10] sm:$0xff]
    %v467 = vld [vmem:[%s1 + $0xe18] sm:$0xff]
    %v468 = vld [vmem:[%s1 + $0xe20] sm:$0xff]
    %v469 = vld [vmem:[%s1 + $0xe28] sm:$0xff]
    %v470 = vld [vmem:[%s1 + $0xe30] sm:$0xff]
    %v471 = vld [vmem:[%s1 + $0xe38] sm:$0xff]
    %v472 = vld [vmem:[%s1 + $0xe40] sm:$0xff]
    %v473 = vld [vmem:[%s1 + $0xe48] sm:$0xff]
    %v474 = vld [vmem:[%s1 + $0xe50] sm:$0xff]
    %v475 = vld [vmem:[%s1 + $0xe58] sm:$0xff]
    %v476 = vld [vmem:[%s1 + $0xe60] sm:$0xff]
    %v477 = vld [vmem:[%s1 + $0xe68] sm:$0xff]
    %v478 = vld [vmem:[%s1 + $0xe70] sm:$0xff]
    %v479 = vld [vmem:[%s1 + $0xe78] sm:$0xff]
    %v480 = vld [vmem:[%s1 + $0xe80] sm:$0xff]
    %v481 = vld [vmem:[%s1 + $0xe88] sm:$0xff]
    %v482 = vld [vmem:[%s1 + $0xe90] sm:$0xff]
    %v483 = vld [vmem:[%s1 + $0xe98] sm:$0xff]
    %v484 = vld [vmem:[%s1 + $0xea0] sm:$0xff]
    %v485 = vld [vmem:[%s1 + $0xea8] sm:$0xff]
    %v486 = vld [vmem:[%s1 + $0xeb0] sm:$0xff]
    %v487 = vld [vmem:[%s1 + $0xeb8] sm:$0xff]
    %v488 = vld [vmem:[%s1 + $0xec0] sm:$0xff]
    %v489 = vld [vmem:[%s1 + $0xec8] sm:$0xff]
    %v490 = vld [vmem:[%s1 + $0xed0] sm:$0xff]
    %v491 = vld [vmem:[%s1 + $0xed8] sm:$0xff]
    %v492 = vld [vmem:[%s1 + $0xee0] sm:$0xff]
    %v493 = vld [vmem:[%s1 + $0xee8] sm:$0xff]
    %v494 = vld [vmem:[%s1 + $0xef0] sm:$0xff]
    %v495 = vld [vmem:[%s1 + $0xef8] sm:$0xff]
    %v496 = vld [vmem:[%s1 + $0xf00] sm:$0xff]
    %v497 = vld [vmem:[%s1 + $0xf08] sm:$0xff]
    %v498 = vld [vmem:[%s1 + $0xf10] sm:$0xff]
    %v499 = vld [vmem:[%s1 + $0xf18] sm:$0xff]
    %v500 = vld [vmem:[%s1 + $0xf20] sm:$0xff]
    %v501 = vld [vmem:[%s1 + $0xf28] sm:$0xff]
    %v502 = vld [vmem:[%s1 + $0xf30] sm:$0xff]
    %v503 = vld [vmem:[%s1 + $0xf38] sm:$0xff]
    %v504 = vld [vmem:[%s1 + $0xf40] sm:$0xff]
    %v505 = vld [vmem:[%s1 + $0xf48] sm:$0xff]
    %v506 = vld [vmem:[%s1 + $0xf50] sm:$0xff]
    %v507 = vld [vmem:[%s1 + $0xf58] sm:$0xff]
    %v508 = vld [vmem:[%s1 + $0xf60] sm:$0xff]
    %v509 = vld [vmem:[%s1 + $0xf68] sm:$0xff]
    %v510 = vld [vmem:[%s1 + $0xf70] sm:$0xff]
    %v511 = vld [vmem:[%s1 + $0xf78] sm:$0xff]
    %v512 = vld [vmem:[%s1 + $0xf80] sm:$0xff]
    %v513 = vld [vmem:[%s1 + $0xf88] sm:$0xff]
    %v514 = vld [vmem:[%s1 + $0xf90] sm:$0xff]
    %v515 = vld [vmem:[%s1 + $0xf98] sm:$0xff]
    %v516 = vld [vmem:[%s1 + $0xfa0] sm:$0xff]
    %v517 = vld [vmem:[%s1 + $0xfa8] sm:$0xff]
    %v518 = vld [vmem:[%s1 + $0xfb0] sm:$0xff]
    %v519 = vld [vmem:[%s1 + $0xfb8] sm:$0xff]
    %v520 = vld [vmem:[%s1 + $0xfc0] sm:$0xff]
    %v521 = vld [vmem:[%s1 + $0xfc8] sm:$0xff]
    %v522 = vld [vmem:[%s1 + $0xfd0] sm:$0xff]
    %v523 = vld [vmem:[%s1 + $0xfd8] sm:$0xff]
    %v524 = vld [vmem:[%s1 + $0xfe0] sm:$0xff]
    %v525 = vld [vmem:[%s1 + $0xfe8] sm:$0xff]
    %v526 = vld [vmem:[%s1 + $0xff0] sm:$0xff]
    %v527 = vld [vmem:[%s1 + $0xff8] sm:$0xff]
    %v528 = vld [vmem:[%s2] sm:$0xff]
    %v530 = vlaneseq
    %v531 = vshrl.u32 %v530, 7
    %v532 = vsub.s32 0, %v531
    %v533 = vrot.slane %v528, %v532
    %v534 = vlaneseq
    %v535 = vshrl.u32 %v534, 7
    %v536 = vsub.s32 1, %v535
    %v537 = vrot.slane %v528, %v536
    %v538 = vlaneseq
    %v539 = vshrl.u32 %v538, 7
    %v540 = vsub.s32 2, %v539
    %v541 = vrot.slane %v528, %v540
    %v542 = vlaneseq
    %v543 = vshrl.u32 %v542, 7
    %v544 = vsub.s32 3, %v543
    %v545 = vrot.slane %v528, %v544
    %v546 = vlaneseq
    %v547 = vshrl.u32 %v546, 7
    %v548 = vsub.s32 4, %v547
    %v549 = vrot.slane %v528, %v548
    %v550 = vlaneseq
    %v551 = vshrl.u32 %v550, 7
    %v552 = vsub.s32 5, %v551
    %v553 = vrot.slane %v528, %v552
    %v554 = vlaneseq
    %v555 = vshrl.u32 %v554, 7
    %v556 = vsub.s32 6, %v555
    %v557 = vrot.slane %v528, %v556
    %v558 = vlaneseq
    %v559 = vshrl.u32 %v558, 7
    %v560 = vsub.s32 7, %v559
    %v561 = vrot.slane %v528, %v560
    %v571 = vcombine.high %v15, %v15
    %v573 = vunpack.c.l.s4 1983009808
    %v574 = vunpack.c.0.s8 %v573
    %v575 = vlaneseq
    %v576 = vshrl.u32 %v575, 7
    %v577 = vsub.s32 %v574, %v576
    %v578 = vrot.slane %v15, %v577
    %v580 = vunpack.c.l.s4 1983009808
    %v581 = vunpack.c.0.s8 %v580
    %v582 = vlaneseq
    %v583 = vshrl.u32 %v582, 7
    %v584 = vsub.s32 %v581, %v583
    %v585 = vrot.slane %v571, %v584
    %v586 = vcombine.high %v578, %v578
    %v587 = vcombine.high %v585, %v585
    %592 = vmatprep.subr.mxu0 %v17
    %593 = vmatpush1.msra.mxu0 %v16
    %594 = vmatprep.subr.mxu0 %v25
    %595 = vmatpush1.msra.mxu0 %v24
    %596 = vmatprep.subr.mxu0 %v33
    %597 = vmatpush1.msra.mxu0 %v32
    %598 = vmatprep.subr.mxu0 %v41
    %599 = vmatpush1.msra.mxu0 %v40
    %600 = vmatprep.subr.mxu0 %v49
    %601 = vmatpush1.msra.mxu0 %v48
    %602 = vmatprep.subr.mxu0 %v57
    %603 = vmatpush1.msra.mxu0 %v56
    %604 = vmatprep.subr.mxu0 %v65
    %605 = vmatpush1.msra.mxu0 %v64
    %606 = vmatprep.subr.mxu0 %v73
    %607 = vmatpush1.msra.mxu0 %v72
    %608 = vmatprep.subr.mxu0 %v81
    %609 = vmatpush1.msra.mxu0 %v80
    %610 = vmatprep.subr.mxu0 %v89
    %611 = vmatpush1.msra.mxu0 %v88
    %612 = vmatprep.subr.mxu0 %v97
    %613 = vmatpush1.msra.mxu0 %v96
    %614 = vmatprep.subr.mxu0 %v105
    %615 = vmatpush1.msra.mxu0 %v104
    %616 = vmatprep.subr.mxu0 %v113
    %617 = vmatpush1.msra.mxu0 %v112
    %618 = vmatprep.subr.mxu0 %v121
    %619 = vmatpush1.msra.mxu0 %v120
    %620 = vmatprep.subr.mxu0 %v129
    %621 = vmatpush1.msra.mxu0 %v128
    %622 = vmatprep.subr.mxu0 %v137
    %623 = vmatpush1.msra.mxu0 %v136
    %624 = vmatprep.subr.mxu0 %v145
    %625 = vmatpush1.msra.mxu0 %v144
    %626 = vmatprep.subr.mxu0 %v153
    %627 = vmatpush1.msra.mxu0 %v152
    %628 = vmatprep.subr.mxu0 %v161
    %629 = vmatpush1.msra.mxu0 %v160
    %630 = vmatprep.subr.mxu0 %v169
    %631 = vmatpush1.msra.mxu0 %v168
    %632 = vmatprep.subr.mxu0 %v177
    %633 = vmatpush1.msra.mxu0 %v176
    %634 = vmatprep.subr.mxu0 %v185
    %635 = vmatpush1.msra.mxu0 %v184
    %636 = vmatprep.subr.mxu0 %v193
    %637 = vmatpush1.msra.mxu0 %v192
    %638 = vmatprep.subr.mxu0 %v201
    %639 = vmatpush1.msra.mxu0 %v200
    %640 = vmatprep.subr.mxu0 %v209
    %641 = vmatpush1.msra.mxu0 %v208
    %642 = vmatprep.subr.mxu0 %v217
    %643 = vmatpush1.msra.mxu0 %v216
    %644 = vmatprep.subr.mxu0 %v225
    %645 = vmatpush1.msra.mxu0 %v224
    %646 = vmatprep.subr.mxu0 %v233
    %647 = vmatpush1.msra.mxu0 %v232
    %648 = vmatprep.subr.mxu0 %v241
    %649 = vmatpush1.msra.mxu0 %v240
    %650 = vmatprep.subr.mxu0 %v249
    %651 = vmatpush1.msra.mxu0 %v248
    %652 = vmatprep.subr.mxu0 %v257
    %653 = vmatpush1.msra.mxu0 %v256
    %654 = vmatprep.subr.mxu0 %v265
    %655 = vmatpush1.msra.mxu0 %v264
    %656 = vmatprep.mubr.f32.mxu0 %v586
    %657 = vmatmul.mubr.f32.gmra.mrb[0].mxu0 %v578
    %v658 = vpop.f32.mrb[0].mxu0
    %v659 = vadd.f32 %v533, %v658
    %v660 = vpop.f32.mrb[0].mxu0
    %v661 = vadd.f32 %v537, %v660
    %662 = vdwg.mxu0
    %663 = vmatprep.subr.mxu0 %v273
    %664 = vmatpush1.msra.mxu0 %v272
    %665 = vmatprep.subr.mxu0 %v281
    %666 = vmatpush1.msra.mxu0 %v280
    %667 = vmatprep.subr.mxu0 %v289
    %668 = vmatpush1.msra.mxu0 %v288
    %669 = vmatprep.subr.mxu0 %v297
    %670 = vmatpush1.msra.mxu0 %v296
    %671 = vmatprep.subr.mxu0 %v305
    %672 = vmatpush1.msra.mxu0 %v304
    %673 = vmatprep.subr.mxu0 %v313
    %674 = vmatpush1.msra.mxu0 %v312
    %675 = vmatprep.subr.mxu0 %v321
    %676 = vmatpush1.msra.mxu0 %v320
    %677 = vmatprep.subr.mxu0 %v329
    %678 = vmatpush1.msra.mxu0 %v328
    %679 = vmatprep.subr.mxu0 %v337
    %680 = vmatpush1.msra.mxu0 %v336
    %681 = vmatprep.subr.mxu0 %v345
    %682 = vmatpush1.msra.mxu0 %v344
    %683 = vmatprep.subr.mxu0 %v353
    %684 = vmatpush1.msra.mxu0 %v352
    %685 = vmatprep.subr.mxu0 %v361
    %686 = vmatpush1.msra.mxu0 %v360
    %687 = vmatprep.subr.mxu0 %v369
    %688 = vmatpush1.msra.mxu0 %v368
    %689 = vmatprep.subr.mxu0 %v377
    %690 = vmatpush1.msra.mxu0 %v376
    %691 = vmatprep.subr.mxu0 %v385
    %692 = vmatpush1.msra.mxu0 %v384
    %693 = vmatprep.subr.mxu0 %v393
    %694 = vmatpush1.msra.mxu0 %v392
    %695 = vmatprep.subr.mxu0 %v401
    %696 = vmatpush1.msra.mxu0 %v400
    %697 = vmatprep.subr.mxu0 %v409
    %698 = vmatpush1.msra.mxu0 %v408
    %699 = vmatprep.subr.mxu0 %v417
    %700 = vmatpush1.msra.mxu0 %v416
    %701 = vmatprep.subr.mxu0 %v425
    %702 = vmatpush1.msra.mxu0 %v424
    %703 = vmatprep.subr.mxu0 %v433
    %704 = vmatpush1.msra.mxu0 %v432
    %705 = vmatprep.subr.mxu0 %v441
    %706 = vmatpush1.msra.mxu0 %v440
    %707 = vmatprep.subr.mxu0 %v449
    %708 = vmatpush1.msra.mxu0 %v448
    %709 = vmatprep.subr.mxu0 %v457
    %710 = vmatpush1.msra.mxu0 %v456
    %711 = vmatprep.subr.mxu0 %v465
    %712 = vmatpush1.msra.mxu0 %v464
    %713 = vmatprep.subr.mxu0 %v473
    %714 = vmatpush1.msra.mxu0 %v472
    %715 = vmatprep.subr.mxu0 %v481
    %716 = vmatpush1.msra.mxu0 %v480
    %717 = vmatprep.subr.mxu0 %v489
    %718 = vmatpush1.msra.mxu0 %v488
    %719 = vmatprep.subr.mxu0 %v497
    %720 = vmatpush1.msra.mxu0 %v496
    %721 = vmatprep.subr.mxu0 %v505
    %722 = vmatpush1.msra.mxu0 %v504
    %723 = vmatprep.subr.mxu0 %v513
    %724 = vmatpush1.msra.mxu0 %v512
    %725 = vmatprep.subr.mxu0 %v521
    %726 = vmatpush1.msra.mxu0 %v520
    %727 = vmatprep.mubr.f32.mxu0 %v587
    %728 = vmatmul.mubr.f32.gmra.mrb[0].mxu0 %v585
    %v729 = vpop.f32.mrb[0].mxu0
    %v730 = vadd.f32 %v659, %v729
    %v731 = vpop.f32.mrb[0].mxu0
    %v732 = vadd.f32 %v661, %v731
    %733 = vdwg.mxu0
    %734 = vmatprep.subr.mxu0 %v19
    %735 = vmatpush1.msra.mxu0 %v18
    %736 = vmatprep.subr.mxu0 %v27
    %737 = vmatpush1.msra.mxu0 %v26
    %738 = vmatprep.subr.mxu0 %v35
    %739 = vmatpush1.msra.mxu0 %v34
    %740 = vmatprep.subr.mxu0 %v43
    %741 = vmatpush1.msra.mxu0 %v42
    %742 = vmatprep.subr.mxu0 %v51
    %743 = vmatpush1.msra.mxu0 %v50
    %744 = vmatprep.subr.mxu0 %v59
    %745 = vmatpush1.msra.mxu0 %v58
    %746 = vmatprep.subr.mxu0 %v67
    %747 = vmatpush1.msra.mxu0 %v66
    %748 = vmatprep.subr.mxu0 %v75
    %749 = vmatpush1.msra.mxu0 %v74
    %750 = vmatprep.subr.mxu0 %v83
    %751 = vmatpush1.msra.mxu0 %v82
    %752 = vmatprep.subr.mxu0 %v91
    %753 = vmatpush1.msra.mxu0 %v90
    %754 = vmatprep.subr.mxu0 %v99
    %755 = vmatpush1.msra.mxu0 %v98
    %756 = vmatprep.subr.mxu0 %v107
    %757 = vmatpush1.msra.mxu0 %v106
    %758 = vmatprep.subr.mxu0 %v115
    %759 = vmatpush1.msra.mxu0 %v114
    %760 = vmatprep.subr.mxu0 %v123
    %761 = vmatpush1.msra.mxu0 %v122
    %762 = vmatprep.subr.mxu0 %v131
    %763 = vmatpush1.msra.mxu0 %v130
    %764 = vmatprep.subr.mxu0 %v139
    %765 = vmatpush1.msra.mxu0 %v138
    %766 = vmatprep.subr.mxu0 %v147
    %767 = vmatpush1.msra.mxu0 %v146
    %768 = vmatprep.subr.mxu0 %v155
    %769 = vmatpush1.msra.mxu0 %v154
    %770 = vmatprep.subr.mxu0 %v163
    %771 = vmatpush1.msra.mxu0 %v162
    %772 = vmatprep.subr.mxu0 %v171
    %773 = vmatpush1.msra.mxu0 %v170
    %774 = vmatprep.subr.mxu0 %v179
    %775 = vmatpush1.msra.mxu0 %v178
    %776 = vmatprep.subr.mxu0 %v187
    %777 = vmatpush1.msra.mxu0 %v186
    %778 = vmatprep.subr.mxu0 %v195
    %779 = vmatpush1.msra.mxu0 %v194
    %780 = vmatprep.subr.mxu0 %v203
    %781 = vmatpush1.msra.mxu0 %v202
    %782 = vmatprep.subr.mxu0 %v211
    %783 = vmatpush1.msra.mxu0 %v210
    %784 = vmatprep.subr.mxu0 %v219
    %785 = vmatpush1.msra.mxu0 %v218
    %786 = vmatprep.subr.mxu0 %v227
    %787 = vmatpush1.msra.mxu0 %v226
    %788 = vmatprep.subr.mxu0 %v235
    %789 = vmatpush1.msra.mxu0 %v234
    %790 = vmatprep.subr.mxu0 %v243
    %791 = vmatpush1.msra.mxu0 %v242
    %792 = vmatprep.subr.mxu0 %v251
    %793 = vmatpush1.msra.mxu0 %v250
    %794 = vmatprep.subr.mxu0 %v259
    %795 = vmatpush1.msra.mxu0 %v258
    %796 = vmatprep.subr.mxu0 %v267
    %797 = vmatpush1.msra.mxu0 %v266
    %798 = vmatprep.mubr.f32.mxu0 %v586
    %799 = vmatmul.mubr.f32.gmra.mrb[0].mxu0 %v578
    %v800 = vpop.f32.mrb[0].mxu0
    %v801 = vadd.f32 %v541, %v800
    %v802 = vpop.f32.mrb[0].mxu0
    %v803 = vadd.f32 %v545, %v802
    %804 = vdwg.mxu0
    %805 = vmatprep.subr.mxu0 %v275
    %806 = vmatpush1.msra.mxu0 %v274
    %807 = vmatprep.subr.mxu0 %v283
    %808 = vmatpush1.msra.mxu0 %v282
    %809 = vmatprep.subr.mxu0 %v291
    %810 = vmatpush1.msra.mxu0 %v290
    %811 = vmatprep.subr.mxu0 %v299
    %812 = vmatpush1.msra.mxu0 %v298
    %813 = vmatprep.subr.mxu0 %v307
    %814 = vmatpush1.msra.mxu0 %v306
    %815 = vmatprep.subr.mxu0 %v315
    %816 = vmatpush1.msra.mxu0 %v314
    %817 = vmatprep.subr.mxu0 %v323
    %818 = vmatpush1.msra.mxu0 %v322
    %819 = vmatprep.subr.mxu0 %v331
    %820 = vmatpush1.msra.mxu0 %v330
    %821 = vmatprep.subr.mxu0 %v339
    %822 = vmatpush1.msra.mxu0 %v338
    %823 = vmatprep.subr.mxu0 %v347
    %824 = vmatpush1.msra.mxu0 %v346
    %825 = vmatprep.subr.mxu0 %v355
    %826 = vmatpush1.msra.mxu0 %v354
    %827 = vmatprep.subr.mxu0 %v363
    %828 = vmatpush1.msra.mxu0 %v362
    %829 = vmatprep.subr.mxu0 %v371
    %830 = vmatpush1.msra.mxu0 %v370
    %831 = vmatprep.subr.mxu0 %v379
    %832 = vmatpush1.msra.mxu0 %v378
    %833 = vmatprep.subr.mxu0 %v387
    %834 = vmatpush1.msra.mxu0 %v386
    %835 = vmatprep.subr.mxu0 %v395
    %836 = vmatpush1.msra.mxu0 %v394
    %837 = vmatprep.subr.mxu0 %v403
    %838 = vmatpush1.msra.mxu0 %v402
    %839 = vmatprep.subr.mxu0 %v411
    %840 = vmatpush1.msra.mxu0 %v410
    %841 = vmatprep.subr.mxu0 %v419
    %842 = vmatpush1.msra.mxu0 %v418
    %843 = vmatprep.subr.mxu0 %v427
    %844 = vmatpush1.msra.mxu0 %v426
    %845 = vmatprep.subr.mxu0 %v435
    %846 = vmatpush1.msra.mxu0 %v434
    %847 = vmatprep.subr.mxu0 %v443
    %848 = vmatpush1.msra.mxu0 %v442
    %849 = vmatprep.subr.mxu0 %v451
    %850 = vmatpush1.msra.mxu0 %v450
    %851 = vmatprep.subr.mxu0 %v459
    %852 = vmatpush1.msra.mxu0 %v458
    %853 = vmatprep.subr.mxu0 %v467
    %854 = vmatpush1.msra.mxu0 %v466
    %855 = vmatprep.subr.mxu0 %v475
    %856 = vmatpush1.msra.mxu0 %v474
    %857 = vmatprep.subr.mxu0 %v483
    %858 = vmatpush1.msra.mxu0 %v482
    %859 = vmatprep.subr.mxu0 %v491
    %860 = vmatpush1.msra.mxu0 %v490
    %861 = vmatprep.subr.mxu0 %v499
    %862 = vmatpush1.msra.mxu0 %v498
    %863 = vmatprep.subr.mxu0 %v507
    %864 = vmatpush1.msra.mxu0 %v506
    %865 = vmatprep.subr.mxu0 %v515
    %866 = vmatpush1.msra.mxu0 %v514
    %867 = vmatprep.subr.mxu0 %v523
    %868 = vmatpush1.msra.mxu0 %v522
    %869 = vmatprep.mubr.f32.mxu0 %v587
    %870 = vmatmul.mubr.f32.gmra.mrb[0].mxu0 %v585
    %v871 = vpop.f32.mrb[0].mxu0
    %v872 = vadd.f32 %v801, %v871
    %v873 = vpop.f32.mrb[0].mxu0
    %v874 = vadd.f32 %v803, %v873
    %875 = vdwg.mxu0
    %876 = vmatprep.subr.mxu0 %v21
    %877 = vmatpush1.msra.mxu0 %v20
    %878 = vmatprep.subr.mxu0 %v29
    %879 = vmatpush1.msra.mxu0 %v28
    %880 = vmatprep.subr.mxu0 %v37
    %881 = vmatpush1.msra.mxu0 %v36
    %882 = vmatprep.subr.mxu0 %v45
    %883 = vmatpush1.msra.mxu0 %v44
    %884 = vmatprep.subr.mxu0 %v53
    %885 = vmatpush1.msra.mxu0 %v52
    %886 = vmatprep.subr.mxu0 %v61
    %887 = vmatpush1.msra.mxu0 %v60
    %888 = vmatprep.subr.mxu0 %v69
    %889 = vmatpush1.msra.mxu0 %v68
    %890 = vmatprep.subr.mxu0 %v77
    %891 = vmatpush1.msra.mxu0 %v76
    %892 = vmatprep.subr.mxu0 %v85
    %893 = vmatpush1.msra.mxu0 %v84
    %894 = vmatprep.subr.mxu0 %v93
    %895 = vmatpush1.msra.mxu0 %v92
    %896 = vmatprep.subr.mxu0 %v101
    %897 = vmatpush1.msra.mxu0 %v100
    %898 = vmatprep.subr.mxu0 %v109
    %899 = vmatpush1.msra.mxu0 %v108
    %900 = vmatprep.subr.mxu0 %v117
    %901 = vmatpush1.msra.mxu0 %v116
    %902 = vmatprep.subr.mxu0 %v125
    %903 = vmatpush1.msra.mxu0 %v124
    %904 = vmatprep.subr.mxu0 %v133
    %905 = vmatpush1.msra.mxu0 %v132
    %906 = vmatprep.subr.mxu0 %v141
    %907 = vmatpush1.msra.mxu0 %v140
    %908 = vmatprep.subr.mxu0 %v149
    %909 = vmatpush1.msra.mxu0 %v148
    %910 = vmatprep.subr.mxu0 %v157
    %911 = vmatpush1.msra.mxu0 %v156
    %912 = vmatprep.subr.mxu0 %v165
    %913 = vmatpush1.msra.mxu0 %v164
    %914 = vmatprep.subr.mxu0 %v173
    %915 = vmatpush1.msra.mxu0 %v172
    %916 = vmatprep.subr.mxu0 %v181
    %917 = vmatpush1.msra.mxu0 %v180
    %918 = vmatprep.subr.mxu0 %v189
    %919 = vmatpush1.msra.mxu0 %v188
    %920 = vmatprep.subr.mxu0 %v197
    %921 = vmatpush1.msra.mxu0 %v196
    %922 = vmatprep.subr.mxu0 %v205
    %923 = vmatpush1.msra.mxu0 %v204
    %924 = vmatprep.subr.mxu0 %v213
    %925 = vmatpush1.msra.mxu0 %v212
    %926 = vmatprep.subr.mxu0 %v221
    %927 = vmatpush1.msra.mxu0 %v220
    %928 = vmatprep.subr.mxu0 %v229
    %929 = vmatpush1.msra.mxu0 %v228
    %930 = vmatprep.subr.mxu0 %v237
    %931 = vmatpush1.msra.mxu0 %v236
    %932 = vmatprep.subr.mxu0 %v245
    %933 = vmatpush1.msra.mxu0 %v244
    %934 = vmatprep.subr.mxu0 %v253
    %935 = vmatpush1.msra.mxu0 %v252
    %936 = vmatprep.subr.mxu0 %v261
    %937 = vmatpush1.msra.mxu0 %v260
    %938 = vmatprep.subr.mxu0 %v269
    %939 = vmatpush1.msra.mxu0 %v268
    %940 = vmatprep.mubr.f32.mxu0 %v586
    %941 = vmatmul.mubr.f32.gmra.mrb[0].mxu0 %v578
    %v942 = vpop.f32.mrb[0].mxu0
    %v943 = vadd.f32 %v549, %v942
    %v944 = vpop.f32.mrb[0].mxu0
    %v945 = vadd.f32 %v553, %v944
    %946 = vdwg.mxu0
    %947 = vmatprep.subr.mxu0 %v277
    %948 = vmatpush1.msra.mxu0 %v276
    %949 = vmatprep.subr.mxu0 %v285
    %950 = vmatpush1.msra.mxu0 %v284
    %951 = vmatprep.subr.mxu0 %v293
    %952 = vmatpush1.msra.mxu0 %v292
    %953 = vmatprep.subr.mxu0 %v301
    %954 = vmatpush1.msra.mxu0 %v300
    %955 = vmatprep.subr.mxu0 %v309
    %956 = vmatpush1.msra.mxu0 %v308
    %957 = vmatprep.subr.mxu0 %v317
    %958 = vmatpush1.msra.mxu0 %v316
    %959 = vmatprep.subr.mxu0 %v325
    %960 = vmatpush1.msra.mxu0 %v324
    %961 = vmatprep.subr.mxu0 %v333
    %962 = vmatpush1.msra.mxu0 %v332
    %963 = vmatprep.subr.mxu0 %v341
    %964 = vmatpush1.msra.mxu0 %v340
    %965 = vmatprep.subr.mxu0 %v349
    %966 = vmatpush1.msra.mxu0 %v348
    %967 = vmatprep.subr.mxu0 %v357
    %968 = vmatpush1.msra.mxu0 %v356
    %969 = vmatprep.subr.mxu0 %v365
    %970 = vmatpush1.msra.mxu0 %v364
    %971 = vmatprep.subr.mxu0 %v373
    %972 = vmatpush1.msra.mxu0 %v372
    %973 = vmatprep.subr.mxu0 %v381
    %974 = vmatpush1.msra.mxu0 %v380
    %975 = vmatprep.subr.mxu0 %v389
    %976 = vmatpush1.msra.mxu0 %v388
    %977 = vmatprep.subr.mxu0 %v397
    %978 = vmatpush1.msra.mxu0 %v396
    %979 = vmatprep.subr.mxu0 %v405
    %980 = vmatpush1.msra.mxu0 %v404
    %981 = vmatprep.subr.mxu0 %v413
    %982 = vmatpush1.msra.mxu0 %v412
    %983 = vmatprep.subr.mxu0 %v421
    %984 = vmatpush1.msra.mxu0 %v420
    %985 = vmatprep.subr.mxu0 %v429
    %986 = vmatpush1.msra.mxu0 %v428
    %987 = vmatprep.subr.mxu0 %v437
    %988 = vmatpush1.msra.mxu0 %v436
    %989 = vmatprep.subr.mxu0 %v445
    %990 = vmatpush1.msra.mxu0 %v444
    %991 = vmatprep.subr.mxu0 %v453
    %992 = vmatpush1.msra.mxu0 %v452
    %993 = vmatprep.subr.mxu0 %v461
    %994 = vmatpush1.msra.mxu0 %v460
    %995 = vmatprep.subr.mxu0 %v469
    %996 = vmatpush1.msra.mxu0 %v468
    %997 = vmatprep.subr.mxu0 %v477
    %998 = vmatpush1.msra.mxu0 %v476
    %999 = vmatprep.subr.mxu0 %v485
    %1000 = vmatpush1.msra.mxu0 %v484
    %1001 = vmatprep.subr.mxu0 %v493
    %1002 = vmatpush1.msra.mxu0 %v492
    %1003 = vmatprep.subr.mxu0 %v501
    %1004 = vmatpush1.msra.mxu0 %v500
    %1005 = vmatprep.subr.mxu0 %v509
    %1006 = vmatpush1.msra.mxu0 %v508
    %1007 = vmatprep.subr.mxu0 %v517
    %1008 = vmatpush1.msra.mxu0 %v516
    %1009 = vmatprep.subr.mxu0 %v525
    %1010 = vmatpush1.msra.mxu0 %v524
    %1011 = vmatprep.mubr.f32.mxu0 %v587
    %1012 = vmatmul.mubr.f32.gmra.mrb[0].mxu0 %v585
    %v1013 = vpop.f32.mrb[0].mxu0
    %v1014 = vadd.f32 %v943, %v1013
    %v1015 = vpop.f32.mrb[0].mxu0
    %v1016 = vadd.f32 %v945, %v1015
    %1017 = vdwg.mxu0
    %1018 = vmatprep.subr.mxu0 %v23
    %1019 = vmatpush1.msra.mxu0 %v22
    %1020 = vmatprep.subr.mxu0 %v31
    %1021 = vmatpush1.msra.mxu0 %v30
    %1022 = vmatprep.subr.mxu0 %v39
    %1023 = vmatpush1.msra.mxu0 %v38
    %1024 = vmatprep.subr.mxu0 %v47
    %1025 = vmatpush1.msra.mxu0 %v46
    %1026 = vmatprep.subr.mxu0 %v55
    %1027 = vmatpush1.msra.mxu0 %v54
    %1028 = vmatprep.subr.mxu0 %v63
    %1029 = vmatpush1.msra.mxu0 %v62
    %1030 = vmatprep.subr.mxu0 %v71
    %1031 = vmatpush1.msra.mxu0 %v70
    %1032 = vmatprep.subr.mxu0 %v79
    %1033 = vmatpush1.msra.mxu0 %v78
    %1034 = vmatprep.subr.mxu0 %v87
    %1035 = vmatpush1.msra.mxu0 %v86
    %1036 = vmatprep.subr.mxu0 %v95
    %1037 = vmatpush1.msra.mxu0 %v94
    %1038 = vmatprep.subr.mxu0 %v103
    %1039 = vmatpush1.msra.mxu0 %v102
    %1040 = vmatprep.subr.mxu0 %v111
    %1041 = vmatpush1.msra.mxu0 %v110
    %1042 = vmatprep.subr.mxu0 %v119
    %1043 = vmatpush1.msra.mxu0 %v118
    %1044 = vmatprep.subr.mxu0 %v127
    %1045 = vmatpush1.msra.mxu0 %v126
    %1046 = vmatprep.subr.mxu0 %v135
    %1047 = vmatpush1.msra.mxu0 %v134
    %1048 = vmatprep.subr.mxu0 %v143
    %1049 = vmatpush1.msra.mxu0 %v142
    %1050 = vmatprep.subr.mxu0 %v151
    %1051 = vmatpush1.msra.mxu0 %v150
    %1052 = vmatprep.subr.mxu0 %v159
    %1053 = vmatpush1.msra.mxu0 %v158
    %1054 = vmatprep.subr.mxu0 %v167
    %1055 = vmatpush1.msra.mxu0 %v166
    %1056 = vmatprep.subr.mxu0 %v175
    %1057 = vmatpush1.msra.mxu0 %v174
    %1058 = vmatprep.subr.mxu0 %v183
    %1059 = vmatpush1.msra.mxu0 %v182
    %1060 = vmatprep.subr.mxu0 %v191
    %1061 = vmatpush1.msra.mxu0 %v190
    %1062 = vmatprep.subr.mxu0 %v199
    %1063 = vmatpush1.msra.mxu0 %v198
    %1064 = vmatprep.subr.mxu0 %v207
    %1065 = vmatpush1.msra.mxu0 %v206
    %1066 = vmatprep.subr.mxu0 %v215
    %1067 = vmatpush1.msra.mxu0 %v214
    %1068 = vmatprep.subr.mxu0 %v223
    %1069 = vmatpush1.msra.mxu0 %v222
    %1070 = vmatprep.subr.mxu0 %v231
    %1071 = vmatpush1.msra.mxu0 %v230
    %1072 = vmatprep.subr.mxu0 %v239
    %1073 = vmatpush1.msra.mxu0 %v238
    %1074 = vmatprep.subr.mxu0 %v247
    %1075 = vmatpush1.msra.mxu0 %v246
    %1076 = vmatprep.subr.mxu0 %v255
    %1077 = vmatpush1.msra.mxu0 %v254
    %1078 = vmatprep.subr.mxu0 %v263
    %1079 = vmatpush1.msra.mxu0 %v262
    %1080 = vmatprep.subr.mxu0 %v271
    %1081 = vmatpush1.msra.mxu0 %v270
    %1082 = vmatprep.mubr.f32.mxu0 %v586
    %1083 = vmatmul.mubr.f32.gmra.mrb[0].mxu0 %v578
    %v1084 = vpop.f32.mrb[0].mxu0
    %v1085 = vadd.f32 %v557, %v1084
    %v1086 = vpop.f32.mrb[0].mxu0
    %v1087 = vadd.f32 %v561, %v1086
    %1088 = vdwg.mxu0
    %1089 = vmatprep.subr.mxu0 %v279
    %1090 = vmatpush1.msra.mxu0 %v278
    %1091 = vmatprep.subr.mxu0 %v287
    %1092 = vmatpush1.msra.mxu0 %v286
    %1093 = vmatprep.subr.mxu0 %v295
    %1094 = vmatpush1.msra.mxu0 %v294
    %1095 = vmatprep.subr.mxu0 %v303
    %1096 = vmatpush1.msra.mxu0 %v302
    %1097 = vmatprep.subr.mxu0 %v311
    %1098 = vmatpush1.msra.mxu0 %v310
    %1099 = vmatprep.subr.mxu0 %v319
    %1100 = vmatpush1.msra.mxu0 %v318
    %1101 = vmatprep.subr.mxu0 %v327
    %1102 = vmatpush1.msra.mxu0 %v326
    %1103 = vmatprep.subr.mxu0 %v335
    %1104 = vmatpush1.msra.mxu0 %v334
    %1105 = vmatprep.subr.mxu0 %v343
    %1106 = vmatpush1.msra.mxu0 %v342
    %1107 = vmatprep.subr.mxu0 %v351
    %1108 = vmatpush1.msra.mxu0 %v350
    %1109 = vmatprep.subr.mxu0 %v359
    %1110 = vmatpush1.msra.mxu0 %v358
    %1111 = vmatprep.subr.mxu0 %v367
    %1112 = vmatpush1.msra.mxu0 %v366
    %1113 = vmatprep.subr.mxu0 %v375
    %1114 = vmatpush1.msra.mxu0 %v374
    %1115 = vmatprep.subr.mxu0 %v383
    %1116 = vmatpush1.msra.mxu0 %v382
    %1117 = vmatprep.subr.mxu0 %v391
    %1118 = vmatpush1.msra.mxu0 %v390
    %1119 = vmatprep.subr.mxu0 %v399
    %1120 = vmatpush1.msra.mxu0 %v398
    %1121 = vmatprep.subr.mxu0 %v407
    %1122 = vmatpush1.msra.mxu0 %v406
    %1123 = vmatprep.subr.mxu0 %v415
    %1124 = vmatpush1.msra.mxu0 %v414
    %1125 = vmatprep.subr.mxu0 %v423
    %1126 = vmatpush1.msra.mxu0 %v422
    %1127 = vmatprep.subr.mxu0 %v431
    %1128 = vmatpush1.msra.mxu0 %v430
    %1129 = vmatprep.subr.mxu0 %v439
    %1130 = vmatpush1.msra.mxu0 %v438
    %1131 = vmatprep.subr.mxu0 %v447
    %1132 = vmatpush1.msra.mxu0 %v446
    %1133 = vmatprep.subr.mxu0 %v455
    %1134 = vmatpush1.msra.mxu0 %v454
    %1135 = vmatprep.subr.mxu0 %v463
    %1136 = vmatpush1.msra.mxu0 %v462
    %1137 = vmatprep.subr.mxu0 %v471
    %1138 = vmatpush1.msra.mxu0 %v470
    %1139 = vmatprep.subr.mxu0 %v479
    %1140 = vmatpush1.msra.mxu0 %v478
    %1141 = vmatprep.subr.mxu0 %v487
    %1142 = vmatpush1.msra.mxu0 %v486
    %1143 = vmatprep.subr.mxu0 %v495
    %1144 = vmatpush1.msra.mxu0 %v494
    %1145 = vmatprep.subr.mxu0 %v503
    %1146 = vmatpush1.msra.mxu0 %v502
    %1147 = vmatprep.subr.mxu0 %v511
    %1148 = vmatpush1.msra.mxu0 %v510
    %1149 = vmatprep.subr.mxu0 %v519
    %1150 = vmatpush1.msra.mxu0 %v518
    %1151 = vmatprep.subr.mxu0 %v527
    %1152 = vmatpush1.msra.mxu0 %v526
    %1153 = vmatprep.mubr.f32.mxu0 %v587
    %1154 = vmatmul.mubr.f32.gmra.mrb[0].mxu0 %v585
    %v1155 = vpop.f32.mrb[0].mxu0
    %v1156 = vadd.f32 %v1085, %v1155
    %v1157 = vpop.f32.mrb[0].mxu0
    %v1158 = vadd.f32 %v1087, %v1157
    %1159 = vdwg.mxu0
    %v1168 = vcombine.low %v730, %v732
    %v1169 = vcombine.low %v872, %v874
    %v1171 = vunpack.c.l.s4 1983009808
    %v1172 = vunpack.c.0.s8 %v1171
    %v1173 = vlaneseq
    %v1174 = vshrl.u32 %v1173, 7
    %v1175 = vsub.s32 %v1172, %v1174
    %v1176 = vrot.slane %v1168, %v1175
    %v1178 = vunpack.c.l.s4 1983009808
    %v1179 = vunpack.c.0.s8 %v1178
    %v1180 = vlaneseq
    %v1181 = vshrl.u32 %v1180, 7
    %v1182 = vsub.s32 %v1179, %v1181
    %v1183 = vrot.slane %v1169, %v1182
    %v1184 = vcombine.low %v1176, %v1183
    %v1185 = vcombine.low %v1014, %v1016
    %v1186 = vcombine.low %v1156, %v1158
    %v1188 = vunpack.c.l.s4 1983009808
    %v1189 = vunpack.c.0.s8 %v1188
    %v1190 = vlaneseq
    %v1191 = vshrl.u32 %v1190, 7
    %v1192 = vsub.s32 %v1189, %v1191
    %v1193 = vrot.slane %v1185, %v1192
    %v1195 = vunpack.c.l.s4 1983009808
    %v1196 = vunpack.c.0.s8 %v1195
    %v1197 = vlaneseq
    %v1198 = vshrl.u32 %v1197, 7
    %v1199 = vsub.s32 %v1196, %v1198
    %v1200 = vrot.slane %v1186, %v1199
    %v1201 = vcombine.low %v1193, %v1200
    %1204 = vst [vmem:[#allocation2] sm:$0xff] %v1184
    %1205 = vst [vmem:[#allocation2 + $0x8] sm:$0xff] %v1201
    // Predicated region
    $region14: #{graph_encoder_forward.9} parent=1 // pred_check
      _
    $region15: #{graph_encoder_forward.9} parent=1 // pred_check_branch
      %1207 = sbr.rel (0) target = $region17
    $region16: #{graph_encoder_forward.9} parent=1 // pred_region
      %s1209 = ssub.s32 256, 256
      %1210 = vsyncadd [#allocation3], %s1209
      %s1212 = sshll.u32 [#allocation2], 4
      %s1213 = int_to_ptr.vmem [resolvable:$true] %s1212
      %1215 = dma.vmem_to_hbm [thread:$0]  %s1213, 256, %s3, [#allocation3]
    $region17: #{graph_encoder_forward.9} parent=1 // pred_fallthru
      _
    // Predicated region
    $region18: #{graph_encoder_forward.9} parent=1 // pred_check
      _
    $region19: #{graph_encoder_forward.9} parent=1 // pred_check_branch
      %1217 = sbr.rel (0) target = $region21
    $region20: #{graph_encoder_forward.9} parent=1 // pred_region
      %1218 = dma.done [#allocation3], 256
    $region21: #{graph_encoder_forward.9} parent=1 // pred_fallthru
      _
    %1219 = vsyncpa [#allocation3], 1

</llo_original>
